<compile_context>
chip_gen: v6e
topology: v6e:2x2x1
jax: 0.10.0
libtpu: 0.0.40
codegen_flags: <defaults>
</compile_context>

<pallas_src>
import functools

import jax
import jax.numpy as jnp
from jax import lax
from jax.experimental import pallas as pl
from jax.experimental.pallas import tpu as pltpu


# ---------------------------------------------------------------------------
# Small helpers
# ---------------------------------------------------------------------------
def _round_up(x, m):
    return (x + m - 1) // m * m


@functools.lru_cache(maxsize=None)
def _vmem_limit_bytes():
    """Generation-aware scoped-VMEM budget: ~3/4 of physical, capped at 96 MiB."""
    try:
        cap = int(getattr(pltpu.get_tpu_info(), "vmem_capacity_bytes"))
    except Exception:                       # conservative fallback (v7x physical)
        cap = 64 * 1024 * 1024
    return max(16 * 1024 * 1024, min(cap * 3 // 4, 96 * 1024 * 1024))


def _cparams():
    # All grid axes are independent per-tile writes -> "parallel" everywhere.
    return pltpu.CompilerParams(dimension_semantics=("parallel",),
                                vmem_limit_bytes=_vmem_limit_bytes())


def _choose_tm(m):
    """Sublane-aligned M tile minimizing padded waste (prefers larger tiles)."""
    m8 = _round_up(max(m, 1), 8)
    if m8 <= 512:
        return m8
    best_tm, best_waste = 512, None
    for tm in (512, 448, 384, 320, 256, 192, 128):
        waste = _round_up(m, tm) - m
        if best_waste is None or waste < best_waste:
            best_tm, best_waste = tm, waste
    return best_tm


# ---------------------------------------------------------------------------
# Kernels
# ---------------------------------------------------------------------------
def _leaky_relu(x):
    return jnp.where(x >= 0, x, 0.2 * x)


def _tile_stats(x, valid_m, sum_ref, ssq_ref):
    """Per-tile per-channel sum / sum-of-squares over the valid (< valid_m) rows."""
    tm = x.shape[0]
    rows = pl.program_id(0) * tm + lax.broadcasted_iota(jnp.int32, (tm, 1), 0)
    xm = jnp.where(rows < valid_m, x, 0.0)
    sum_ref[...] = jnp.sum(xm, axis=0, keepdims=True)
    ssq_ref[...] = jnp.sum(xm * xm, axis=0, keepdims=True)


def _conv_bias_lrelu_kernel(p_ref, w_ref, b_ref, o_ref, *, small_k):
    """Conv-as-matmul + bias + LeakyReLU.  small_k: unrolled VPU FMAs (layer 0)."""
    if small_k:
        p = p_ref[...].astype(jnp.float32)          # (TM, K), K tiny (e.g. 16)
        w = w_ref[...].astype(jnp.float32)          # (K, Np)
        x = p[:, 0:1] * w[0:1, :]
        for kk in range(1, p.shape[1]):             # static unroll on the VPU
            x = x + p[:, kk:kk + 1] * w[kk:kk + 1, :]
    else:
        x = jnp.dot(p_ref[...], w_ref[...], preferred_element_type=jnp.float32)
    x = _leaky_relu(x + b_ref[...])
    o_ref[...] = x.astype(o_ref.dtype)


def _conv_stats_kernel(p_ref, w_ref, o_ref, sum_ref, ssq_ref, *, valid_m):
    """Conv matmul (bias-free: cancelled by BN mean) + per-tile partial BN stats."""
    x = jnp.dot(p_ref[...], w_ref[...], preferred_element_type=jnp.float32)
    o_ref[...] = x.astype(o_ref.dtype)
    _tile_stats(x, valid_m, sum_ref, ssq_ref)


def _bn_lrelu_conv_stats_kernel(p_ref, w_ref, scale_ref, shift_ref,
                                o_ref, sum_ref, ssq_ref, *, valid_m):
    """Previous layer's BN+LeakyReLU fused as a patch prologue, then conv+stats."""
    p = _leaky_relu(p_ref[...].astype(jnp.float32) * scale_ref[...] + shift_ref[...])
    x = jnp.dot(p.astype(jnp.bfloat16), w_ref[...],
                preferred_element_type=jnp.float32)
    o_ref[...] = x.astype(o_ref.dtype)
    _tile_stats(x, valid_m, sum_ref, ssq_ref)


def _bn_lrelu_head_kernel(p_ref, w_ref, b_ref, scale_ref, shift_ref, o_ref):
    """BN+LeakyReLU prologue, then n=1 head as a VPU multiply + lane reduction."""
    p = _leaky_relu(p_ref[...].astype(jnp.float32) * scale_ref[...] + shift_ref[...])
    x = jnp.sum(p * w_ref[...], axis=-1, keepdims=True) + b_ref[...]
    o_ref[...] = 1.0 / (1.0 + jnp.exp(-x))          # exact sigmoid


# ---------------------------------------------------------------------------
# JAX-side glue: im2col (NHWC, tap-major / channel-minor K) + operand prep
# ---------------------------------------------------------------------------
def _im2col_nhwc(x, kh, kw, stride, padding):
    B, H, W, C = x.shape
    oh = (H + 2 * padding - kh) // stride + 1
    ow = (W + 2 * padding - kw) // stride + 1
    xp = jnp.pad(x, ((0, 0), (padding, padding), (padding, padding), (0, 0)))
    taps = []
    for ki in range(kh):
        for kj in range(kw):
            taps.append(lax.slice(
                xp,
                (0, ki, kj, 0),
                (B, ki + stride * (oh - 1) + 1, kj + stride * (ow - 1) + 1, C),
                (1, stride, stride, 1)))             # (B, oh, ow, C)
    patches = jnp.concatenate(taps, axis=-1)          # (B, oh, ow, kh*kw*C)
    return patches.reshape(B * oh * ow, kh * kw * C), oh, ow


def _prep_conv(x_nhwc, w, stride, padding):
    """im2col + bf16 cast + tiling bookkeeping (rows padded to a divisor tile)."""
    kh, kw = w.shape[2], w.shape[3]
    B = x_nhwc.shape[0]
    n = w.shape[0]
    patches, oh, ow = _im2col_nhwc(x_nhwc, kh, kw, stride, padding)
    m, k = patches.shape
    # Lane-dense output columns.  For the full-size model (n in {128,256,512})
    # this is already a multiple of 256, filling the 256-wide MXU on v6e/v7x.
    np_ = _round_up(n, 128)
    tm = _choose_tm(m)
    mp = _round_up(m, tm)
    patches = jnp.pad(patches.astype(jnp.bfloat16), ((0, mp - m), (0, 0)))
    w_mat = w.transpose(2, 3, 1, 0).reshape(k, n)     # (kh, kw, c) row ordering
    w_mat = jnp.pad(w_mat, ((0, 0), (0, np_ - n))).astype(jnp.bfloat16)
    dims = dict(B=B, oh=oh, ow=ow, m=m, k=k, n=n, np_=np_, tm=tm, mp=mp)
    return patches, w_mat, dims


def _bn_scale_shift(mean, var, gamma, beta, eps):
    scale = gamma * lax.rsqrt(var + eps)
    shift = beta - mean * scale
    return scale, shift


# ---------------------------------------------------------------------------
# Layers
# ---------------------------------------------------------------------------
def conv_bias_lrelu_layer(x_nhwc, w, b, *, stride, padding, small_k=False):
    """Conv2d + bias + LeakyReLU (no BN).  NHWC in / bf16 NHWC out."""
    patches, w_mat, d = _prep_conv(x_nhwc, w, stride, padding)
    tm, k, np_, mp, m, n = d["tm"], d["k"], d["np_"], d["mp"], d["m"], d["n"]
    b_row = jnp.pad(b, (0, np_ - n)).astype(jnp.float32).reshape(1, np_)

    out = pl.pallas_call(
        functools.partial(_conv_bias_lrelu_kernel, small_k=small_k),
        out_shape=jax.ShapeDtypeStruct((mp, np_), jnp.bfloat16),
        grid=(mp // tm,),
        in_specs=[
            pl.BlockSpec((tm, k), lambda i: (i, 0)),     # patch tile (pipelined)
            pl.BlockSpec((k, np_), lambda i: (0, 0)),    # weights: VMEM-resident
            pl.BlockSpec((1, np_), lambda i: (0, 0)),    # bias:    VMEM-resident
        ],
        out_specs=pl.BlockSpec((tm, np_), lambda i: (i, 0)),
        compiler_params=_cparams(),
    )(patches, w_mat, b_row)

    return out[:m, :n].reshape(d["B"], d["oh"], d["ow"], n)


def conv_stats_layer(x_nhwc, w, *, stride, padding, prologue=None):
    """Conv2d (bias-free: cancelled by BN) + per-tile partial batch stats.

    prologue: optional (scale_c, shift_c) of the PREVIOUS layer's BatchNorm;
    it is applied (followed by LeakyReLU) to the patch tile inside the kernel,
    fusing that BN+activation into this layer's matmul pass.
    Returns (raw_conv_nhwc_bf16, mean, var) with mean/var over the batch.
    """
    patches, w_mat, d = _prep_conv(x_nhwc, w, stride, padding)
    tm, k, np_, mp, m, n = d["tm"], d["k"], d["np_"], d["mp"], d["m"], d["n"]
    ntiles = mp // tm

    out_shape = (jax.ShapeDtypeStruct((mp, np_), jnp.bfloat16),
                 jax.ShapeDtypeStruct((ntiles, np_), jnp.float32),
                 jax.ShapeDtypeStruct((ntiles, np_), jnp.float32))
    out_specs = (pl.BlockSpec((tm, np_), lambda i: (i, 0)),
                 pl.BlockSpec((1, np_), lambda i: (i, 0)),
                 pl.BlockSpec((1, np_), lambda i: (i, 0)))

    if prologue is None:
        kernel = functools.partial(_conv_stats_kernel, valid_m=m)
        in_specs = [pl.BlockSpec((tm, k), lambda i: (i, 0)),
                    pl.BlockSpec((k, np_), lambda i: (0, 0))]
        args = (patches, w_mat)
    else:
        scale_c, shift_c = prologue
        reps = k // scale_c.shape[0]                  # kh*kw taps, channel-minor
        scale_row = jnp.tile(scale_c, reps).reshape(1, k).astype(jnp.float32)
        shift_row = jnp.tile(shift_c, reps).reshape(1, k).astype(jnp.float32)
        kernel = functools.partial(_bn_lrelu_conv_stats_kernel, valid_m=m)
        in_specs = [pl.BlockSpec((tm, k), lambda i: (i, 0)),
                    pl.BlockSpec((k, np_), lambda i: (0, 0)),
                    pl.BlockSpec((1, k), lambda i: (0, 0)),
                    pl.BlockSpec((1, k), lambda i: (0, 0))]
        args = (patches, w_mat, scale_row, shift_row)

    conv_raw, psum, pssq = pl.pallas_call(
        kernel,
        out_shape=out_shape,
        grid=(ntiles,),
        in_specs=in_specs,
        out_specs=out_specs,
        compiler_params=_cparams(),
    )(*args)

    s = jnp.sum(psum, axis=0)
    s2 = jnp.sum(pssq, axis=0)
    mean = s / m
    var = jnp.maximum(s2 / m - mean * mean, 0.0)
    conv_nhwc = conv_raw[:m, :n].reshape(d["B"], d["oh"], d["ow"], n)
    return conv_nhwc, mean[:n], var[:n]


def head_layer(x_flat, w_vec, b, scale_c, shift_c):
    """Final 1-channel conv head: fused BN+LeakyReLU prologue, VPU dot, sigmoid."""
    bsz, k = x_flat.shape
    tm = _choose_tm(bsz)
    mp = _round_up(bsz, tm)
    xp = jnp.pad(x_flat.astype(jnp.bfloat16), ((0, mp - bsz), (0, 0)))
    reps = k // scale_c.shape[0]
    scale_row = jnp.tile(scale_c, reps).reshape(1, k).astype(jnp.float32)
    shift_row = jnp.tile(shift_c, reps).reshape(1, k).astype(jnp.float32)
    w_row = w_vec.reshape(1, k).astype(jnp.float32)
    b_arr = jnp.asarray(b, jnp.float32).reshape(1, 1)

    out = pl.pallas_call(
        _bn_lrelu_head_kernel,
        out_shape=jax.ShapeDtypeStruct((mp, 1), jnp.float32),
        grid=(mp // tm,),
        in_specs=[pl.BlockSpec((tm, k), lambda i: (i, 0)),
                  pl.BlockSpec((1, k), lambda i: (0, 0)),
                  pl.BlockSpec((1, 1), lambda i: (0, 0)),
                  pl.BlockSpec((1, k), lambda i: (0, 0)),
                  pl.BlockSpec((1, k), lambda i: (0, 0))],
        out_specs=pl.BlockSpec((tm, 1), lambda i: (i, 0)),
        compiler_params=_cparams(),
    )(xp, w_row, b_arr, scale_row, shift_row)

    return out[:bsz, 0]


# ---------------------------------------------------------------------------
# Discriminator
# ---------------------------------------------------------------------------
def init_params(key, nch=1, nch_d=128):
    """DCGAN-style init (N(0, 0.02) conv weights).  Conv biases are only kept
    for non-BN layers: for BN layers the bias is exactly cancelled by the
    batch-mean subtraction of train-mode BatchNorm, so it is omitted."""
    ks = jax.random.split(key, 10)

    def conv_w(k, oc, ic, kh, kw):
        return 0.02 * jax.random.normal(k, (oc, ic, kh, kw), jnp.float32)

    return {
        "layer0": {"w": conv_w(ks[0], nch_d, nch, 4, 4),
                   "b": 0.02 * jax.random.normal(ks[1], (nch_d,), jnp.float32)},
        "layer1": {"w": conv_w(ks[2], nch_d * 2, nch_d, 4, 4),
                   "gamma": 1.0 + 0.1 * jax.random.normal(ks[3], (nch_d * 2,), jnp.float32),
                   "beta": 0.1 * jax.random.normal(ks[4], (nch_d * 2,), jnp.float32)},
        "layer2": {"w": conv_w(ks[5], nch_d * 4, nch_d * 2, 3, 3),
                   "gamma": 1.0 + 0.1 * jax.random.normal(ks[6], (nch_d * 4,), jnp.float32),
                   "beta": 0.1 * jax.random.normal(ks[7], (nch_d * 4,), jnp.float32)},
        "layer3": {"w": conv_w(ks[8], 1, nch_d * 4, 3, 3),
                   "b": 0.02 * jax.random.normal(ks[9], (1,), jnp.float32)},
    }


def discriminator_forward(params, x, eps=1e-5):
    """x: (B, nch, 28, 28) NCHW -> (B,) sigmoid scores (matches x.squeeze())."""
    p = params
    h = x.transpose(0, 2, 3, 1)                                # NCHW -> NHWC once

    # layer0: conv(4,2,1) + bias + LeakyReLU    (C_in=1 -> K=16: VPU path)
    h = conv_bias_lrelu_layer(h, p["layer0"]["w"], p["layer0"]["b"],
                              stride=2, padding=1, small_k=True)

    # layer1: conv(4,2,1); BN1 batch stats accumulated in the same pass
    c1, m1, v1 = conv_stats_layer(h, p["layer1"]["w"], stride=2, padding=1)
    s1, t1 = _bn_scale_shift(m1, v1, p["layer1"]["gamma"], p["layer1"]["beta"], eps)

    # layer2: BN1+LeakyReLU fused as a prologue; conv(3,2,0); BN2 stats in-pass
    c2, m2, v2 = conv_stats_layer(c1, p["layer2"]["w"], stride=2, padding=0,
                                  prologue=(s1, t1))
    s2, t2 = _bn_scale_shift(m2, v2, p["layer2"]["gamma"], p["layer2"]["beta"], eps)

    # layer3: BN2+LeakyReLU fused prologue; 3x3/stride1/pad0 head on a 3x3 map
    # is a single dot per image -> VPU multiply+reduce (no dead MXU columns).
    w3 = p["layer3"]["w"]
    assert w3.shape[2] == c2.shape[1] and w3.shape[3] == c2.shape[2]
    bsz, oh2, ow2, n2 = c2.shape
    head_in = c2.reshape(bsz, oh2 * ow2 * n2)          # (h, w, c) ordering
    w3_vec = w3.transpose(2, 3, 1, 0).reshape(oh2 * ow2 * n2)
    scores = head_layer(head_in, w3_vec, p["layer3"]["b"], s2, t2)
    return jnp.squeeze(scores)                          # (B,)  (mirrors .squeeze())


# ---------------------------------------------------------------------------
# Pure-JAX f32 reference (lax.conv) mirroring the PyTorch module
# ---------------------------------------------------------------------------
def _reference_forward(params, x, eps=1e-5):
    def conv(h, w, b, stride, padding):
        out = lax.conv_general_dilated(
            h, w, window_strides=(stride, stride),
            padding=((padding, padding), (padding, padding)),
            dimension_numbers=("NCHW", "OIHW", "NCHW"))
        if b is not None:
            out = out + b.reshape(1, -1, 1, 1)
        return out

    def bn(h, gamma, beta):
        mean = jnp.mean(h, axis=(0, 2, 3), keepdims=True)
        var = jnp.mean(jnp.square(h - mean), axis=(0, 2, 3), keepdims=True)
        hn = (h - mean) * lax.rsqrt(var + eps)
        return hn * gamma.reshape(1, -1, 1, 1) + beta.reshape(1, -1, 1, 1)

    def lrelu(h):
        return jnp.where(h >= 0, h, 0.2 * h)

    p = params
    h = lrelu(conv(x, p["layer0"]["w"], p["layer0"]["b"], 2, 1))
    h = lrelu(bn(conv(h, p["layer1"]["w"], None, 2, 1),
                 p["layer1"]["gamma"], p["layer1"]["beta"]))
    h = lrelu(bn(conv(h, p["layer2"]["w"], None, 2, 0),
                 p["layer2"]["gamma"], p["layer2"]["beta"]))
    h = jax.nn.sigmoid(conv(h, p["layer3"]["w"], p["layer3"]["b"], 1, 0))
    return jnp.squeeze(h)


if __name__ == "__main__":
    key = jax.random.PRNGKey(0)
    k_param, k_x = jax.random.split(key)

    # Small shapes consistent with the module: MNIST-like 28x28, nch=1.
    # nch_d reduced 128 -> 32 to keep the example small.
    B, NCH, NCH_D, H, W = 2, 1, 32, 28, 28
    params = init_params(k_param, nch=NCH, nch_d=NCH_D)
    x = jax.random.normal(k_x, (B, NCH, H, W), jnp.float32)

    fwd = jax.jit(discriminator_forward)
    out = jax.block_until_ready(fwd(params, x))

    assert out.shape == (B,), f"unexpected output shape {out.shape}"
    assert bool(jnp.all(jnp.isfinite(out))), "non-finite output"
    assert bool(jnp.all((out >= 0.0) & (out <= 1.0))), "sigmoid range violated"

    # Cross-check vs f32 lax.conv reference (bf16 MXU operands / activations
    # -> loose tolerance).
    ref = jax.jit(_reference_forward)(params, x)
    err = float(jnp.max(jnp.abs(out.astype(jnp.float32) - ref)))
    assert err < 5e-2, f"mismatch vs reference: max abs err {err}"

    print("KERNEL_OK")
</pallas_src>

<mosaic_0001>
module attributes {stable_mosaic.version = 11 : i64} {
  func.func @_conv_bias_lrelu_kernel(%arg0: i32, %arg1: memref<392x16xbf16, #tpu.memory_space<vmem>>, %arg2: memref<16x128xbf16, #tpu.memory_space<vmem>>, %arg3: memref<1x128xf32, #tpu.memory_space<vmem>>, %arg4: memref<392x128xbf16, #tpu.memory_space<vmem>>) attributes {dimension_semantics = [#tpu.dimension_semantics<parallel>], iteration_bounds = array<i64: 1>, scalar_prefetch = 0 : i64, scratch_operands = 0 : i64, tpu.core_type = #tpu.core_type<tc>, window_params = [{transform_indices = @transform_0, window_bounds = array<i64: 392, 16>}, {pipeline_mode = #tpu.pipeline_mode<synchronous>, transform_indices = @transform_1, window_bounds = array<i64: 16, 128>}, {pipeline_mode = #tpu.pipeline_mode<synchronous>, transform_indices = @transform_2, window_bounds = array<i64: 1, 128>}, {transform_indices = @transform_3, window_bounds = array<i64: 392, 128>}]} {
    %c0 = arith.constant 0 : index
    %c0_0 = arith.constant 0 : index
    %0 = vector.load %arg1[%c0, %c0_0] : memref<392x16xbf16, #tpu.memory_space<vmem>>, vector<392x16xbf16>
    %1 = arith.extf %0 : vector<392x16xbf16> to vector<392x16xf32>
    %c0_1 = arith.constant 0 : index
    %c0_2 = arith.constant 0 : index
    %2 = vector.load %arg2[%c0_1, %c0_2] : memref<16x128xbf16, #tpu.memory_space<vmem>>, vector<16x128xbf16>
    %3 = arith.extf %2 : vector<16x128xbf16> to vector<16x128xf32>
    %4 = vector.extract_strided_slice %1 {offsets = [0, 0], sizes = [392, 1], strides = [1, 1]} : vector<392x16xf32> to vector<392x1xf32>
    %5 = vector.extract_strided_slice %3 {offsets = [0, 0], sizes = [1, 128], strides = [1, 1]} : vector<16x128xf32> to vector<1x128xf32>
    %6 = vector.broadcast %4 : vector<392x1xf32> to vector<392x128xf32>
    %7 = vector.broadcast %5 : vector<1x128xf32> to vector<392x128xf32>
    %8 = arith.mulf %6, %7 : vector<392x128xf32>
    %9 = vector.extract_strided_slice %1 {offsets = [0, 1], sizes = [392, 1], strides = [1, 1]} : vector<392x16xf32> to vector<392x1xf32>
    %10 = vector.extract_strided_slice %3 {offsets = [1, 0], sizes = [1, 128], strides = [1, 1]} : vector<16x128xf32> to vector<1x128xf32>
    %11 = vector.broadcast %9 : vector<392x1xf32> to vector<392x128xf32>
    %12 = vector.broadcast %10 : vector<1x128xf32> to vector<392x128xf32>
    %13 = arith.mulf %11, %12 : vector<392x128xf32>
    %14 = arith.addf %8, %13 : vector<392x128xf32>
    %15 = vector.extract_strided_slice %1 {offsets = [0, 2], sizes = [392, 1], strides = [1, 1]} : vector<392x16xf32> to vector<392x1xf32>
    %16 = vector.extract_strided_slice %3 {offsets = [2, 0], sizes = [1, 128], strides = [1, 1]} : vector<16x128xf32> to vector<1x128xf32>
    %17 = vector.broadcast %15 : vector<392x1xf32> to vector<392x128xf32>
    %18 = vector.broadcast %16 : vector<1x128xf32> to vector<392x128xf32>
    %19 = arith.mulf %17, %18 : vector<392x128xf32>
    %20 = arith.addf %14, %19 : vector<392x128xf32>
    %21 = vector.extract_strided_slice %1 {offsets = [0, 3], sizes = [392, 1], strides = [1, 1]} : vector<392x16xf32> to vector<392x1xf32>
    %22 = vector.extract_strided_slice %3 {offsets = [3, 0], sizes = [1, 128], strides = [1, 1]} : vector<16x128xf32> to vector<1x128xf32>
    %23 = vector.broadcast %21 : vector<392x1xf32> to vector<392x128xf32>
    %24 = vector.broadcast %22 : vector<1x128xf32> to vector<392x128xf32>
    %25 = arith.mulf %23, %24 : vector<392x128xf32>
    %26 = arith.addf %20, %25 : vector<392x128xf32>
    %27 = vector.extract_strided_slice %1 {offsets = [0, 4], sizes = [392, 1], strides = [1, 1]} : vector<392x16xf32> to vector<392x1xf32>
    %28 = vector.extract_strided_slice %3 {offsets = [4, 0], sizes = [1, 128], strides = [1, 1]} : vector<16x128xf32> to vector<1x128xf32>
    %29 = vector.broadcast %27 : vector<392x1xf32> to vector<392x128xf32>
    %30 = vector.broadcast %28 : vector<1x128xf32> to vector<392x128xf32>
    %31 = arith.mulf %29, %30 : vector<392x128xf32>
    %32 = arith.addf %26, %31 : vector<392x128xf32>
    %33 = vector.extract_strided_slice %1 {offsets = [0, 5], sizes = [392, 1], strides = [1, 1]} : vector<392x16xf32> to vector<392x1xf32>
    %34 = vector.extract_strided_slice %3 {offsets = [5, 0], sizes = [1, 128], strides = [1, 1]} : vector<16x128xf32> to vector<1x128xf32>
    %35 = vector.broadcast %33 : vector<392x1xf32> to vector<392x128xf32>
    %36 = vector.broadcast %34 : vector<1x128xf32> to vector<392x128xf32>
    %37 = arith.mulf %35, %36 : vector<392x128xf32>
    %38 = arith.addf %32, %37 : vector<392x128xf32>
    %39 = vector.extract_strided_slice %1 {offsets = [0, 6], sizes = [392, 1], strides = [1, 1]} : vector<392x16xf32> to vector<392x1xf32>
    %40 = vector.extract_strided_slice %3 {offsets = [6, 0], sizes = [1, 128], strides = [1, 1]} : vector<16x128xf32> to vector<1x128xf32>
    %41 = vector.broadcast %39 : vector<392x1xf32> to vector<392x128xf32>
    %42 = vector.broadcast %40 : vector<1x128xf32> to vector<392x128xf32>
    %43 = arith.mulf %41, %42 : vector<392x128xf32>
    %44 = arith.addf %38, %43 : vector<392x128xf32>
    %45 = vector.extract_strided_slice %1 {offsets = [0, 7], sizes = [392, 1], strides = [1, 1]} : vector<392x16xf32> to vector<392x1xf32>
    %46 = vector.extract_strided_slice %3 {offsets = [7, 0], sizes = [1, 128], strides = [1, 1]} : vector<16x128xf32> to vector<1x128xf32>
    %47 = vector.broadcast %45 : vector<392x1xf32> to vector<392x128xf32>
    %48 = vector.broadcast %46 : vector<1x128xf32> to vector<392x128xf32>
    %49 = arith.mulf %47, %48 : vector<392x128xf32>
    %50 = arith.addf %44, %49 : vector<392x128xf32>
    %51 = vector.extract_strided_slice %1 {offsets = [0, 8], sizes = [392, 1], strides = [1, 1]} : vector<392x16xf32> to vector<392x1xf32>
    %52 = vector.extract_strided_slice %3 {offsets = [8, 0], sizes = [1, 128], strides = [1, 1]} : vector<16x128xf32> to vector<1x128xf32>
    %53 = vector.broadcast %51 : vector<392x1xf32> to vector<392x128xf32>
    %54 = vector.broadcast %52 : vector<1x128xf32> to vector<392x128xf32>
    %55 = arith.mulf %53, %54 : vector<392x128xf32>
    %56 = arith.addf %50, %55 : vector<392x128xf32>
    %57 = vector.extract_strided_slice %1 {offsets = [0, 9], sizes = [392, 1], strides = [1, 1]} : vector<392x16xf32> to vector<392x1xf32>
    %58 = vector.extract_strided_slice %3 {offsets = [9, 0], sizes = [1, 128], strides = [1, 1]} : vector<16x128xf32> to vector<1x128xf32>
    %59 = vector.broadcast %57 : vector<392x1xf32> to vector<392x128xf32>
    %60 = vector.broadcast %58 : vector<1x128xf32> to vector<392x128xf32>
    %61 = arith.mulf %59, %60 : vector<392x128xf32>
    %62 = arith.addf %56, %61 : vector<392x128xf32>
    %63 = vector.extract_strided_slice %1 {offsets = [0, 10], sizes = [392, 1], strides = [1, 1]} : vector<392x16xf32> to vector<392x1xf32>
    %64 = vector.extract_strided_slice %3 {offsets = [10, 0], sizes = [1, 128], strides = [1, 1]} : vector<16x128xf32> to vector<1x128xf32>
    %65 = vector.broadcast %63 : vector<392x1xf32> to vector<392x128xf32>
    %66 = vector.broadcast %64 : vector<1x128xf32> to vector<392x128xf32>
    %67 = arith.mulf %65, %66 : vector<392x128xf32>
    %68 = arith.addf %62, %67 : vector<392x128xf32>
    %69 = vector.extract_strided_slice %1 {offsets = [0, 11], sizes = [392, 1], strides = [1, 1]} : vector<392x16xf32> to vector<392x1xf32>
    %70 = vector.extract_strided_slice %3 {offsets = [11, 0], sizes = [1, 128], strides = [1, 1]} : vector<16x128xf32> to vector<1x128xf32>
    %71 = vector.broadcast %69 : vector<392x1xf32> to vector<392x128xf32>
    %72 = vector.broadcast %70 : vector<1x128xf32> to vector<392x128xf32>
    %73 = arith.mulf %71, %72 : vector<392x128xf32>
    %74 = arith.addf %68, %73 : vector<392x128xf32>
    %75 = vector.extract_strided_slice %1 {offsets = [0, 12], sizes = [392, 1], strides = [1, 1]} : vector<392x16xf32> to vector<392x1xf32>
    %76 = vector.extract_strided_slice %3 {offsets = [12, 0], sizes = [1, 128], strides = [1, 1]} : vector<16x128xf32> to vector<1x128xf32>
    %77 = vector.broadcast %75 : vector<392x1xf32> to vector<392x128xf32>
    %78 = vector.broadcast %76 : vector<1x128xf32> to vector<392x128xf32>
    %79 = arith.mulf %77, %78 : vector<392x128xf32>
    %80 = arith.addf %74, %79 : vector<392x128xf32>
    %81 = vector.extract_strided_slice %1 {offsets = [0, 13], sizes = [392, 1], strides = [1, 1]} : vector<392x16xf32> to vector<392x1xf32>
    %82 = vector.extract_strided_slice %3 {offsets = [13, 0], sizes = [1, 128], strides = [1, 1]} : vector<16x128xf32> to vector<1x128xf32>
    %83 = vector.broadcast %81 : vector<392x1xf32> to vector<392x128xf32>
    %84 = vector.broadcast %82 : vector<1x128xf32> to vector<392x128xf32>
    %85 = arith.mulf %83, %84 : vector<392x128xf32>
    %86 = arith.addf %80, %85 : vector<392x128xf32>
    %87 = vector.extract_strided_slice %1 {offsets = [0, 14], sizes = [392, 1], strides = [1, 1]} : vector<392x16xf32> to vector<392x1xf32>
    %88 = vector.extract_strided_slice %3 {offsets = [14, 0], sizes = [1, 128], strides = [1, 1]} : vector<16x128xf32> to vector<1x128xf32>
    %89 = vector.broadcast %87 : vector<392x1xf32> to vector<392x128xf32>
    %90 = vector.broadcast %88 : vector<1x128xf32> to vector<392x128xf32>
    %91 = arith.mulf %89, %90 : vector<392x128xf32>
    %92 = arith.addf %86, %91 : vector<392x128xf32>
    %93 = vector.extract_strided_slice %1 {offsets = [0, 15], sizes = [392, 1], strides = [1, 1]} : vector<392x16xf32> to vector<392x1xf32>
    %94 = vector.extract_strided_slice %3 {offsets = [15, 0], sizes = [1, 128], strides = [1, 1]} : vector<16x128xf32> to vector<1x128xf32>
    %95 = vector.broadcast %93 : vector<392x1xf32> to vector<392x128xf32>
    %96 = vector.broadcast %94 : vector<1x128xf32> to vector<392x128xf32>
    %97 = arith.mulf %95, %96 : vector<392x128xf32>
    %98 = arith.addf %92, %97 : vector<392x128xf32>
    %c0_3 = arith.constant 0 : index
    %c0_4 = arith.constant 0 : index
    %99 = vector.load %arg3[%c0_3, %c0_4] : memref<1x128xf32, #tpu.memory_space<vmem>>, vector<1x128xf32>
    %100 = vector.broadcast %99 : vector<1x128xf32> to vector<392x128xf32>
    %101 = arith.addf %98, %100 : vector<392x128xf32>
    %cst = arith.constant 0.000000e+00 : f32
    %102 = vector.broadcast %cst : f32 to vector<392x128xf32>
    %103 = arith.cmpf oge, %101, %102 : vector<392x128xf32>
    %cst_5 = arith.constant 2.000000e-01 : f32
    %104 = vector.broadcast %cst_5 : f32 to vector<392x128xf32>
    %105 = arith.mulf %104, %101 : vector<392x128xf32>
    %106 = arith.select %103, %101, %105 : vector<392x128xi1>, vector<392x128xf32>
    %107 = arith.truncf %106 : vector<392x128xf32> to vector<392x128xbf16>
    %c0_6 = arith.constant 0 : index
    %c0_7 = arith.constant 0 : index
    %108 = vector.load %arg4[%c0_6, %c0_7] : memref<392x128xbf16, #tpu.memory_space<vmem>>, vector<392x128xbf16>
    tpu.vector_store %arg4[%c0_6, %c0_7], %107 {strides = array<i32>} : memref<392x128xbf16, #tpu.memory_space<vmem>>, vector<392x128xbf16>,
    return
  }
  func.func @transform_0(%arg0: i32) -> (i32, i32) {
    %c0_i32 = arith.constant 0 : i32
    %c0_i32_0 = arith.constant 0 : i32
    return %arg0, %c0_i32 : i32, i32
  }
  func.func @transform_1(%arg0: i32) -> (i32, i32) {
    %c0_i32 = arith.constant 0 : i32
    %c0_i32_0 = arith.constant 0 : i32
    %c0_i32_1 = arith.constant 0 : i32
    return %c0_i32, %c0_i32_0 : i32, i32
  }
  func.func @transform_2(%arg0: i32) -> (i32, i32) {
    %c0_i32 = arith.constant 0 : i32
    %c0_i32_0 = arith.constant 0 : i32
    %c0_i32_1 = arith.constant 0 : i32
    return %c0_i32, %c0_i32_0 : i32, i32
  }
  func.func @transform_3(%arg0: i32) -> (i32, i32) {
    %c0_i32 = arith.constant 0 : i32
    %c0_i32_0 = arith.constant 0 : i32
    return %arg0, %c0_i32 : i32, i32
  }
}

module attributes {stable_mosaic.version = 11 : i64} {
  func.func @_conv_stats_kernel(%arg0: i32, %arg1: memref<104x512xbf16, #tpu.memory_space<vmem>>, %arg2: memref<512x128xbf16, #tpu.memory_space<vmem>>, %arg3: memref<104x128xbf16, #tpu.memory_space<vmem>>, %arg4: memref<1x128xf32, #tpu.memory_space<vmem>>, %arg5: memref<1x128xf32, #tpu.memory_space<vmem>>) attributes {dimension_semantics = [#tpu.dimension_semantics<parallel>], iteration_bounds = array<i64: 1>, scalar_prefetch = 0 : i64, scratch_operands = 0 : i64, tpu.core_type = #tpu.core_type<tc>, window_params = [{transform_indices = @transform_0, window_bounds = array<i64: 104, 512>}, {pipeline_mode = #tpu.pipeline_mode<synchronous>, transform_indices = @transform_1, window_bounds = array<i64: 512, 128>}, {transform_indices = @transform_2, window_bounds = array<i64: 104, 128>}, {transform_indices = @transform_3, window_bounds = array<i64: 1, 128>}, {transform_indices = @transform_4, window_bounds = array<i64: 1, 128>}]} {
    %c0 = arith.constant 0 : index
    %c0_0 = arith.constant 0 : index
    %0 = vector.load %arg1[%c0, %c0_0] : memref<104x512xbf16, #tpu.memory_space<vmem>>, vector<104x512xbf16>
    %c0_1 = arith.constant 0 : index
    %c0_2 = arith.constant 0 : index
    %1 = vector.load %arg2[%c0_1, %c0_2] : memref<512x128xbf16, #tpu.memory_space<vmem>>, vector<512x128xbf16>
    %cst = arith.constant dense<0.000000e+00> : vector<104x128xf32>
    %2 = tpu.matmul %0, %1, %cst {dimension_numbers = #tpu.dot_dimension_numbers<[1], [0], [0], [1], [0, 0, 1, 1], [], []>} : vector<104x512xbf16>, vector<512x128xbf16>, vector<104x128xf32> -> vector<104x128xf32>
    %3 = arith.truncf %2 : vector<104x128xf32> to vector<104x128xbf16>
    %c0_3 = arith.constant 0 : index
    %c0_4 = arith.constant 0 : index
    %4 = vector.load %arg3[%c0_3, %c0_4] : memref<104x128xbf16, #tpu.memory_space<vmem>>, vector<104x128xbf16>
    tpu.vector_store %arg3[%c0_3, %c0_4], %3 {strides = array<i32>} : memref<104x128xbf16, #tpu.memory_space<vmem>>, vector<104x128xbf16>,
    %c104_i32 = arith.constant 104 : i32
    %5 = arith.muli %arg0, %c104_i32 : i32
    %6 = tpu.iota {dimensions = array<i32: 0>} : vector<104x1xi32>
    %7 = vector.broadcast %5 : i32 to vector<104x1xi32>
    %8 = arith.addi %7, %6 : vector<104x1xi32>
    %c98_i32 = arith.constant 98 : i32
    %9 = vector.broadcast %c98_i32 : i32 to vector<104x1xi32>
    %10 = arith.cmpi slt, %8, %9 : vector<104x1xi32>
    %cst_5 = arith.constant 0.000000e+00 : f32
    %11 = vector.shape_cast %10 : vector<104x1xi1> to vector<104x1xi1>
    %12 = vector.broadcast %11 : vector<104x1xi1> to vector<104x128xi1>
    %13 = vector.broadcast %cst_5 : f32 to vector<104x128xf32>
    %14 = arith.select %12, %2, %13 : vector<104x128xi1>, vector<104x128xf32>
    %cst_6 = arith.constant dense<0.000000e+00> : vector<128xf32>
    %15 = vector.multi_reduction <add>, %14, %cst_6 [0] : vector<104x128xf32> to vector<128xf32>
    %16 = vector.shape_cast %15 : vector<128xf32> to vector<1x128xf32>
    %c0_7 = arith.constant 0 : index
    %c0_8 = arith.constant 0 : index
    %17 = vector.load %arg4[%c0_7, %c0_8] : memref<1x128xf32, #tpu.memory_space<vmem>>, vector<1x128xf32>
    tpu.vector_store %arg4[%c0_7, %c0_8], %16 {strides = array<i32>} : memref<1x128xf32, #tpu.memory_space<vmem>>, vector<1x128xf32>,
    %18 = arith.mulf %14, %14 : vector<104x128xf32>
    %cst_9 = arith.constant dense<0.000000e+00> : vector<128xf32>
    %19 = vector.multi_reduction <add>, %18, %cst_9 [0] : vector<104x128xf32> to vector<128xf32>
    %20 = vector.shape_cast %19 : vector<128xf32> to vector<1x128xf32>
    %c0_10 = arith.constant 0 : index
    %c0_11 = arith.constant 0 : index
    %21 = vector.load %arg5[%c0_10, %c0_11] : memref<1x128xf32, #tpu.memory_space<vmem>>, vector<1x128xf32>
    tpu.vector_store %arg5[%c0_10, %c0_11], %20 {strides = array<i32>} : memref<1x128xf32, #tpu.memory_space<vmem>>, vector<1x128xf32>,
    return
  }
  func.func @transform_0(%arg0: i32) -> (i32, i32) {
    %c0_i32 = arith.constant 0 : i32
    %c0_i32_0 = arith.constant 0 : i32
    return %arg0, %c0_i32 : i32, i32
  }
  func.func @transform_1(%arg0: i32) -> (i32, i32) {
    %c0_i32 = arith.constant 0 : i32
    %c0_i32_0 = arith.constant 0 : i32
    %c0_i32_1 = arith.constant 0 : i32
    return %c0_i32, %c0_i32_0 : i32, i32
  }
  func.func @transform_2(%arg0: i32) -> (i32, i32) {
    %c0_i32 = arith.constant 0 : i32
    %c0_i32_0 = arith.constant 0 : i32
    return %arg0, %c0_i32 : i32, i32
  }
  func.func @transform_3(%arg0: i32) -> (i32, i32) {
    %c0_i32 = arith.constant 0 : i32
    %c0_i32_0 = arith.constant 0 : i32
    return %arg0, %c0_i32 : i32, i32
  }
  func.func @transform_4(%arg0: i32) -> (i32, i32) {
    %c0_i32 = arith.constant 0 : i32
    %c0_i32_0 = arith.constant 0 : i32
    return %arg0, %c0_i32 : i32, i32
  }
}

module attributes {stable_mosaic.version = 11 : i64} {
  func.func @_bn_lrelu_conv_stats_kernel(%arg0: i32, %arg1: memref<24x576xbf16, #tpu.memory_space<vmem>>, %arg2: memref<576x128xbf16, #tpu.memory_space<vmem>>, %arg3: memref<1x576xf32, #tpu.memory_space<vmem>>, %arg4: memref<1x576xf32, #tpu.memory_space<vmem>>, %arg5: memref<24x128xbf16, #tpu.memory_space<vmem>>, %arg6: memref<1x128xf32, #tpu.memory_space<vmem>>, %arg7: memref<1x128xf32, #tpu.memory_space<vmem>>) attributes {dimension_semantics = [#tpu.dimension_semantics<parallel>], iteration_bounds = array<i64: 1>, scalar_prefetch = 0 : i64, scratch_operands = 0 : i64, tpu.core_type = #tpu.core_type<tc>, window_params = [{transform_indices = @transform_0, window_bounds = array<i64: 24, 576>}, {pipeline_mode = #tpu.pipeline_mode<synchronous>, transform_indices = @transform_1, window_bounds = array<i64: 576, 128>}, {pipeline_mode = #tpu.pipeline_mode<synchronous>, transform_indices = @transform_2, window_bounds = array<i64: 1, 576>}, {pipeline_mode = #tpu.pipeline_mode<synchronous>, transform_indices = @transform_3, window_bounds = array<i64: 1, 576>}, {transform_indices = @transform_4, window_bounds = array<i64: 24, 128>}, {transform_indices = @transform_5, window_bounds = array<i64: 1, 128>}, {transform_indices = @transform_6, window_bounds = array<i64: 1, 128>}]} {
    %c0 = arith.constant 0 : index
    %c0_0 = arith.constant 0 : index
    %0 = vector.load %arg1[%c0, %c0_0] : memref<24x576xbf16, #tpu.memory_space<vmem>>, vector<24x576xbf16>
    %1 = arith.extf %0 : vector<24x576xbf16> to vector<24x576xf32>
    %c0_1 = arith.constant 0 : index
    %c0_2 = arith.constant 0 : index
    %2 = vector.load %arg3[%c0_1, %c0_2] : memref<1x576xf32, #tpu.memory_space<vmem>>, vector<1x576xf32>
    %3 = vector.broadcast %2 : vector<1x576xf32> to vector<24x576xf32>
    %4 = arith.mulf %1, %3 : vector<24x576xf32>
    %c0_3 = arith.constant 0 : index
    %c0_4 = arith.constant 0 : index
    %5 = vector.load %arg4[%c0_3, %c0_4] : memref<1x576xf32, #tpu.memory_space<vmem>>, vector<1x576xf32>
    %6 = vector.broadcast %5 : vector<1x576xf32> to vector<24x576xf32>
    %7 = arith.addf %4, %6 : vector<24x576xf32>
    %cst = arith.constant 0.000000e+00 : f32
    %8 = vector.broadcast %cst : f32 to vector<24x576xf32>
    %9 = arith.cmpf oge, %7, %8 : vector<24x576xf32>
    %cst_5 = arith.constant 2.000000e-01 : f32
    %10 = vector.broadcast %cst_5 : f32 to vector<24x576xf32>
    %11 = arith.mulf %10, %7 : vector<24x576xf32>
    %12 = arith.select %9, %7, %11 : vector<24x576xi1>, vector<24x576xf32>
    %13 = arith.truncf %12 : vector<24x576xf32> to vector<24x576xbf16>
    %c0_6 = arith.constant 0 : index
    %c0_7 = arith.constant 0 : index
    %14 = vector.load %arg2[%c0_6, %c0_7] : memref<576x128xbf16, #tpu.memory_space<vmem>>, vector<576x128xbf16>
    %cst_8 = arith.constant dense<0.000000e+00> : vector<24x128xf32>
    %15 = tpu.matmul %13, %14, %cst_8 {dimension_numbers = #tpu.dot_dimension_numbers<[1], [0], [0], [1], [0, 0, 1, 1], [], []>} : vector<24x576xbf16>, vector<576x128xbf16>, vector<24x128xf32> -> vector<24x128xf32>
    %16 = arith.truncf %15 : vector<24x128xf32> to vector<24x128xbf16>
    %c0_9 = arith.constant 0 : index
    %c0_10 = arith.constant 0 : index
    %17 = vector.load %arg5[%c0_9, %c0_10] : memref<24x128xbf16, #tpu.memory_space<vmem>>, vector<24x128xbf16>
    tpu.vector_store %arg5[%c0_9, %c0_10], %16 {strides = array<i32>} : memref<24x128xbf16, #tpu.memory_space<vmem>>, vector<24x128xbf16>,
    %c24_i32 = arith.constant 24 : i32
    %18 = arith.muli %arg0, %c24_i32 : i32
    %19 = tpu.iota {dimensions = array<i32: 0>} : vector<24x1xi32>
    %20 = vector.broadcast %18 : i32 to vector<24x1xi32>
    %21 = arith.addi %20, %19 : vector<24x1xi32>
    %c18_i32 = arith.constant 18 : i32
    %22 = vector.broadcast %c18_i32 : i32 to vector<24x1xi32>
    %23 = arith.cmpi slt, %21, %22 : vector<24x1xi32>
    %cst_11 = arith.constant 0.000000e+00 : f32
    %24 = vector.shape_cast %23 : vector<24x1xi1> to vector<24x1xi1>
    %25 = vector.broadcast %24 : vector<24x1xi1> to vector<24x128xi1>
    %26 = vector.broadcast %cst_11 : f32 to vector<24x128xf32>
    %27 = arith.select %25, %15, %26 : vector<24x128xi1>, vector<24x128xf32>
    %cst_12 = arith.constant dense<0.000000e+00> : vector<128xf32>
    %28 = vector.multi_reduction <add>, %27, %cst_12 [0] : vector<24x128xf32> to vector<128xf32>
    %29 = vector.shape_cast %28 : vector<128xf32> to vector<1x128xf32>
    %c0_13 = arith.constant 0 : index
    %c0_14 = arith.constant 0 : index
    %30 = vector.load %arg6[%c0_13, %c0_14] : memref<1x128xf32, #tpu.memory_space<vmem>>, vector<1x128xf32>
    tpu.vector_store %arg6[%c0_13, %c0_14], %29 {strides = array<i32>} : memref<1x128xf32, #tpu.memory_space<vmem>>, vector<1x128xf32>,
    %31 = arith.mulf %27, %27 : vector<24x128xf32>
    %cst_15 = arith.constant dense<0.000000e+00> : vector<128xf32>
    %32 = vector.multi_reduction <add>, %31, %cst_15 [0] : vector<24x128xf32> to vector<128xf32>
    %33 = vector.shape_cast %32 : vector<128xf32> to vector<1x128xf32>
    %c0_16 = arith.constant 0 : index
    %c0_17 = arith.constant 0 : index
    %34 = vector.load %arg7[%c0_16, %c0_17] : memref<1x128xf32, #tpu.memory_space<vmem>>, vector<1x128xf32>
    tpu.vector_store %arg7[%c0_16, %c0_17], %33 {strides = array<i32>} : memref<1x128xf32, #tpu.memory_space<vmem>>, vector<1x128xf32>,
    return
  }
  func.func @transform_0(%arg0: i32) -> (i32, i32) {
    %c0_i32 = arith.constant 0 : i32
    %c0_i32_0 = arith.constant 0 : i32
    return %arg0, %c0_i32 : i32, i32
  }
  func.func @transform_1(%arg0: i32) -> (i32, i32) {
    %c0_i32 = arith.constant 0 : i32
    %c0_i32_0 = arith.constant 0 : i32
    %c0_i32_1 = arith.constant 0 : i32
    return %c0_i32, %c0_i32_0 : i32, i32
  }
  func.func @transform_2(%arg0: i32) -> (i32, i32) {
    %c0_i32 = arith.constant 0 : i32
    %c0_i32_0 = arith.constant 0 : i32
    %c0_i32_1 = arith.constant 0 : i32
    return %c0_i32, %c0_i32_0 : i32, i32
  }
  func.func @transform_3(%arg0: i32) -> (i32, i32) {
    %c0_i32 = arith.constant 0 : i32
    %c0_i32_0 = arith.constant 0 : i32
    %c0_i32_1 = arith.constant 0 : i32
    return %c0_i32, %c0_i32_0 : i32, i32
  }
  func.func @transform_4(%arg0: i32) -> (i32, i32) {
    %c0_i32 = arith.constant 0 : i32
    %c0_i32_0 = arith.constant 0 : i32
    return %arg0, %c0_i32 : i32, i32
  }
  func.func @transform_5(%arg0: i32) -> (i32, i32) {
    %c0_i32 = arith.constant 0 : i32
    %c0_i32_0 = arith.constant 0 : i32
    return %arg0, %c0_i32 : i32, i32
  }
  func.func @transform_6(%arg0: i32) -> (i32, i32) {
    %c0_i32 = arith.constant 0 : i32
    %c0_i32_0 = arith.constant 0 : i32
    return %arg0, %c0_i32 : i32, i32
  }
}

module attributes {stable_mosaic.version = 11 : i64} {
  func.func @_bn_lrelu_head_kernel(%arg0: i32, %arg1: memref<8x1152xbf16, #tpu.memory_space<vmem>>, %arg2: memref<1x1152xf32, #tpu.memory_space<vmem>>, %arg3: memref<1x1xf32, #tpu.memory_space<vmem>>, %arg4: memref<1x1152xf32, #tpu.memory_space<vmem>>, %arg5: memref<1x1152xf32, #tpu.memory_space<vmem>>, %arg6: memref<8x1xf32, #tpu.memory_space<vmem>>) attributes {dimension_semantics = [#tpu.dimension_semantics<parallel>], iteration_bounds = array<i64: 1>, scalar_prefetch = 0 : i64, scratch_operands = 0 : i64, tpu.core_type = #tpu.core_type<tc>, window_params = [{transform_indices = @transform_0, window_bounds = array<i64: 8, 1152>}, {pipeline_mode = #tpu.pipeline_mode<synchronous>, transform_indices = @transform_1, window_bounds = array<i64: 1, 1152>}, {pipeline_mode = #tpu.pipeline_mode<synchronous>, transform_indices = @transform_2, window_bounds = array<i64: 1, 1>}, {pipeline_mode = #tpu.pipeline_mode<synchronous>, transform_indices = @transform_3, window_bounds = array<i64: 1, 1152>}, {pipeline_mode = #tpu.pipeline_mode<synchronous>, transform_indices = @transform_4, window_bounds = array<i64: 1, 1152>}, {transform_indices = @transform_5, window_bounds = array<i64: 8, 1>}]} {
    %c0 = arith.constant 0 : index
    %c0_0 = arith.constant 0 : index
    %0 = vector.load %arg1[%c0, %c0_0] : memref<8x1152xbf16, #tpu.memory_space<vmem>>, vector<8x1152xbf16>
    %1 = arith.extf %0 : vector<8x1152xbf16> to vector<8x1152xf32>
    %c0_1 = arith.constant 0 : index
    %c0_2 = arith.constant 0 : index
    %2 = vector.load %arg4[%c0_1, %c0_2] : memref<1x1152xf32, #tpu.memory_space<vmem>>, vector<1x1152xf32>
    %3 = vector.broadcast %2 : vector<1x1152xf32> to vector<8x1152xf32>
    %4 = arith.mulf %1, %3 : vector<8x1152xf32>
    %c0_3 = arith.constant 0 : index
    %c0_4 = arith.constant 0 : index
    %5 = vector.load %arg5[%c0_3, %c0_4] : memref<1x1152xf32, #tpu.memory_space<vmem>>, vector<1x1152xf32>
    %6 = vector.broadcast %5 : vector<1x1152xf32> to vector<8x1152xf32>
    %7 = arith.addf %4, %6 : vector<8x1152xf32>
    %cst = arith.constant 0.000000e+00 : f32
    %8 = vector.broadcast %cst : f32 to vector<8x1152xf32>
    %9 = arith.cmpf oge, %7, %8 : vector<8x1152xf32>
    %cst_5 = arith.constant 2.000000e-01 : f32
    %10 = vector.broadcast %cst_5 : f32 to vector<8x1152xf32>
    %11 = arith.mulf %10, %7 : vector<8x1152xf32>
    %12 = arith.select %9, %7, %11 : vector<8x1152xi1>, vector<8x1152xf32>
    %c0_6 = arith.constant 0 : index
    %c0_7 = arith.constant 0 : index
    %13 = vector.load %arg2[%c0_6, %c0_7] : memref<1x1152xf32, #tpu.memory_space<vmem>>, vector<1x1152xf32>
    %14 = vector.broadcast %13 : vector<1x1152xf32> to vector<8x1152xf32>
    %15 = arith.mulf %12, %14 : vector<8x1152xf32>
    %cst_8 = arith.constant dense<0.000000e+00> : vector<8xf32>
    %16 = vector.multi_reduction <add>, %15, %cst_8 [1] : vector<8x1152xf32> to vector<8xf32>
    %17 = vector.shape_cast %16 : vector<8xf32> to vector<8x1xf32>
    %c0_9 = arith.constant 0 : index
    %c0_10 = arith.constant 0 : index
    %18 = vector.load %arg3[%c0_9, %c0_10] : memref<1x1xf32, #tpu.memory_space<vmem>>, vector<1x1xf32>
    %19 = vector.broadcast %18 : vector<1x1xf32> to vector<8x1xf32>
    %20 = arith.addf %17, %19 : vector<8x1xf32>
    %cst_11 = arith.constant 0.000000e+00 : f32
    %21 = vector.broadcast %cst_11 : f32 to vector<8x1xf32>
    %22 = arith.subf %21, %20 : vector<8x1xf32>
    %23 = math.exp %22 : vector<8x1xf32>
    %cst_12 = arith.constant 1.000000e+00 : f32
    %24 = vector.broadcast %cst_12 : f32 to vector<8x1xf32>
    %25 = arith.addf %24, %23 : vector<8x1xf32>
    %cst_13 = arith.constant 1.000000e+00 : f32
    %26 = vector.broadcast %cst_13 : f32 to vector<8x1xf32>
    %27 = arith.divf %26, %25 : vector<8x1xf32>
    %c0_14 = arith.constant 0 : index
    %c0_15 = arith.constant 0 : index
    %28 = vector.load %arg6[%c0_14, %c0_15] : memref<8x1xf32, #tpu.memory_space<vmem>>, vector<8x1xf32>
    tpu.vector_store %arg6[%c0_14, %c0_15], %27 {strides = array<i32>} : memref<8x1xf32, #tpu.memory_space<vmem>>, vector<8x1xf32>,
    return
  }
  func.func @transform_0(%arg0: i32) -> (i32, i32) {
    %c0_i32 = arith.constant 0 : i32
    %c0_i32_0 = arith.constant 0 : i32
    return %arg0, %c0_i32 : i32, i32
  }
  func.func @transform_1(%arg0: i32) -> (i32, i32) {
    %c0_i32 = arith.constant 0 : i32
    %c0_i32_0 = arith.constant 0 : i32
    %c0_i32_1 = arith.constant 0 : i32
    return %c0_i32, %c0_i32_0 : i32, i32
  }
  func.func @transform_2(%arg0: i32) -> (i32, i32) {
    %c0_i32 = arith.constant 0 : i32
    %c0_i32_0 = arith.constant 0 : i32
    %c0_i32_1 = arith.constant 0 : i32
    return %c0_i32, %c0_i32_0 : i32, i32
  }
  func.func @transform_3(%arg0: i32) -> (i32, i32) {
    %c0_i32 = arith.constant 0 : i32
    %c0_i32_0 = arith.constant 0 : i32
    %c0_i32_1 = arith.constant 0 : i32
    return %c0_i32, %c0_i32_0 : i32, i32
  }
  func.func @transform_4(%arg0: i32) -> (i32, i32) {
    %c0_i32 = arith.constant 0 : i32
    %c0_i32_0 = arith.constant 0 : i32
    %c0_i32_1 = arith.constant 0 : i32
    return %c0_i32, %c0_i32_0 : i32, i32
  }
  func.func @transform_5(%arg0: i32) -> (i32, i32) {
    %c0_i32 = arith.constant 0 : i32
    %c0_i32_0 = arith.constant 0 : i32
    return %arg0, %c0_i32 : i32, i32
  }
}

</mosaic_0001>

<llo_original>
// kernel: discriminator_forward.4
$region0: #{discriminator_forward.4}
  #allocation0 [shape = 'u32[]', space=smem, size = 0x4, offset = 0x4, fixed_abs, tag = 'smem constant byte address 0x4 - core index']
  #allocation1 [shape = 'u32[144,128]{1,0:T(1,128)}', space=vmem, size = 0x12000, scoped, tag = 'internal scratch']
  %s0 = inlined_call_operand.vmem [shape: bf16[392,16], index: 0, kind: input, shape index: {}]
  %s1 = inlined_call_operand.vmem [shape: bf16[16,128], index: 1, kind: input, shape index: {}]
  %s2 = inlined_call_operand.vmem [shape: f32[1,128], index: 2, kind: input, shape index: {}]
  %s3 = inlined_call_operand.vmem [shape: bf16[392,128], index: 3, kind: output, shape index: {}]
  %s4 = sld [smem:[#allocation0]]
  $region22: #{discriminator_forward.4} parent=0
    _
  %s6 = ssub.s32 1, %s4
  %s7 = scalar_select 0, %s6, %s4
  // Predicated region
  $region2: #{discriminator_forward.4} parent=0 // pred_check
    _
  $region3: #{discriminator_forward.4} parent=0 // pred_check_branch
    %9 = sbr.rel (0) target = $region5
  $region4: #{discriminator_forward.4} parent=0 // pred_region
    _
  $region5: #{discriminator_forward.4} parent=0 // pred_fallthru
    _
  // Predicated region
  $region6: #{discriminator_forward.4} parent=0 // pred_check
    _
  $region7: #{discriminator_forward.4} parent=0 // pred_check_branch
    %11 = sbr.rel (0) target = $region9
  $region8: #{discriminator_forward.4} parent=0 // pred_region
    _
  $region9: #{discriminator_forward.4} parent=0 // pred_fallthru
    _
  // Predicated region
  $region10: #{discriminator_forward.4} parent=0 // pred_check
    _
  $region11: #{discriminator_forward.4} parent=0 // pred_check_branch
    %13 = sbr.rel (0) target = $region13
  $region12: #{discriminator_forward.4} parent=0 // pred_region
    _
  $region13: #{discriminator_forward.4} parent=0 // pred_fallthru
    _
  %v14 = vld [vmem:[%s0] sm:$0xf]
  %v15 = vld [vmem:[%s0 + $0x4] sm:$0xf]
  %v16 = vld [vmem:[%s0 + $0x8] sm:$0xf]
  %v17 = vld [vmem:[%s0 + $0xc] sm:$0xf]
  %v18 = vld [vmem:[%s0 + $0x10] sm:$0xf]
  %v19 = vld [vmem:[%s0 + $0x14] sm:$0xf]
  %v20 = vld [vmem:[%s0 + $0x18] sm:$0xf]
  %v21 = vld [vmem:[%s0 + $0x1c] sm:$0xf]
  %v22 = vld [vmem:[%s0 + $0x20] sm:$0xf]
  %v23 = vld [vmem:[%s0 + $0x24] sm:$0xf]
  %v24 = vld [vmem:[%s0 + $0x28] sm:$0xf]
  %v25 = vld [vmem:[%s0 + $0x2c] sm:$0xf]
  %v26 = vld [vmem:[%s0 + $0x30] sm:$0xf]
  %v27 = vld [vmem:[%s0 + $0x34] sm:$0xf]
  %v28 = vld [vmem:[%s0 + $0x38] sm:$0xf]
  %v29 = vld [vmem:[%s0 + $0x3c] sm:$0xf]
  %v30 = vld [vmem:[%s0 + $0x40] sm:$0xf]
  %v31 = vld [vmem:[%s0 + $0x44] sm:$0xf]
  %v32 = vld [vmem:[%s0 + $0x48] sm:$0xf]
  %v33 = vld [vmem:[%s0 + $0x4c] sm:$0xf]
  %v34 = vld [vmem:[%s0 + $0x50] sm:$0xf]
  %v35 = vld [vmem:[%s0 + $0x54] sm:$0xf]
  %v36 = vld [vmem:[%s0 + $0x58] sm:$0xf]
  %v37 = vld [vmem:[%s0 + $0x5c] sm:$0xf]
  %v38 = vld [vmem:[%s0 + $0x60] sm:$0xf]
  %v39 = vld [vmem:[%s0 + $0x64] sm:$0xf]
  %v40 = vld [vmem:[%s0 + $0x68] sm:$0xf]
  %v41 = vld [vmem:[%s0 + $0x6c] sm:$0xf]
  %v42 = vld [vmem:[%s0 + $0x70] sm:$0xf]
  %v43 = vld [vmem:[%s0 + $0x74] sm:$0xf]
  %v44 = vld [vmem:[%s0 + $0x78] sm:$0xf]
  %v45 = vld [vmem:[%s0 + $0x7c] sm:$0xf]
  %v46 = vld [vmem:[%s0 + $0x80] sm:$0xf]
  %v47 = vld [vmem:[%s0 + $0x84] sm:$0xf]
  %v48 = vld [vmem:[%s0 + $0x88] sm:$0xf]
  %v49 = vld [vmem:[%s0 + $0x8c] sm:$0xf]
  %v50 = vld [vmem:[%s0 + $0x90] sm:$0xf]
  %v51 = vld [vmem:[%s0 + $0x94] sm:$0xf]
  %v52 = vld [vmem:[%s0 + $0x98] sm:$0xf]
  %v53 = vld [vmem:[%s0 + $0x9c] sm:$0xf]
  %v54 = vld [vmem:[%s0 + $0xa0] sm:$0xf]
  %v55 = vld [vmem:[%s0 + $0xa4] sm:$0xf]
  %v56 = vld [vmem:[%s0 + $0xa8] sm:$0xf]
  %v57 = vld [vmem:[%s0 + $0xac] sm:$0xf]
  %v58 = vld [vmem:[%s0 + $0xb0] sm:$0xf]
  %v59 = vld [vmem:[%s0 + $0xb4] sm:$0xf]
  %v60 = vld [vmem:[%s0 + $0xb8] sm:$0xf]
  %v61 = vld [vmem:[%s0 + $0xbc] sm:$0xf]
  %v62 = vld [vmem:[%s0 + $0xc0] sm:$0xf]
  %v63 = vunpack.c.l.bf16 %v14
  %v64 = vunpack.c.l.bf16 %v15
  %v65 = vunpack.c.l.bf16 %v16
  %v66 = vunpack.c.l.bf16 %v17
  %v67 = vunpack.c.l.bf16 %v18
  %v68 = vunpack.c.l.bf16 %v19
  %v69 = vunpack.c.l.bf16 %v20
  %v70 = vunpack.c.l.bf16 %v21
  %v71 = vunpack.c.l.bf16 %v22
  %v72 = vunpack.c.l.bf16 %v23
  %v73 = vunpack.c.l.bf16 %v24
  %v74 = vunpack.c.l.bf16 %v25
  %v75 = vunpack.c.l.bf16 %v26
  %v76 = vunpack.c.l.bf16 %v27
  %v77 = vunpack.c.l.bf16 %v28
  %v78 = vunpack.c.l.bf16 %v29
  %v79 = vunpack.c.l.bf16 %v30
  %v80 = vunpack.c.l.bf16 %v31
  %v81 = vunpack.c.l.bf16 %v32
  %v82 = vunpack.c.l.bf16 %v33
  %v83 = vunpack.c.l.bf16 %v34
  %v84 = vunpack.c.l.bf16 %v35
  %v85 = vunpack.c.l.bf16 %v36
  %v86 = vunpack.c.l.bf16 %v37
  %v87 = vunpack.c.l.bf16 %v38
  %v88 = vunpack.c.l.bf16 %v39
  %v89 = vunpack.c.l.bf16 %v40
  %v90 = vunpack.c.l.bf16 %v41
  %v91 = vunpack.c.l.bf16 %v42
  %v92 = vunpack.c.l.bf16 %v43
  %v93 = vunpack.c.l.bf16 %v44
  %v94 = vunpack.c.l.bf16 %v45
  %v95 = vunpack.c.l.bf16 %v46
  %v96 = vunpack.c.l.bf16 %v47
  %v97 = vunpack.c.l.bf16 %v48
  %v98 = vunpack.c.l.bf16 %v49
  %v99 = vunpack.c.l.bf16 %v50
  %v100 = vunpack.c.l.bf16 %v51
  %v101 = vunpack.c.l.bf16 %v52
  %v102 = vunpack.c.l.bf16 %v53
  %v103 = vunpack.c.l.bf16 %v54
  %v104 = vunpack.c.l.bf16 %v55
  %v105 = vunpack.c.l.bf16 %v56
  %v106 = vunpack.c.l.bf16 %v57
  %v107 = vunpack.c.l.bf16 %v58
  %v108 = vunpack.c.l.bf16 %v59
  %v109 = vunpack.c.l.bf16 %v60
  %v110 = vunpack.c.l.bf16 %v61
  %v111 = vunpack.c.l.bf16 %v62
  %v112 = vld [vmem:[%s1] sm:$0xf]
  %v113 = vld [vmem:[%s1 + $0x4] sm:$0xf]
  %v114 = vunpack.c.l.bf16 %v112
  %v115 = vunpack.c.l.bf16 %v113
  %117 = vset.pattern.permute.xlu0 0
  %118 = vperm.xlu0 %117, %v63
  %v119 = vpop.permute.xlu0 %118
  %122 = vset.pattern.permute.xlu0 0
  %123 = vperm.xlu0 %122, %v64
  %v124 = vpop.permute.xlu0 %123
  %127 = vset.pattern.permute.xlu0 0
  %128 = vperm.xlu0 %127, %v65
  %v129 = vpop.permute.xlu0 %128
  %132 = vset.pattern.permute.xlu0 0
  %133 = vperm.xlu0 %132, %v66
  %v134 = vpop.permute.xlu0 %133
  %137 = vset.pattern.permute.xlu0 0
  %138 = vperm.xlu0 %137, %v67
  %v139 = vpop.permute.xlu0 %138
  %142 = vset.pattern.permute.xlu0 0
  %143 = vperm.xlu0 %142, %v68
  %v144 = vpop.permute.xlu0 %143
  %147 = vset.pattern.permute.xlu0 0
  %148 = vperm.xlu0 %147, %v69
  %v149 = vpop.permute.xlu0 %148
  %152 = vset.pattern.permute.xlu0 0
  %153 = vperm.xlu0 %152, %v70
  %v154 = vpop.permute.xlu0 %153
  %157 = vset.pattern.permute.xlu0 0
  %158 = vperm.xlu0 %157, %v71
  %v159 = vpop.permute.xlu0 %158
  %162 = vset.pattern.permute.xlu0 0
  %163 = vperm.xlu0 %162, %v72
  %v164 = vpop.permute.xlu0 %163
  %167 = vset.pattern.permute.xlu0 0
  %168 = vperm.xlu0 %167, %v73
  %v169 = vpop.permute.xlu0 %168
  %172 = vset.pattern.permute.xlu0 0
  %173 = vperm.xlu0 %172, %v74
  %v174 = vpop.permute.xlu0 %173
  %177 = vset.pattern.permute.xlu0 0
  %178 = vperm.xlu0 %177, %v75
  %v179 = vpop.permute.xlu0 %178
  %182 = vset.pattern.permute.xlu0 0
  %183 = vperm.xlu0 %182, %v76
  %v184 = vpop.permute.xlu0 %183
  %187 = vset.pattern.permute.xlu0 0
  %188 = vperm.xlu0 %187, %v77
  %v189 = vpop.permute.xlu0 %188
  %192 = vset.pattern.permute.xlu0 0
  %193 = vperm.xlu0 %192, %v78
  %v194 = vpop.permute.xlu0 %193
  %197 = vset.pattern.permute.xlu0 0
  %198 = vperm.xlu0 %197, %v79
  %v199 = vpop.permute.xlu0 %198
  %202 = vset.pattern.permute.xlu0 0
  %203 = vperm.xlu0 %202, %v80
  %v204 = vpop.permute.xlu0 %203
  %207 = vset.pattern.permute.xlu0 0
  %208 = vperm.xlu0 %207, %v81
  %v209 = vpop.permute.xlu0 %208
  %212 = vset.pattern.permute.xlu0 0
  %213 = vperm.xlu0 %212, %v82
  %v214 = vpop.permute.xlu0 %213
  %217 = vset.pattern.permute.xlu0 0
  %218 = vperm.xlu0 %217, %v83
  %v219 = vpop.permute.xlu0 %218
  %222 = vset.pattern.permute.xlu0 0
  %223 = vperm.xlu0 %222, %v84
  %v224 = vpop.permute.xlu0 %223
  %227 = vset.pattern.permute.xlu0 0
  %228 = vperm.xlu0 %227, %v85
  %v229 = vpop.permute.xlu0 %228
  %232 = vset.pattern.permute.xlu0 0
  %233 = vperm.xlu0 %232, %v86
  %v234 = vpop.permute.xlu0 %233
  %237 = vset.pattern.permute.xlu0 0
  %238 = vperm.xlu0 %237, %v87
  %v239 = vpop.permute.xlu0 %238
  %242 = vset.pattern.permute.xlu0 0
  %243 = vperm.xlu0 %242, %v88
  %v244 = vpop.permute.xlu0 %243
  %247 = vset.pattern.permute.xlu0 0
  %248 = vperm.xlu0 %247, %v89
  %v249 = vpop.permute.xlu0 %248
  %252 = vset.pattern.permute.xlu0 0
  %253 = vperm.xlu0 %252, %v90
  %v254 = vpop.permute.xlu0 %253
  %257 = vset.pattern.permute.xlu0 0
  %258 = vperm.xlu0 %257, %v91
  %v259 = vpop.permute.xlu0 %258
  %262 = vset.pattern.permute.xlu0 0
  %263 = vperm.xlu0 %262, %v92
  %v264 = vpop.permute.xlu0 %263
  %267 = vset.pattern.permute.xlu0 0
  %268 = vperm.xlu0 %267, %v93
  %v269 = vpop.permute.xlu0 %268
  %272 = vset.pattern.permute.xlu0 0
  %273 = vperm.xlu0 %272, %v94
  %v274 = vpop.permute.xlu0 %273
  %277 = vset.pattern.permute.xlu0 0
  %278 = vperm.xlu0 %277, %v95
  %v279 = vpop.permute.xlu0 %278
  %282 = vset.pattern.permute.xlu0 0
  %283 = vperm.xlu0 %282, %v96
  %v284 = vpop.permute.xlu0 %283
  %287 = vset.pattern.permute.xlu0 0
  %288 = vperm.xlu0 %287, %v97
  %v289 = vpop.permute.xlu0 %288
  %292 = vset.pattern.permute.xlu0 0
  %293 = vperm.xlu0 %292, %v98
  %v294 = vpop.permute.xlu0 %293
  %297 = vset.pattern.permute.xlu0 0
  %298 = vperm.xlu0 %297, %v99
  %v299 = vpop.permute.xlu0 %298
  %302 = vset.pattern.permute.xlu0 0
  %303 = vperm.xlu0 %302, %v100
  %v304 = vpop.permute.xlu0 %303
  %307 = vset.pattern.permute.xlu0 0
  %308 = vperm.xlu0 %307, %v101
  %v309 = vpop.permute.xlu0 %308
  %312 = vset.pattern.permute.xlu0 0
  %313 = vperm.xlu0 %312, %v102
  %v314 = vpop.permute.xlu0 %313
  %317 = vset.pattern.permute.xlu0 0
  %318 = vperm.xlu0 %317, %v103
  %v319 = vpop.permute.xlu0 %318
  %322 = vset.pattern.permute.xlu0 0
  %323 = vperm.xlu0 %322, %v104
  %v324 = vpop.permute.xlu0 %323
  %327 = vset.pattern.permute.xlu0 0
  %328 = vperm.xlu0 %327, %v105
  %v329 = vpop.permute.xlu0 %328
  %332 = vset.pattern.permute.xlu0 0
  %333 = vperm.xlu0 %332, %v106
  %v334 = vpop.permute.xlu0 %333
  %337 = vset.pattern.permute.xlu0 0
  %338 = vperm.xlu0 %337, %v107
  %v339 = vpop.permute.xlu0 %338
  %342 = vset.pattern.permute.xlu0 0
  %343 = vperm.xlu0 %342, %v108
  %v344 = vpop.permute.xlu0 %343
  %347 = vset.pattern.permute.xlu0 0
  %348 = vperm.xlu0 %347, %v109
  %v349 = vpop.permute.xlu0 %348
  %352 = vset.pattern.permute.xlu0 0
  %353 = vperm.xlu0 %352, %v110
  %v354 = vpop.permute.xlu0 %353
  %357 = vset.pattern.permute.xlu0 0
  %358 = vperm.xlu0 %357, %v111
  %v359 = vpop.permute.xlu0 %358
  %v361 = vlaneseq
  %v362 = vshrl.u32 %v361, 7
  %v363 = vsub.s32 0, %v362
  %v364 = vrot.slane %v114, %v363
  %v365 = vmul.f32 %v119, %v364
  %v366 = vmul.f32 %v124, %v364
  %v367 = vmul.f32 %v129, %v364
  %v368 = vmul.f32 %v134, %v364
  %v369 = vmul.f32 %v139, %v364
  %v370 = vmul.f32 %v144, %v364
  %v371 = vmul.f32 %v149, %v364
  %v372 = vmul.f32 %v154, %v364
  %v373 = vmul.f32 %v159, %v364
  %v374 = vmul.f32 %v164, %v364
  %v375 = vmul.f32 %v169, %v364
  %v376 = vmul.f32 %v174, %v364
  %v377 = vmul.f32 %v179, %v364
  %v378 = vmul.f32 %v184, %v364
  %v379 = vmul.f32 %v189, %v364
  %v380 = vmul.f32 %v194, %v364
  %v381 = vmul.f32 %v199, %v364
  %v382 = vmul.f32 %v204, %v364
  %v383 = vmul.f32 %v209, %v364
  %v384 = vmul.f32 %v214, %v364
  %v385 = vmul.f32 %v219, %v364
  %v386 = vmul.f32 %v224, %v364
  %v387 = vmul.f32 %v229, %v364
  %v388 = vmul.f32 %v234, %v364
  %v389 = vmul.f32 %v239, %v364
  %v390 = vmul.f32 %v244, %v364
  %v391 = vmul.f32 %v249, %v364
  %v392 = vmul.f32 %v254, %v364
  %v393 = vmul.f32 %v259, %v364
  %v394 = vmul.f32 %v264, %v364
  %v395 = vmul.f32 %v269, %v364
  %v396 = vmul.f32 %v274, %v364
  %v397 = vmul.f32 %v279, %v364
  %v398 = vmul.f32 %v284, %v364
  %v399 = vmul.f32 %v289, %v364
  %v400 = vmul.f32 %v294, %v364
  %v401 = vmul.f32 %v299, %v364
  %v402 = vmul.f32 %v304, %v364
  %v403 = vmul.f32 %v309, %v364
  %v404 = vmul.f32 %v314, %v364
  %v405 = vmul.f32 %v319, %v364
  %v406 = vmul.f32 %v324, %v364
  %v407 = vmul.f32 %v329, %v364
  %v408 = vmul.f32 %v334, %v364
  %v409 = vmul.f32 %v339, %v364
  %v410 = vmul.f32 %v344, %v364
  %v411 = vmul.f32 %v349, %v364
  %v412 = vmul.f32 %v354, %v364
  %v413 = vmul.f32 %v359, %v364
  %414 = vset.pattern.permute.xlu0 1
  %415 = vperm.xlu0 %414, %v63
  %v416 = vpop.permute.xlu0 %415
  %418 = vset.pattern.permute.xlu0 1
  %419 = vperm.xlu0 %418, %v64
  %v420 = vpop.permute.xlu0 %419
  %422 = vset.pattern.permute.xlu0 1
  %423 = vperm.xlu0 %422, %v65
  %v424 = vpop.permute.xlu0 %423
  %426 = vset.pattern.permute.xlu0 1
  %427 = vperm.xlu0 %426, %v66
  %v428 = vpop.permute.xlu0 %427
  %430 = vset.pattern.permute.xlu0 1
  %431 = vperm.xlu0 %430, %v67
  %v432 = vpop.permute.xlu0 %431
  %434 = vset.pattern.permute.xlu0 1
  %435 = vperm.xlu0 %434, %v68
  %v436 = vpop.permute.xlu0 %435
  %438 = vset.pattern.permute.xlu0 1
  %439 = vperm.xlu0 %438, %v69
  %v440 = vpop.permute.xlu0 %439
  %442 = vset.pattern.permute.xlu0 1
  %443 = vperm.xlu0 %442, %v70
  %v444 = vpop.permute.xlu0 %443
  %446 = vset.pattern.permute.xlu0 1
  %447 = vperm.xlu0 %446, %v71
  %v448 = vpop.permute.xlu0 %447
  %450 = vset.pattern.permute.xlu0 1
  %451 = vperm.xlu0 %450, %v72
  %v452 = vpop.permute.xlu0 %451
  %454 = vset.pattern.permute.xlu0 1
  %455 = vperm.xlu0 %454, %v73
  %v456 = vpop.permute.xlu0 %455
  %458 = vset.pattern.permute.xlu0 1
  %459 = vperm.xlu0 %458, %v74
  %v460 = vpop.permute.xlu0 %459
  %462 = vset.pattern.permute.xlu0 1
  %463 = vperm.xlu0 %462, %v75
  %v464 = vpop.permute.xlu0 %463
  %466 = vset.pattern.permute.xlu0 1
  %467 = vperm.xlu0 %466, %v76
  %v468 = vpop.permute.xlu0 %467
  %470 = vset.pattern.permute.xlu0 1
  %471 = vperm.xlu0 %470, %v77
  %v472 = vpop.permute.xlu0 %471
  %474 = vset.pattern.permute.xlu0 1
  %475 = vperm.xlu0 %474, %v78
  %v476 = vpop.permute.xlu0 %475
  %478 = vset.pattern.permute.xlu0 1
  %479 = vperm.xlu0 %478, %v79
  %v480 = vpop.permute.xlu0 %479
  %482 = vset.pattern.permute.xlu0 1
  %483 = vperm.xlu0 %482, %v80
  %v484 = vpop.permute.xlu0 %483
  %486 = vset.pattern.permute.xlu0 1
  %487 = vperm.xlu0 %486, %v81
  %v488 = vpop.permute.xlu0 %487
  %490 = vset.pattern.permute.xlu0 1
  %491 = vperm.xlu0 %490, %v82
  %v492 = vpop.permute.xlu0 %491
  %494 = vset.pattern.permute.xlu0 1
  %495 = vperm.xlu0 %494, %v83
  %v496 = vpop.permute.xlu0 %495
  %498 = vset.pattern.permute.xlu0 1
  %499 = vperm.xlu0 %498, %v84
  %v500 = vpop.permute.xlu0 %499
  %502 = vset.pattern.permute.xlu0 1
  %503 = vperm.xlu0 %502, %v85
  %v504 = vpop.permute.xlu0 %503
  %506 = vset.pattern.permute.xlu0 1
  %507 = vperm.xlu0 %506, %v86
  %v508 = vpop.permute.xlu0 %507
  %510 = vset.pattern.permute.xlu0 1
  %511 = vperm.xlu0 %510, %v87
  %v512 = vpop.permute.xlu0 %511
  %514 = vset.pattern.permute.xlu0 1
  %515 = vperm.xlu0 %514, %v88
  %v516 = vpop.permute.xlu0 %515
  %518 = vset.pattern.permute.xlu0 1
  %519 = vperm.xlu0 %518, %v89
  %v520 = vpop.permute.xlu0 %519
  %522 = vset.pattern.permute.xlu0 1
  %523 = vperm.xlu0 %522, %v90
  %v524 = vpop.permute.xlu0 %523
  %526 = vset.pattern.permute.xlu0 1
  %527 = vperm.xlu0 %526, %v91
  %v528 = vpop.permute.xlu0 %527
  %530 = vset.pattern.permute.xlu0 1
  %531 = vperm.xlu0 %530, %v92
  %v532 = vpop.permute.xlu0 %531
  %534 = vset.pattern.permute.xlu0 1
  %535 = vperm.xlu0 %534, %v93
  %v536 = vpop.permute.xlu0 %535
  %538 = vset.pattern.permute.xlu0 1
  %539 = vperm.xlu0 %538, %v94
  %v540 = vpop.permute.xlu0 %539
  %542 = vset.pattern.permute.xlu0 1
  %543 = vperm.xlu0 %542, %v95
  %v544 = vpop.permute.xlu0 %543
  %546 = vset.pattern.permute.xlu0 1
  %547 = vperm.xlu0 %546, %v96
  %v548 = vpop.permute.xlu0 %547
  %550 = vset.pattern.permute.xlu0 1
  %551 = vperm.xlu0 %550, %v97
  %v552 = vpop.permute.xlu0 %551
  %554 = vset.pattern.permute.xlu0 1
  %555 = vperm.xlu0 %554, %v98
  %v556 = vpop.permute.xlu0 %555
  %558 = vset.pattern.permute.xlu0 1
  %559 = vperm.xlu0 %558, %v99
  %v560 = vpop.permute.xlu0 %559
  %562 = vset.pattern.permute.xlu0 1
  %563 = vperm.xlu0 %562, %v100
  %v564 = vpop.permute.xlu0 %563
  %566 = vset.pattern.permute.xlu0 1
  %567 = vperm.xlu0 %566, %v101
  %v568 = vpop.permute.xlu0 %567
  %570 = vset.pattern.permute.xlu0 1
  %571 = vperm.xlu0 %570, %v102
  %v572 = vpop.permute.xlu0 %571
  %574 = vset.pattern.permute.xlu0 1
  %575 = vperm.xlu0 %574, %v103
  %v576 = vpop.permute.xlu0 %575
  %578 = vset.pattern.permute.xlu0 1
  %579 = vperm.xlu0 %578, %v104
  %v580 = vpop.permute.xlu0 %579
  %582 = vset.pattern.permute.xlu0 1
  %583 = vperm.xlu0 %582, %v105
  %v584 = vpop.permute.xlu0 %583
  %586 = vset.pattern.permute.xlu0 1
  %587 = vperm.xlu0 %586, %v106
  %v588 = vpop.permute.xlu0 %587
  %590 = vset.pattern.permute.xlu0 1
  %591 = vperm.xlu0 %590, %v107
  %v592 = vpop.permute.xlu0 %591
  %594 = vset.pattern.permute.xlu0 1
  %595 = vperm.xlu0 %594, %v108
  %v596 = vpop.permute.xlu0 %595
  %598 = vset.pattern.permute.xlu0 1
  %599 = vperm.xlu0 %598, %v109
  %v600 = vpop.permute.xlu0 %599
  %602 = vset.pattern.permute.xlu0 1
  %603 = vperm.xlu0 %602, %v110
  %v604 = vpop.permute.xlu0 %603
  %606 = vset.pattern.permute.xlu0 1
  %607 = vperm.xlu0 %606, %v111
  %v608 = vpop.permute.xlu0 %607
  %v610 = vlaneseq
  %v611 = vshrl.u32 %v610, 7
  %v612 = vsub.s32 1, %v611
  %v613 = vrot.slane %v114, %v612
  %v614 = vmul.f32 %v416, %v613
  %v615 = vmul.f32 %v420, %v613
  %v616 = vmul.f32 %v424, %v613
  %v617 = vmul.f32 %v428, %v613
  %v618 = vmul.f32 %v432, %v613
  %v619 = vmul.f32 %v436, %v613
  %v620 = vmul.f32 %v440, %v613
  %v621 = vmul.f32 %v444, %v613
  %v622 = vmul.f32 %v448, %v613
  %v623 = vmul.f32 %v452, %v613
  %v624 = vmul.f32 %v456, %v613
  %v625 = vmul.f32 %v460, %v613
  %v626 = vmul.f32 %v464, %v613
  %v627 = vmul.f32 %v468, %v613
  %v628 = vmul.f32 %v472, %v613
  %v629 = vmul.f32 %v476, %v613
  %v630 = vmul.f32 %v480, %v613
  %v631 = vmul.f32 %v484, %v613
  %v632 = vmul.f32 %v488, %v613
  %v633 = vmul.f32 %v492, %v613
  %v634 = vmul.f32 %v496, %v613
  %v635 = vmul.f32 %v500, %v613
  %v636 = vmul.f32 %v504, %v613
  %v637 = vmul.f32 %v508, %v613
  %v638 = vmul.f32 %v512, %v613
  %v639 = vmul.f32 %v516, %v613
  %v640 = vmul.f32 %v520, %v613
  %v641 = vmul.f32 %v524, %v613
  %v642 = vmul.f32 %v528, %v613
  %v643 = vmul.f32 %v532, %v613
  %v644 = vmul.f32 %v536, %v613
  %v645 = vmul.f32 %v540, %v613
  %v646 = vmul.f32 %v544, %v613
  %v647 = vmul.f32 %v548, %v613
  %v648 = vmul.f32 %v552, %v613
  %v649 = vmul.f32 %v556, %v613
  %v650 = vmul.f32 %v560, %v613
  %v651 = vmul.f32 %v564, %v613
  %v652 = vmul.f32 %v568, %v613
  %v653 = vmul.f32 %v572, %v613
  %v654 = vmul.f32 %v576, %v613
  %v655 = vmul.f32 %v580, %v613
  %v656 = vmul.f32 %v584, %v613
  %v657 = vmul.f32 %v588, %v613
  %v658 = vmul.f32 %v592, %v613
  %v659 = vmul.f32 %v596, %v613
  %v660 = vmul.f32 %v600, %v613
  %v661 = vmul.f32 %v604, %v613
  %v662 = vmul.f32 %v608, %v613
  %v663 = vadd.f32 %v365, %v614
  %v664 = vadd.f32 %v366, %v615
  %v665 = vadd.f32 %v367, %v616
  %v666 = vadd.f32 %v368, %v617
  %v667 = vadd.f32 %v369, %v618
  %v668 = vadd.f32 %v370, %v619
  %v669 = vadd.f32 %v371, %v620
  %v670 = vadd.f32 %v372, %v621
  %v671 = vadd.f32 %v373, %v622
  %v672 = vadd.f32 %v374, %v623
  %v673 = vadd.f32 %v375, %v624
  %v674 = vadd.f32 %v376, %v625
  %v675 = vadd.f32 %v377, %v626
  %v676 = vadd.f32 %v378, %v627
  %v677 = vadd.f32 %v379, %v628
  %v678 = vadd.f32 %v380, %v629
  %v679 = vadd.f32 %v381, %v630
  %v680 = vadd.f32 %v382, %v631
  %v681 = vadd.f32 %v383, %v632
  %v682 = vadd.f32 %v384, %v633
  %v683 = vadd.f32 %v385, %v634
  %v684 = vadd.f32 %v386, %v635
  %v685 = vadd.f32 %v387, %v636
  %v686 = vadd.f32 %v388, %v637
  %v687 = vadd.f32 %v389, %v638
  %v688 = vadd.f32 %v390, %v639
  %v689 = vadd.f32 %v391, %v640
  %v690 = vadd.f32 %v392, %v641
  %v691 = vadd.f32 %v393, %v642
  %v692 = vadd.f32 %v394, %v643
  %v693 = vadd.f32 %v395, %v644
  %v694 = vadd.f32 %v396, %v645
  %v695 = vadd.f32 %v397, %v646
  %v696 = vadd.f32 %v398, %v647
  %v697 = vadd.f32 %v399, %v648
  %v698 = vadd.f32 %v400, %v649
  %v699 = vadd.f32 %v401, %v650
  %v700 = vadd.f32 %v402, %v651
  %v701 = vadd.f32 %v403, %v652
  %v702 = vadd.f32 %v404, %v653
  %v703 = vadd.f32 %v405, %v654
  %v704 = vadd.f32 %v406, %v655
  %v705 = vadd.f32 %v407, %v656
  %v706 = vadd.f32 %v408, %v657
  %v707 = vadd.f32 %v409, %v658
  %v708 = vadd.f32 %v410, %v659
  %v709 = vadd.f32 %v411, %v660
  %v710 = vadd.f32 %v412, %v661
  %v711 = vadd.f32 %v413, %v662
  %712 = vset.pattern.permute.xlu0 2
  %713 = vperm.xlu0 %712, %v63
  %v714 = vpop.permute.xlu0 %713
  %716 = vset.pattern.permute.xlu0 2
  %717 = vperm.xlu0 %716, %v64
  %v718 = vpop.permute.xlu0 %717
  %720 = vset.pattern.permute.xlu0 2
  %721 = vperm.xlu0 %720, %v65
  %v722 = vpop.permute.xlu0 %721
  %724 = vset.pattern.permute.xlu0 2
  %725 = vperm.xlu0 %724, %v66
  %v726 = vpop.permute.xlu0 %725
  %728 = vset.pattern.permute.xlu0 2
  %729 = vperm.xlu0 %728, %v67
  %v730 = vpop.permute.xlu0 %729
  %732 = vset.pattern.permute.xlu0 2
  %733 = vperm.xlu0 %732, %v68
  %v734 = vpop.permute.xlu0 %733
  %736 = vset.pattern.permute.xlu0 2
  %737 = vperm.xlu0 %736, %v69
  %v738 = vpop.permute.xlu0 %737
  %740 = vset.pattern.permute.xlu0 2
  %741 = vperm.xlu0 %740, %v70
  %v742 = vpop.permute.xlu0 %741
  %744 = vset.pattern.permute.xlu0 2
  %745 = vperm.xlu0 %744, %v71
  %v746 = vpop.permute.xlu0 %745
  %748 = vset.pattern.permute.xlu0 2
  %749 = vperm.xlu0 %748, %v72
  %v750 = vpop.permute.xlu0 %749
  %752 = vset.pattern.permute.xlu0 2
  %753 = vperm.xlu0 %752, %v73
  %v754 = vpop.permute.xlu0 %753
  %756 = vset.pattern.permute.xlu0 2
  %757 = vperm.xlu0 %756, %v74
  %v758 = vpop.permute.xlu0 %757
  %760 = vset.pattern.permute.xlu0 2
  %761 = vperm.xlu0 %760, %v75
  %v762 = vpop.permute.xlu0 %761
  %764 = vset.pattern.permute.xlu0 2
  %765 = vperm.xlu0 %764, %v76
  %v766 = vpop.permute.xlu0 %765
  %768 = vset.pattern.permute.xlu0 2
  %769 = vperm.xlu0 %768, %v77
  %v770 = vpop.permute.xlu0 %769
  %772 = vset.pattern.permute.xlu0 2
  %773 = vperm.xlu0 %772, %v78
  %v774 = vpop.permute.xlu0 %773
  %776 = vset.pattern.permute.xlu0 2
  %777 = vperm.xlu0 %776, %v79
  %v778 = vpop.permute.xlu0 %777
  %780 = vset.pattern.permute.xlu0 2
  %781 = vperm.xlu0 %780, %v80
  %v782 = vpop.permute.xlu0 %781
  %784 = vset.pattern.permute.xlu0 2
  %785 = vperm.xlu0 %784, %v81
  %v786 = vpop.permute.xlu0 %785
  %788 = vset.pattern.permute.xlu0 2
  %789 = vperm.xlu0 %788, %v82
  %v790 = vpop.permute.xlu0 %789
  %792 = vset.pattern.permute.xlu0 2
  %793 = vperm.xlu0 %792, %v83
  %v794 = vpop.permute.xlu0 %793
  %796 = vset.pattern.permute.xlu0 2
  %797 = vperm.xlu0 %796, %v84
  %v798 = vpop.permute.xlu0 %797
  %800 = vset.pattern.permute.xlu0 2
  %801 = vperm.xlu0 %800, %v85
  %v802 = vpop.permute.xlu0 %801
  %804 = vset.pattern.permute.xlu0 2
  %805 = vperm.xlu0 %804, %v86
  %v806 = vpop.permute.xlu0 %805
  %808 = vset.pattern.permute.xlu0 2
  %809 = vperm.xlu0 %808, %v87
  %v810 = vpop.permute.xlu0 %809
  %812 = vset.pattern.permute.xlu0 2
  %813 = vperm.xlu0 %812, %v88
  %v814 = vpop.permute.xlu0 %813
  %816 = vset.pattern.permute.xlu0 2
  %817 = vperm.xlu0 %816, %v89
  %v818 = vpop.permute.xlu0 %817
  %820 = vset.pattern.permute.xlu0 2
  %821 = vperm.xlu0 %820, %v90
  %v822 = vpop.permute.xlu0 %821
  %824 = vset.pattern.permute.xlu0 2
  %825 = vperm.xlu0 %824, %v91
  %v826 = vpop.permute.xlu0 %825
  %828 = vset.pattern.permute.xlu0 2
  %829 = vperm.xlu0 %828, %v92
  %v830 = vpop.permute.xlu0 %829
  %832 = vset.pattern.permute.xlu0 2
  %833 = vperm.xlu0 %832, %v93
  %v834 = vpop.permute.xlu0 %833
  %836 = vset.pattern.permute.xlu0 2
  %837 = vperm.xlu0 %836, %v94
  %v838 = vpop.permute.xlu0 %837
  %840 = vset.pattern.permute.xlu0 2
  %841 = vperm.xlu0 %840, %v95
  %v842 = vpop.permute.xlu0 %841
  %844 = vset.pattern.permute.xlu0 2
  %845 = vperm.xlu0 %844, %v96
  %v846 = vpop.permute.xlu0 %845
  %848 = vset.pattern.permute.xlu0 2
  %849 = vperm.xlu0 %848, %v97
  %v850 = vpop.permute.xlu0 %849
  %852 = vset.pattern.permute.xlu0 2
  %853 = vperm.xlu0 %852, %v98
  %v854 = vpop.permute.xlu0 %853
  %856 = vset.pattern.permute.xlu0 2
  %857 = vperm.xlu0 %856, %v99
  %v858 = vpop.permute.xlu0 %857
  %860 = vset.pattern.permute.xlu0 2
  %861 = vperm.xlu0 %860, %v100
  %v862 = vpop.permute.xlu0 %861
  %864 = vset.pattern.permute.xlu0 2
  %865 = vperm.xlu0 %864, %v101
  %v866 = vpop.permute.xlu0 %865
  %868 = vset.pattern.permute.xlu0 2
  %869 = vperm.xlu0 %868, %v102
  %v870 = vpop.permute.xlu0 %869
  %872 = vset.pattern.permute.xlu0 2
  %873 = vperm.xlu0 %872, %v103
  %v874 = vpop.permute.xlu0 %873
  %876 = vset.pattern.permute.xlu0 2
  %877 = vperm.xlu0 %876, %v104
  %v878 = vpop.permute.xlu0 %877
  %880 = vset.pattern.permute.xlu0 2
  %881 = vperm.xlu0 %880, %v105
  %v882 = vpop.permute.xlu0 %881
  %884 = vset.pattern.permute.xlu0 2
  %885 = vperm.xlu0 %884, %v106
  %v886 = vpop.permute.xlu0 %885
  %888 = vset.pattern.permute.xlu0 2
  %889 = vperm.xlu0 %888, %v107
  %v890 = vpop.permute.xlu0 %889
  %892 = vset.pattern.permute.xlu0 2
  %893 = vperm.xlu0 %892, %v108
  %v894 = vpop.permute.xlu0 %893
  %896 = vset.pattern.permute.xlu0 2
  %897 = vperm.xlu0 %896, %v109
  %v898 = vpop.permute.xlu0 %897
  %900 = vset.pattern.permute.xlu0 2
  %901 = vperm.xlu0 %900, %v110
  %v902 = vpop.permute.xlu0 %901
  %904 = vset.pattern.permute.xlu0 2
  %905 = vperm.xlu0 %904, %v111
  %v906 = vpop.permute.xlu0 %905
  %v908 = vlaneseq
  %v909 = vshrl.u32 %v908, 7
  %v910 = vsub.s32 2, %v909
  %v911 = vrot.slane %v114, %v910
  %v912 = vmul.f32 %v714, %v911
  %v913 = vmul.f32 %v718, %v911
  %v914 = vmul.f32 %v722, %v911
  %v915 = vmul.f32 %v726, %v911
  %v916 = vmul.f32 %v730, %v911
  %v917 = vmul.f32 %v734, %v911
  %v918 = vmul.f32 %v738, %v911
  %v919 = vmul.f32 %v742, %v911
  %v920 = vmul.f32 %v746, %v911
  %v921 = vmul.f32 %v750, %v911
  %v922 = vmul.f32 %v754, %v911
  %v923 = vmul.f32 %v758, %v911
  %v924 = vmul.f32 %v762, %v911
  %v925 = vmul.f32 %v766, %v911
  %v926 = vmul.f32 %v770, %v911
  %v927 = vmul.f32 %v774, %v911
  %v928 = vmul.f32 %v778, %v911
  %v929 = vmul.f32 %v782, %v911
  %v930 = vmul.f32 %v786, %v911
  %v931 = vmul.f32 %v790, %v911
  %v932 = vmul.f32 %v794, %v911
  %v933 = vmul.f32 %v798, %v911
  %v934 = vmul.f32 %v802, %v911
  %v935 = vmul.f32 %v806, %v911
  %v936 = vmul.f32 %v810, %v911
  %v937 = vmul.f32 %v814, %v911
  %v938 = vmul.f32 %v818, %v911
  %v939 = vmul.f32 %v822, %v911
  %v940 = vmul.f32 %v826, %v911
  %v941 = vmul.f32 %v830, %v911
  %v942 = vmul.f32 %v834, %v911
  %v943 = vmul.f32 %v838, %v911
  %v944 = vmul.f32 %v842, %v911
  %v945 = vmul.f32 %v846, %v911
  %v946 = vmul.f32 %v850, %v911
  %v947 = vmul.f32 %v854, %v911
  %v948 = vmul.f32 %v858, %v911
  %v949 = vmul.f32 %v862, %v911
  %v950 = vmul.f32 %v866, %v911
  %v951 = vmul.f32 %v870, %v911
  %v952 = vmul.f32 %v874, %v911
  %v953 = vmul.f32 %v878, %v911
  %v954 = vmul.f32 %v882, %v911
  %v955 = vmul.f32 %v886, %v911
  %v956 = vmul.f32 %v890, %v911
  %v957 = vmul.f32 %v894, %v911
  %v958 = vmul.f32 %v898, %v911
  %v959 = vmul.f32 %v902, %v911
  %v960 = vmul.f32 %v906, %v911
  %v961 = vadd.f32 %v663, %v912
  %v962 = vadd.f32 %v664, %v913
  %v963 = vadd.f32 %v665, %v914
  %v964 = vadd.f32 %v666, %v915
  %v965 = vadd.f32 %v667, %v916
  %v966 = vadd.f32 %v668, %v917
  %v967 = vadd.f32 %v669, %v918
  %v968 = vadd.f32 %v670, %v919
  %v969 = vadd.f32 %v671, %v920
  %v970 = vadd.f32 %v672, %v921
  %v971 = vadd.f32 %v673, %v922
  %v972 = vadd.f32 %v674, %v923
  %v973 = vadd.f32 %v675, %v924
  %v974 = vadd.f32 %v676, %v925
  %v975 = vadd.f32 %v677, %v926
  %v976 = vadd.f32 %v678, %v927
  %v977 = vadd.f32 %v679, %v928
  %v978 = vadd.f32 %v680, %v929
  %v979 = vadd.f32 %v681, %v930
  %v980 = vadd.f32 %v682, %v931
  %v981 = vadd.f32 %v683, %v932
  %v982 = vadd.f32 %v684, %v933
  %v983 = vadd.f32 %v685, %v934
  %v984 = vadd.f32 %v686, %v935
  %v985 = vadd.f32 %v687, %v936
  %v986 = vadd.f32 %v688, %v937
  %v987 = vadd.f32 %v689, %v938
  %v988 = vadd.f32 %v690, %v939
  %v989 = vadd.f32 %v691, %v940
  %v990 = vadd.f32 %v692, %v941
  %v991 = vadd.f32 %v693, %v942
  %v992 = vadd.f32 %v694, %v943
  %v993 = vadd.f32 %v695, %v944
  %v994 = vadd.f32 %v696, %v945
  %v995 = vadd.f32 %v697, %v946
  %v996 = vadd.f32 %v698, %v947
  %v997 = vadd.f32 %v699, %v948
  %v998 = vadd.f32 %v700, %v949
  %v999 = vadd.f32 %v701, %v950
  %v1000 = vadd.f32 %v702, %v951
  %v1001 = vadd.f32 %v703, %v952
  %v1002 = vadd.f32 %v704, %v953
  %v1003 = vadd.f32 %v705, %v954
  %v1004 = vadd.f32 %v706, %v955
  %v1005 = vadd.f32 %v707, %v956
  %v1006 = vadd.f32 %v708, %v957
  %v1007 = vadd.f32 %v709, %v958
  %v1008 = vadd.f32 %v710, %v959
  %v1009 = vadd.f32 %v711, %v960
  %1010 = vset.pattern.permute.xlu0 3
  %1011 = vperm.xlu0 %1010, %v63
  %v1012 = vpop.permute.xlu0 %1011
  %1014 = vset.pattern.permute.xlu0 3
  %1015 = vperm.xlu0 %1014, %v64
  %v1016 = vpop.permute.xlu0 %1015
  %1018 = vset.pattern.permute.xlu0 3
  %1019 = vperm.xlu0 %1018, %v65
  %v1020 = vpop.permute.xlu0 %1019
  %1022 = vset.pattern.permute.xlu0 3
  %1023 = vperm.xlu0 %1022, %v66
  %v1024 = vpop.permute.xlu0 %1023
  %1026 = vset.pattern.permute.xlu0 3
  %1027 = vperm.xlu0 %1026, %v67
  %v1028 = vpop.permute.xlu0 %1027
  %1030 = vset.pattern.permute.xlu0 3
  %1031 = vperm.xlu0 %1030, %v68
  %v1032 = vpop.permute.xlu0 %1031
  %1034 = vset.pattern.permute.xlu0 3
  %1035 = vperm.xlu0 %1034, %v69
  %v1036 = vpop.permute.xlu0 %1035
  %1038 = vset.pattern.permute.xlu0 3
  %1039 = vperm.xlu0 %1038, %v70
  %v1040 = vpop.permute.xlu0 %1039
  %1042 = vset.pattern.permute.xlu0 3
  %1043 = vperm.xlu0 %1042, %v71
  %v1044 = vpop.permute.xlu0 %1043
  %1046 = vset.pattern.permute.xlu0 3
  %1047 = vperm.xlu0 %1046, %v72
  %v1048 = vpop.permute.xlu0 %1047
  %1050 = vset.pattern.permute.xlu0 3
  %1051 = vperm.xlu0 %1050, %v73
  %v1052 = vpop.permute.xlu0 %1051
  %1054 = vset.pattern.permute.xlu0 3
  %1055 = vperm.xlu0 %1054, %v74
  %v1056 = vpop.permute.xlu0 %1055
  %1058 = vset.pattern.permute.xlu0 3
  %1059 = vperm.xlu0 %1058, %v75
  %v1060 = vpop.permute.xlu0 %1059
  %1062 = vset.pattern.permute.xlu0 3
  %1063 = vperm.xlu0 %1062, %v76
  %v1064 = vpop.permute.xlu0 %1063
  %1066 = vset.pattern.permute.xlu0 3
  %1067 = vperm.xlu0 %1066, %v77
  %v1068 = vpop.permute.xlu0 %1067
  %1070 = vset.pattern.permute.xlu0 3
  %1071 = vperm.xlu0 %1070, %v78
  %v1072 = vpop.permute.xlu0 %1071
  %1074 = vset.pattern.permute.xlu0 3
  %1075 = vperm.xlu0 %1074, %v79
  %v1076 = vpop.permute.xlu0 %1075
  %1078 = vset.pattern.permute.xlu0 3
  %1079 = vperm.xlu0 %1078, %v80
  %v1080 = vpop.permute.xlu0 %1079
  %1082 = vset.pattern.permute.xlu0 3
  %1083 = vperm.xlu0 %1082, %v81
  %v1084 = vpop.permute.xlu0 %1083
  %1086 = vset.pattern.permute.xlu0 3
  %1087 = vperm.xlu0 %1086, %v82
  %v1088 = vpop.permute.xlu0 %1087
  %1090 = vset.pattern.permute.xlu0 3
  %1091 = vperm.xlu0 %1090, %v83
  %v1092 = vpop.permute.xlu0 %1091
  %1094 = vset.pattern.permute.xlu0 3
  %1095 = vperm.xlu0 %1094, %v84
  %v1096 = vpop.permute.xlu0 %1095
  %1098 = vset.pattern.permute.xlu0 3
  %1099 = vperm.xlu0 %1098, %v85
  %v1100 = vpop.permute.xlu0 %1099
  %1102 = vset.pattern.permute.xlu0 3
  %1103 = vperm.xlu0 %1102, %v86
  %v1104 = vpop.permute.xlu0 %1103
  %1106 = vset.pattern.permute.xlu0 3
  %1107 = vperm.xlu0 %1106, %v87
  %v1108 = vpop.permute.xlu0 %1107
  %1110 = vset.pattern.permute.xlu0 3
  %1111 = vperm.xlu0 %1110, %v88
  %v1112 = vpop.permute.xlu0 %1111
  %1114 = vset.pattern.permute.xlu0 3
  %1115 = vperm.xlu0 %1114, %v89
  %v1116 = vpop.permute.xlu0 %1115
  %1118 = vset.pattern.permute.xlu0 3
  %1119 = vperm.xlu0 %1118, %v90
  %v1120 = vpop.permute.xlu0 %1119
  %1122 = vset.pattern.permute.xlu0 3
  %1123 = vperm.xlu0 %1122, %v91
  %v1124 = vpop.permute.xlu0 %1123
  %1126 = vset.pattern.permute.xlu0 3
  %1127 = vperm.xlu0 %1126, %v92
  %v1128 = vpop.permute.xlu0 %1127
  %1130 = vset.pattern.permute.xlu0 3
  %1131 = vperm.xlu0 %1130, %v93
  %v1132 = vpop.permute.xlu0 %1131
  %1134 = vset.pattern.permute.xlu0 3
  %1135 = vperm.xlu0 %1134, %v94
  %v1136 = vpop.permute.xlu0 %1135
  %1138 = vset.pattern.permute.xlu0 3
  %1139 = vperm.xlu0 %1138, %v95
  %v1140 = vpop.permute.xlu0 %1139
  %1142 = vset.pattern.permute.xlu0 3
  %1143 = vperm.xlu0 %1142, %v96
  %v1144 = vpop.permute.xlu0 %1143
  %1146 = vset.pattern.permute.xlu0 3
  %1147 = vperm.xlu0 %1146, %v97
  %v1148 = vpop.permute.xlu0 %1147
  %1150 = vset.pattern.permute.xlu0 3
  %1151 = vperm.xlu0 %1150, %v98
  %v1152 = vpop.permute.xlu0 %1151
  %1154 = vset.pattern.permute.xlu0 3
  %1155 = vperm.xlu0 %1154, %v99
  %v1156 = vpop.permute.xlu0 %1155
  %1158 = vset.pattern.permute.xlu0 3
  %1159 = vperm.xlu0 %1158, %v100
  %v1160 = vpop.permute.xlu0 %1159
  %1162 = vset.pattern.permute.xlu0 3
  %1163 = vperm.xlu0 %1162, %v101
  %v1164 = vpop.permute.xlu0 %1163
  %1166 = vset.pattern.permute.xlu0 3
  %1167 = vperm.xlu0 %1166, %v102
  %v1168 = vpop.permute.xlu0 %1167
  %1170 = vset.pattern.permute.xlu0 3
  %1171 = vperm.xlu0 %1170, %v103
  %v1172 = vpop.permute.xlu0 %1171
  %1174 = vset.pattern.permute.xlu0 3
  %1175 = vperm.xlu0 %1174, %v104
  %v1176 = vpop.permute.xlu0 %1175
  %1178 = vset.pattern.permute.xlu0 3
  %1179 = vperm.xlu0 %1178, %v105
  %v1180 = vpop.permute.xlu0 %1179
  %1182 = vset.pattern.permute.xlu0 3
  %1183 = vperm.xlu0 %1182, %v106
  %v1184 = vpop.permute.xlu0 %1183
  %1186 = vset.pattern.permute.xlu0 3
  %1187 = vperm.xlu0 %1186, %v107
  %v1188 = vpop.permute.xlu0 %1187
  %1190 = vset.pattern.permute.xlu0 3
  %1191 = vperm.xlu0 %1190, %v108
  %v1192 = vpop.permute.xlu0 %1191
  %1194 = vset.pattern.permute.xlu0 3
  %1195 = vperm.xlu0 %1194, %v109
  %v1196 = vpop.permute.xlu0 %1195
  %1198 = vset.pattern.permute.xlu0 3
  %1199 = vperm.xlu0 %1198, %v110
  %v1200 = vpop.permute.xlu0 %1199
  %1202 = vset.pattern.permute.xlu0 3
  %1203 = vperm.xlu0 %1202, %v111
  %v1204 = vpop.permute.xlu0 %1203
  %v1206 = vlaneseq
  %v1207 = vshrl.u32 %v1206, 7
  %v1208 = vsub.s32 3, %v1207
  %v1209 = vrot.slane %v114, %v1208
  %v1210 = vmul.f32 %v1012, %v1209
  %v1211 = vmul.f32 %v1016, %v1209
  %v1212 = vmul.f32 %v1020, %v1209
  %v1213 = vmul.f32 %v1024, %v1209
  %v1214 = vmul.f32 %v1028, %v1209
  %v1215 = vmul.f32 %v1032, %v1209
  %v1216 = vmul.f32 %v1036, %v1209
  %v1217 = vmul.f32 %v1040, %v1209
  %v1218 = vmul.f32 %v1044, %v1209
  %v1219 = vmul.f32 %v1048, %v1209
  %v1220 = vmul.f32 %v1052, %v1209
  %v1221 = vmul.f32 %v1056, %v1209
  %v1222 = vmul.f32 %v1060, %v1209
  %v1223 = vmul.f32 %v1064, %v1209
  %v1224 = vmul.f32 %v1068, %v1209
  %v1225 = vmul.f32 %v1072, %v1209
  %v1226 = vmul.f32 %v1076, %v1209
  %v1227 = vmul.f32 %v1080, %v1209
  %v1228 = vmul.f32 %v1084, %v1209
  %v1229 = vmul.f32 %v1088, %v1209
  %v1230 = vmul.f32 %v1092, %v1209
  %v1231 = vmul.f32 %v1096, %v1209
  %v1232 = vmul.f32 %v1100, %v1209
  %v1233 = vmul.f32 %v1104, %v1209
  %v1234 = vmul.f32 %v1108, %v1209
  %v1235 = vmul.f32 %v1112, %v1209
  %v1236 = vmul.f32 %v1116, %v1209
  %v1237 = vmul.f32 %v1120, %v1209
  %v1238 = vmul.f32 %v1124, %v1209
  %v1239 = vmul.f32 %v1128, %v1209
  %v1240 = vmul.f32 %v1132, %v1209
  %v1241 = vmul.f32 %v1136, %v1209
  %v1242 = vmul.f32 %v1140, %v1209
  %v1243 = vmul.f32 %v1144, %v1209
  %v1244 = vmul.f32 %v1148, %v1209
  %v1245 = vmul.f32 %v1152, %v1209
  %v1246 = vmul.f32 %v1156, %v1209
  %v1247 = vmul.f32 %v1160, %v1209
  %v1248 = vmul.f32 %v1164, %v1209
  %v1249 = vmul.f32 %v1168, %v1209
  %v1250 = vmul.f32 %v1172, %v1209
  %v1251 = vmul.f32 %v1176, %v1209
  %v1252 = vmul.f32 %v1180, %v1209
  %v1253 = vmul.f32 %v1184, %v1209
  %v1254 = vmul.f32 %v1188, %v1209
  %v1255 = vmul.f32 %v1192, %v1209
  %v1256 = vmul.f32 %v1196, %v1209
  %v1257 = vmul.f32 %v1200, %v1209
  %v1258 = vmul.f32 %v1204, %v1209
  %v1259 = vadd.f32 %v961, %v1210
  %v1260 = vadd.f32 %v962, %v1211
  %v1261 = vadd.f32 %v963, %v1212
  %v1262 = vadd.f32 %v964, %v1213
  %v1263 = vadd.f32 %v965, %v1214
  %v1264 = vadd.f32 %v966, %v1215
  %v1265 = vadd.f32 %v967, %v1216
  %v1266 = vadd.f32 %v968, %v1217
  %v1267 = vadd.f32 %v969, %v1218
  %v1268 = vadd.f32 %v970, %v1219
  %v1269 = vadd.f32 %v971, %v1220
  %v1270 = vadd.f32 %v972, %v1221
  %v1271 = vadd.f32 %v973, %v1222
  %v1272 = vadd.f32 %v974, %v1223
  %v1273 = vadd.f32 %v975, %v1224
  %v1274 = vadd.f32 %v976, %v1225
  %v1275 = vadd.f32 %v977, %v1226
  %v1276 = vadd.f32 %v978, %v1227
  %v1277 = vadd.f32 %v979, %v1228
  %v1278 = vadd.f32 %v980, %v1229
  %v1279 = vadd.f32 %v981, %v1230
  %v1280 = vadd.f32 %v982, %v1231
  %v1281 = vadd.f32 %v983, %v1232
  %v1282 = vadd.f32 %v984, %v1233
  %v1283 = vadd.f32 %v985, %v1234
  %v1284 = vadd.f32 %v986, %v1235
  %v1285 = vadd.f32 %v987, %v1236
  %v1286 = vadd.f32 %v988, %v1237
  %v1287 = vadd.f32 %v989, %v1238
  %v1288 = vadd.f32 %v990, %v1239
  %v1289 = vadd.f32 %v991, %v1240
  %v1290 = vadd.f32 %v992, %v1241
  %v1291 = vadd.f32 %v993, %v1242
  %v1292 = vadd.f32 %v994, %v1243
  %v1293 = vadd.f32 %v995, %v1244
  %v1294 = vadd.f32 %v996, %v1245
  %v1295 = vadd.f32 %v997, %v1246
  %v1296 = vadd.f32 %v998, %v1247
  %v1297 = vadd.f32 %v999, %v1248
  %v1298 = vadd.f32 %v1000, %v1249
  %v1299 = vadd.f32 %v1001, %v1250
  %v1300 = vadd.f32 %v1002, %v1251
  %v1301 = vadd.f32 %v1003, %v1252
  %v1302 = vadd.f32 %v1004, %v1253
  %v1303 = vadd.f32 %v1005, %v1254
  %v1304 = vadd.f32 %v1006, %v1255
  %v1305 = vadd.f32 %v1007, %v1256
  %v1306 = vadd.f32 %v1008, %v1257
  %v1307 = vadd.f32 %v1009, %v1258
  %1308 = vset.pattern.permute.xlu0 4
  %1309 = vperm.xlu0 %1308, %v63
  %v1310 = vpop.permute.xlu0 %1309
  %1312 = vset.pattern.permute.xlu0 4
  %1313 = vperm.xlu0 %1312, %v64
  %v1314 = vpop.permute.xlu0 %1313
  %1316 = vset.pattern.permute.xlu0 4
  %1317 = vperm.xlu0 %1316, %v65
  %v1318 = vpop.permute.xlu0 %1317
  %1320 = vset.pattern.permute.xlu0 4
  %1321 = vperm.xlu0 %1320, %v66
  %v1322 = vpop.permute.xlu0 %1321
  %1324 = vset.pattern.permute.xlu0 4
  %1325 = vperm.xlu0 %1324, %v67
  %v1326 = vpop.permute.xlu0 %1325
  %1328 = vset.pattern.permute.xlu0 4
  %1329 = vperm.xlu0 %1328, %v68
  %v1330 = vpop.permute.xlu0 %1329
  %1332 = vset.pattern.permute.xlu0 4
  %1333 = vperm.xlu0 %1332, %v69
  %v1334 = vpop.permute.xlu0 %1333
  %1336 = vset.pattern.permute.xlu0 4
  %1337 = vperm.xlu0 %1336, %v70
  %v1338 = vpop.permute.xlu0 %1337
  %1340 = vset.pattern.permute.xlu0 4
  %1341 = vperm.xlu0 %1340, %v71
  %v1342 = vpop.permute.xlu0 %1341
  %1344 = vset.pattern.permute.xlu0 4
  %1345 = vperm.xlu0 %1344, %v72
  %v1346 = vpop.permute.xlu0 %1345
  %1348 = vset.pattern.permute.xlu0 4
  %1349 = vperm.xlu0 %1348, %v73
  %v1350 = vpop.permute.xlu0 %1349
  %1352 = vset.pattern.permute.xlu0 4
  %1353 = vperm.xlu0 %1352, %v74
  %v1354 = vpop.permute.xlu0 %1353
  %1356 = vset.pattern.permute.xlu0 4
  %1357 = vperm.xlu0 %1356, %v75
  %v1358 = vpop.permute.xlu0 %1357
  %1360 = vset.pattern.permute.xlu0 4
  %1361 = vperm.xlu0 %1360, %v76
  %v1362 = vpop.permute.xlu0 %1361
  %1364 = vset.pattern.permute.xlu0 4
  %1365 = vperm.xlu0 %1364, %v77
  %v1366 = vpop.permute.xlu0 %1365
  %1368 = vset.pattern.permute.xlu0 4
  %1369 = vperm.xlu0 %1368, %v78
  %v1370 = vpop.permute.xlu0 %1369
  %1372 = vset.pattern.permute.xlu0 4
  %1373 = vperm.xlu0 %1372, %v79
  %v1374 = vpop.permute.xlu0 %1373
  %1376 = vset.pattern.permute.xlu0 4
  %1377 = vperm.xlu0 %1376, %v80
  %v1378 = vpop.permute.xlu0 %1377
  %1380 = vset.pattern.permute.xlu0 4
  %1381 = vperm.xlu0 %1380, %v81
  %v1382 = vpop.permute.xlu0 %1381
  %1384 = vset.pattern.permute.xlu0 4
  %1385 = vperm.xlu0 %1384, %v82
  %v1386 = vpop.permute.xlu0 %1385
  %1388 = vset.pattern.permute.xlu0 4
  %1389 = vperm.xlu0 %1388, %v83
  %v1390 = vpop.permute.xlu0 %1389
  %1392 = vset.pattern.permute.xlu0 4
  %1393 = vperm.xlu0 %1392, %v84
  %v1394 = vpop.permute.xlu0 %1393
  %1396 = vset.pattern.permute.xlu0 4
  %1397 = vperm.xlu0 %1396, %v85
  %v1398 = vpop.permute.xlu0 %1397
  %1400 = vset.pattern.permute.xlu0 4
  %1401 = vperm.xlu0 %1400, %v86
  %v1402 = vpop.permute.xlu0 %1401
  %1404 = vset.pattern.permute.xlu0 4
  %1405 = vperm.xlu0 %1404, %v87
  %v1406 = vpop.permute.xlu0 %1405
  %1408 = vset.pattern.permute.xlu0 4
  %1409 = vperm.xlu0 %1408, %v88
  %v1410 = vpop.permute.xlu0 %1409
  %1412 = vset.pattern.permute.xlu0 4
  %1413 = vperm.xlu0 %1412, %v89
  %v1414 = vpop.permute.xlu0 %1413
  %1416 = vset.pattern.permute.xlu0 4
  %1417 = vperm.xlu0 %1416, %v90
  %v1418 = vpop.permute.xlu0 %1417
  %1420 = vset.pattern.permute.xlu0 4
  %1421 = vperm.xlu0 %1420, %v91
  %v1422 = vpop.permute.xlu0 %1421
  %1424 = vset.pattern.permute.xlu0 4
  %1425 = vperm.xlu0 %1424, %v92
  %v1426 = vpop.permute.xlu0 %1425
  %1428 = vset.pattern.permute.xlu0 4
  %1429 = vperm.xlu0 %1428, %v93
  %v1430 = vpop.permute.xlu0 %1429
  %1432 = vset.pattern.permute.xlu0 4
  %1433 = vperm.xlu0 %1432, %v94
  %v1434 = vpop.permute.xlu0 %1433
  %1436 = vset.pattern.permute.xlu0 4
  %1437 = vperm.xlu0 %1436, %v95
  %v1438 = vpop.permute.xlu0 %1437
  %1440 = vset.pattern.permute.xlu0 4
  %1441 = vperm.xlu0 %1440, %v96
  %v1442 = vpop.permute.xlu0 %1441
  %1444 = vset.pattern.permute.xlu0 4
  %1445 = vperm.xlu0 %1444, %v97
  %v1446 = vpop.permute.xlu0 %1445
  %1448 = vset.pattern.permute.xlu0 4
  %1449 = vperm.xlu0 %1448, %v98
  %v1450 = vpop.permute.xlu0 %1449
  %1452 = vset.pattern.permute.xlu0 4
  %1453 = vperm.xlu0 %1452, %v99
  %v1454 = vpop.permute.xlu0 %1453
  %1456 = vset.pattern.permute.xlu0 4
  %1457 = vperm.xlu0 %1456, %v100
  %v1458 = vpop.permute.xlu0 %1457
  %1460 = vset.pattern.permute.xlu0 4
  %1461 = vperm.xlu0 %1460, %v101
  %v1462 = vpop.permute.xlu0 %1461
  %1464 = vset.pattern.permute.xlu0 4
  %1465 = vperm.xlu0 %1464, %v102
  %v1466 = vpop.permute.xlu0 %1465
  %1468 = vset.pattern.permute.xlu0 4
  %1469 = vperm.xlu0 %1468, %v103
  %v1470 = vpop.permute.xlu0 %1469
  %1472 = vset.pattern.permute.xlu0 4
  %1473 = vperm.xlu0 %1472, %v104
  %v1474 = vpop.permute.xlu0 %1473
  %1476 = vset.pattern.permute.xlu0 4
  %1477 = vperm.xlu0 %1476, %v105
  %v1478 = vpop.permute.xlu0 %1477
  %1480 = vset.pattern.permute.xlu0 4
  %1481 = vperm.xlu0 %1480, %v106
  %v1482 = vpop.permute.xlu0 %1481
  %1484 = vset.pattern.permute.xlu0 4
  %1485 = vperm.xlu0 %1484, %v107
  %v1486 = vpop.permute.xlu0 %1485
  %1488 = vset.pattern.permute.xlu0 4
  %1489 = vperm.xlu0 %1488, %v108
  %v1490 = vpop.permute.xlu0 %1489
  %1492 = vset.pattern.permute.xlu0 4
  %1493 = vperm.xlu0 %1492, %v109
  %v1494 = vpop.permute.xlu0 %1493
  %1496 = vset.pattern.permute.xlu0 4
  %1497 = vperm.xlu0 %1496, %v110
  %v1498 = vpop.permute.xlu0 %1497
  %1500 = vset.pattern.permute.xlu0 4
  %1501 = vperm.xlu0 %1500, %v111
  %v1502 = vpop.permute.xlu0 %1501
  %v1504 = vlaneseq
  %v1505 = vshrl.u32 %v1504, 7
  %v1506 = vsub.s32 4, %v1505
  %v1507 = vrot.slane %v114, %v1506
  %v1508 = vmul.f32 %v1310, %v1507
  %v1509 = vmul.f32 %v1314, %v1507
  %v1510 = vmul.f32 %v1318, %v1507
  %v1511 = vmul.f32 %v1322, %v1507
  %v1512 = vmul.f32 %v1326, %v1507
  %v1513 = vmul.f32 %v1330, %v1507
  %v1514 = vmul.f32 %v1334, %v1507
  %v1515 = vmul.f32 %v1338, %v1507
  %v1516 = vmul.f32 %v1342, %v1507
  %v1517 = vmul.f32 %v1346, %v1507
  %v1518 = vmul.f32 %v1350, %v1507
  %v1519 = vmul.f32 %v1354, %v1507
  %v1520 = vmul.f32 %v1358, %v1507
  %v1521 = vmul.f32 %v1362, %v1507
  %v1522 = vmul.f32 %v1366, %v1507
  %v1523 = vmul.f32 %v1370, %v1507
  %v1524 = vmul.f32 %v1374, %v1507
  %v1525 = vmul.f32 %v1378, %v1507
  %v1526 = vmul.f32 %v1382, %v1507
  %v1527 = vmul.f32 %v1386, %v1507
  %v1528 = vmul.f32 %v1390, %v1507
  %v1529 = vmul.f32 %v1394, %v1507
  %v1530 = vmul.f32 %v1398, %v1507
  %v1531 = vmul.f32 %v1402, %v1507
  %v1532 = vmul.f32 %v1406, %v1507
  %v1533 = vmul.f32 %v1410, %v1507
  %v1534 = vmul.f32 %v1414, %v1507
  %v1535 = vmul.f32 %v1418, %v1507
  %v1536 = vmul.f32 %v1422, %v1507
  %v1537 = vmul.f32 %v1426, %v1507
  %v1538 = vmul.f32 %v1430, %v1507
  %v1539 = vmul.f32 %v1434, %v1507
  %v1540 = vmul.f32 %v1438, %v1507
  %v1541 = vmul.f32 %v1442, %v1507
  %v1542 = vmul.f32 %v1446, %v1507
  %v1543 = vmul.f32 %v1450, %v1507
  %v1544 = vmul.f32 %v1454, %v1507
  %v1545 = vmul.f32 %v1458, %v1507
  %v1546 = vmul.f32 %v1462, %v1507
  %v1547 = vmul.f32 %v1466, %v1507
  %v1548 = vmul.f32 %v1470, %v1507
  %v1549 = vmul.f32 %v1474, %v1507
  %v1550 = vmul.f32 %v1478, %v1507
  %v1551 = vmul.f32 %v1482, %v1507
  %v1552 = vmul.f32 %v1486, %v1507
  %v1553 = vmul.f32 %v1490, %v1507
  %v1554 = vmul.f32 %v1494, %v1507
  %v1555 = vmul.f32 %v1498, %v1507
  %v1556 = vmul.f32 %v1502, %v1507
  %v1557 = vadd.f32 %v1259, %v1508
  %v1558 = vadd.f32 %v1260, %v1509
  %v1559 = vadd.f32 %v1261, %v1510
  %v1560 = vadd.f32 %v1262, %v1511
  %v1561 = vadd.f32 %v1263, %v1512
  %v1562 = vadd.f32 %v1264, %v1513
  %v1563 = vadd.f32 %v1265, %v1514
  %v1564 = vadd.f32 %v1266, %v1515
  %v1565 = vadd.f32 %v1267, %v1516
  %v1566 = vadd.f32 %v1268, %v1517
  %v1567 = vadd.f32 %v1269, %v1518
  %v1568 = vadd.f32 %v1270, %v1519
  %v1569 = vadd.f32 %v1271, %v1520
  %v1570 = vadd.f32 %v1272, %v1521
  %v1571 = vadd.f32 %v1273, %v1522
  %v1572 = vadd.f32 %v1274, %v1523
  %v1573 = vadd.f32 %v1275, %v1524
  %v1574 = vadd.f32 %v1276, %v1525
  %v1575 = vadd.f32 %v1277, %v1526
  %v1576 = vadd.f32 %v1278, %v1527
  %v1577 = vadd.f32 %v1279, %v1528
  %v1578 = vadd.f32 %v1280, %v1529
  %v1579 = vadd.f32 %v1281, %v1530
  %v1580 = vadd.f32 %v1282, %v1531
  %v1581 = vadd.f32 %v1283, %v1532
  %v1582 = vadd.f32 %v1284, %v1533
  %v1583 = vadd.f32 %v1285, %v1534
  %v1584 = vadd.f32 %v1286, %v1535
  %v1585 = vadd.f32 %v1287, %v1536
  %v1586 = vadd.f32 %v1288, %v1537
  %v1587 = vadd.f32 %v1289, %v1538
  %v1588 = vadd.f32 %v1290, %v1539
  %v1589 = vadd.f32 %v1291, %v1540
  %v1590 = vadd.f32 %v1292, %v1541
  %v1591 = vadd.f32 %v1293, %v1542
  %v1592 = vadd.f32 %v1294, %v1543
  %v1593 = vadd.f32 %v1295, %v1544
  %v1594 = vadd.f32 %v1296, %v1545
  %v1595 = vadd.f32 %v1297, %v1546
  %v1596 = vadd.f32 %v1298, %v1547
  %v1597 = vadd.f32 %v1299, %v1548
  %v1598 = vadd.f32 %v1300, %v1549
  %v1599 = vadd.f32 %v1301, %v1550
  %v1600 = vadd.f32 %v1302, %v1551
  %v1601 = vadd.f32 %v1303, %v1552
  %v1602 = vadd.f32 %v1304, %v1553
  %v1603 = vadd.f32 %v1305, %v1554
  %v1604 = vadd.f32 %v1306, %v1555
  %v1605 = vadd.f32 %v1307, %v1556
  %1606 = vset.pattern.permute.xlu0 5
  %1607 = vperm.xlu0 %1606, %v63
  %v1608 = vpop.permute.xlu0 %1607
  %1610 = vset.pattern.permute.xlu0 5
  %1611 = vperm.xlu0 %1610, %v64
  %v1612 = vpop.permute.xlu0 %1611
  %1614 = vset.pattern.permute.xlu0 5
  %1615 = vperm.xlu0 %1614, %v65
  %v1616 = vpop.permute.xlu0 %1615
  %1618 = vset.pattern.permute.xlu0 5
  %1619 = vperm.xlu0 %1618, %v66
  %v1620 = vpop.permute.xlu0 %1619
  %1622 = vset.pattern.permute.xlu0 5
  %1623 = vperm.xlu0 %1622, %v67
  %v1624 = vpop.permute.xlu0 %1623
  %1626 = vset.pattern.permute.xlu0 5
  %1627 = vperm.xlu0 %1626, %v68
  %v1628 = vpop.permute.xlu0 %1627
  %1630 = vset.pattern.permute.xlu0 5
  %1631 = vperm.xlu0 %1630, %v69
  %v1632 = vpop.permute.xlu0 %1631
  %1634 = vset.pattern.permute.xlu0 5
  %1635 = vperm.xlu0 %1634, %v70
  %v1636 = vpop.permute.xlu0 %1635
  %1638 = vset.pattern.permute.xlu0 5
  %1639 = vperm.xlu0 %1638, %v71
  %v1640 = vpop.permute.xlu0 %1639
  %1642 = vset.pattern.permute.xlu0 5
  %1643 = vperm.xlu0 %1642, %v72
  %v1644 = vpop.permute.xlu0 %1643
  %1646 = vset.pattern.permute.xlu0 5
  %1647 = vperm.xlu0 %1646, %v73
  %v1648 = vpop.permute.xlu0 %1647
  %1650 = vset.pattern.permute.xlu0 5
  %1651 = vperm.xlu0 %1650, %v74
  %v1652 = vpop.permute.xlu0 %1651
  %1654 = vset.pattern.permute.xlu0 5
  %1655 = vperm.xlu0 %1654, %v75
  %v1656 = vpop.permute.xlu0 %1655
  %1658 = vset.pattern.permute.xlu0 5
  %1659 = vperm.xlu0 %1658, %v76
  %v1660 = vpop.permute.xlu0 %1659
  %1662 = vset.pattern.permute.xlu0 5
  %1663 = vperm.xlu0 %1662, %v77
  %v1664 = vpop.permute.xlu0 %1663
  %1666 = vset.pattern.permute.xlu0 5
  %1667 = vperm.xlu0 %1666, %v78
  %v1668 = vpop.permute.xlu0 %1667
  %1670 = vset.pattern.permute.xlu0 5
  %1671 = vperm.xlu0 %1670, %v79
  %v1672 = vpop.permute.xlu0 %1671
  %1674 = vset.pattern.permute.xlu0 5
  %1675 = vperm.xlu0 %1674, %v80
  %v1676 = vpop.permute.xlu0 %1675
  %1678 = vset.pattern.permute.xlu0 5
  %1679 = vperm.xlu0 %1678, %v81
  %v1680 = vpop.permute.xlu0 %1679
  %1682 = vset.pattern.permute.xlu0 5
  %1683 = vperm.xlu0 %1682, %v82
  %v1684 = vpop.permute.xlu0 %1683
  %1686 = vset.pattern.permute.xlu0 5
  %1687 = vperm.xlu0 %1686, %v83
  %v1688 = vpop.permute.xlu0 %1687
  %1690 = vset.pattern.permute.xlu0 5
  %1691 = vperm.xlu0 %1690, %v84
  %v1692 = vpop.permute.xlu0 %1691
  %1694 = vset.pattern.permute.xlu0 5
  %1695 = vperm.xlu0 %1694, %v85
  %v1696 = vpop.permute.xlu0 %1695
  %1698 = vset.pattern.permute.xlu0 5
  %1699 = vperm.xlu0 %1698, %v86
  %v1700 = vpop.permute.xlu0 %1699
  %1702 = vset.pattern.permute.xlu0 5
  %1703 = vperm.xlu0 %1702, %v87
  %v1704 = vpop.permute.xlu0 %1703
  %1706 = vset.pattern.permute.xlu0 5
  %1707 = vperm.xlu0 %1706, %v88
  %v1708 = vpop.permute.xlu0 %1707
  %1710 = vset.pattern.permute.xlu0 5
  %1711 = vperm.xlu0 %1710, %v89
  %v1712 = vpop.permute.xlu0 %1711
  %1714 = vset.pattern.permute.xlu0 5
  %1715 = vperm.xlu0 %1714, %v90
  %v1716 = vpop.permute.xlu0 %1715
  %1718 = vset.pattern.permute.xlu0 5
  %1719 = vperm.xlu0 %1718, %v91
  %v1720 = vpop.permute.xlu0 %1719
  %1722 = vset.pattern.permute.xlu0 5
  %1723 = vperm.xlu0 %1722, %v92
  %v1724 = vpop.permute.xlu0 %1723
  %1726 = vset.pattern.permute.xlu0 5
  %1727 = vperm.xlu0 %1726, %v93
  %v1728 = vpop.permute.xlu0 %1727
  %1730 = vset.pattern.permute.xlu0 5
  %1731 = vperm.xlu0 %1730, %v94
  %v1732 = vpop.permute.xlu0 %1731
  %1734 = vset.pattern.permute.xlu0 5
  %1735 = vperm.xlu0 %1734, %v95
  %v1736 = vpop.permute.xlu0 %1735
  %1738 = vset.pattern.permute.xlu0 5
  %1739 = vperm.xlu0 %1738, %v96
  %v1740 = vpop.permute.xlu0 %1739
  %1742 = vset.pattern.permute.xlu0 5
  %1743 = vperm.xlu0 %1742, %v97
  %v1744 = vpop.permute.xlu0 %1743
  %1746 = vset.pattern.permute.xlu0 5
  %1747 = vperm.xlu0 %1746, %v98
  %v1748 = vpop.permute.xlu0 %1747
  %1750 = vset.pattern.permute.xlu0 5
  %1751 = vperm.xlu0 %1750, %v99
  %v1752 = vpop.permute.xlu0 %1751
  %1754 = vset.pattern.permute.xlu0 5
  %1755 = vperm.xlu0 %1754, %v100
  %v1756 = vpop.permute.xlu0 %1755
  %1758 = vset.pattern.permute.xlu0 5
  %1759 = vperm.xlu0 %1758, %v101
  %v1760 = vpop.permute.xlu0 %1759
  %1762 = vset.pattern.permute.xlu0 5
  %1763 = vperm.xlu0 %1762, %v102
  %v1764 = vpop.permute.xlu0 %1763
  %1766 = vset.pattern.permute.xlu0 5
  %1767 = vperm.xlu0 %1766, %v103
  %v1768 = vpop.permute.xlu0 %1767
  %1770 = vset.pattern.permute.xlu0 5
  %1771 = vperm.xlu0 %1770, %v104
  %v1772 = vpop.permute.xlu0 %1771
  %1774 = vset.pattern.permute.xlu0 5
  %1775 = vperm.xlu0 %1774, %v105
  %v1776 = vpop.permute.xlu0 %1775
  %1778 = vset.pattern.permute.xlu0 5
  %1779 = vperm.xlu0 %1778, %v106
  %v1780 = vpop.permute.xlu0 %1779
  %1782 = vset.pattern.permute.xlu0 5
  %1783 = vperm.xlu0 %1782, %v107
  %v1784 = vpop.permute.xlu0 %1783
  %1786 = vset.pattern.permute.xlu0 5
  %1787 = vperm.xlu0 %1786, %v108
  %v1788 = vpop.permute.xlu0 %1787
  %1790 = vset.pattern.permute.xlu0 5
  %1791 = vperm.xlu0 %1790, %v109
  %v1792 = vpop.permute.xlu0 %1791
  %1794 = vset.pattern.permute.xlu0 5
  %1795 = vperm.xlu0 %1794, %v110
  %v1796 = vpop.permute.xlu0 %1795
  %1798 = vset.pattern.permute.xlu0 5
  %1799 = vperm.xlu0 %1798, %v111
  %v1800 = vpop.permute.xlu0 %1799
  %v1802 = vlaneseq
  %v1803 = vshrl.u32 %v1802, 7
  %v1804 = vsub.s32 5, %v1803
  %v1805 = vrot.slane %v114, %v1804
  %v1806 = vmul.f32 %v1608, %v1805
  %v1807 = vmul.f32 %v1612, %v1805
  %v1808 = vmul.f32 %v1616, %v1805
  %v1809 = vmul.f32 %v1620, %v1805
  %v1810 = vmul.f32 %v1624, %v1805
  %v1811 = vmul.f32 %v1628, %v1805
  %v1812 = vmul.f32 %v1632, %v1805
  %v1813 = vmul.f32 %v1636, %v1805
  %v1814 = vmul.f32 %v1640, %v1805
  %v1815 = vmul.f32 %v1644, %v1805
  %v1816 = vmul.f32 %v1648, %v1805
  %v1817 = vmul.f32 %v1652, %v1805
  %v1818 = vmul.f32 %v1656, %v1805
  %v1819 = vmul.f32 %v1660, %v1805
  %v1820 = vmul.f32 %v1664, %v1805
  %v1821 = vmul.f32 %v1668, %v1805
  %v1822 = vmul.f32 %v1672, %v1805
  %v1823 = vmul.f32 %v1676, %v1805
  %v1824 = vmul.f32 %v1680, %v1805
  %v1825 = vmul.f32 %v1684, %v1805
  %v1826 = vmul.f32 %v1688, %v1805
  %v1827 = vmul.f32 %v1692, %v1805
  %v1828 = vmul.f32 %v1696, %v1805
  %v1829 = vmul.f32 %v1700, %v1805
  %v1830 = vmul.f32 %v1704, %v1805
  %v1831 = vmul.f32 %v1708, %v1805
  %v1832 = vmul.f32 %v1712, %v1805
  %v1833 = vmul.f32 %v1716, %v1805
  %v1834 = vmul.f32 %v1720, %v1805
  %v1835 = vmul.f32 %v1724, %v1805
  %v1836 = vmul.f32 %v1728, %v1805
  %v1837 = vmul.f32 %v1732, %v1805
  %v1838 = vmul.f32 %v1736, %v1805
  %v1839 = vmul.f32 %v1740, %v1805
  %v1840 = vmul.f32 %v1744, %v1805
  %v1841 = vmul.f32 %v1748, %v1805
  %v1842 = vmul.f32 %v1752, %v1805
  %v1843 = vmul.f32 %v1756, %v1805
  %v1844 = vmul.f32 %v1760, %v1805
  %v1845 = vmul.f32 %v1764, %v1805
  %v1846 = vmul.f32 %v1768, %v1805
  %v1847 = vmul.f32 %v1772, %v1805
  %v1848 = vmul.f32 %v1776, %v1805
  %v1849 = vmul.f32 %v1780, %v1805
  %v1850 = vmul.f32 %v1784, %v1805
  %v1851 = vmul.f32 %v1788, %v1805
  %v1852 = vmul.f32 %v1792, %v1805
  %v1853 = vmul.f32 %v1796, %v1805
  %v1854 = vmul.f32 %v1800, %v1805
  %v1855 = vadd.f32 %v1557, %v1806
  %v1856 = vadd.f32 %v1558, %v1807
  %v1857 = vadd.f32 %v1559, %v1808
  %v1858 = vadd.f32 %v1560, %v1809
  %v1859 = vadd.f32 %v1561, %v1810
  %v1860 = vadd.f32 %v1562, %v1811
  %v1861 = vadd.f32 %v1563, %v1812
  %v1862 = vadd.f32 %v1564, %v1813
  %v1863 = vadd.f32 %v1565, %v1814
  %v1864 = vadd.f32 %v1566, %v1815
  %v1865 = vadd.f32 %v1567, %v1816
  %v1866 = vadd.f32 %v1568, %v1817
  %v1867 = vadd.f32 %v1569, %v1818
  %v1868 = vadd.f32 %v1570, %v1819
  %v1869 = vadd.f32 %v1571, %v1820
  %v1870 = vadd.f32 %v1572, %v1821
  %v1871 = vadd.f32 %v1573, %v1822
  %v1872 = vadd.f32 %v1574, %v1823
  %v1873 = vadd.f32 %v1575, %v1824
  %v1874 = vadd.f32 %v1576, %v1825
  %v1875 = vadd.f32 %v1577, %v1826
  %v1876 = vadd.f32 %v1578, %v1827
  %v1877 = vadd.f32 %v1579, %v1828
  %v1878 = vadd.f32 %v1580, %v1829
  %v1879 = vadd.f32 %v1581, %v1830
  %v1880 = vadd.f32 %v1582, %v1831
  %v1881 = vadd.f32 %v1583, %v1832
  %v1882 = vadd.f32 %v1584, %v1833
  %v1883 = vadd.f32 %v1585, %v1834
  %v1884 = vadd.f32 %v1586, %v1835
  %v1885 = vadd.f32 %v1587, %v1836
  %v1886 = vadd.f32 %v1588, %v1837
  %v1887 = vadd.f32 %v1589, %v1838
  %v1888 = vadd.f32 %v1590, %v1839
  %v1889 = vadd.f32 %v1591, %v1840
  %v1890 = vadd.f32 %v1592, %v1841
  %v1891 = vadd.f32 %v1593, %v1842
  %v1892 = vadd.f32 %v1594, %v1843
  %v1893 = vadd.f32 %v1595, %v1844
  %v1894 = vadd.f32 %v1596, %v1845
  %v1895 = vadd.f32 %v1597, %v1846
  %v1896 = vadd.f32 %v1598, %v1847
  %v1897 = vadd.f32 %v1599, %v1848
  %v1898 = vadd.f32 %v1600, %v1849
  %v1899 = vadd.f32 %v1601, %v1850
  %v1900 = vadd.f32 %v1602, %v1851
  %v1901 = vadd.f32 %v1603, %v1852
  %v1902 = vadd.f32 %v1604, %v1853
  %v1903 = vadd.f32 %v1605, %v1854
  %1904 = vset.pattern.permute.xlu0 6
  %1905 = vperm.xlu0 %1904, %v63
  %v1906 = vpop.permute.xlu0 %1905
  %1908 = vset.pattern.permute.xlu0 6
  %1909 = vperm.xlu0 %1908, %v64
  %v1910 = vpop.permute.xlu0 %1909
  %1912 = vset.pattern.permute.xlu0 6
  %1913 = vperm.xlu0 %1912, %v65
  %v1914 = vpop.permute.xlu0 %1913
  %1916 = vset.pattern.permute.xlu0 6
  %1917 = vperm.xlu0 %1916, %v66
  %v1918 = vpop.permute.xlu0 %1917
  %1920 = vset.pattern.permute.xlu0 6
  %1921 = vperm.xlu0 %1920, %v67
  %v1922 = vpop.permute.xlu0 %1921
  %1924 = vset.pattern.permute.xlu0 6
  %1925 = vperm.xlu0 %1924, %v68
  %v1926 = vpop.permute.xlu0 %1925
  %1928 = vset.pattern.permute.xlu0 6
  %1929 = vperm.xlu0 %1928, %v69
  %v1930 = vpop.permute.xlu0 %1929
  %1932 = vset.pattern.permute.xlu0 6
  %1933 = vperm.xlu0 %1932, %v70
  %v1934 = vpop.permute.xlu0 %1933
  %1936 = vset.pattern.permute.xlu0 6
  %1937 = vperm.xlu0 %1936, %v71
  %v1938 = vpop.permute.xlu0 %1937
  %1940 = vset.pattern.permute.xlu0 6
  %1941 = vperm.xlu0 %1940, %v72
  %v1942 = vpop.permute.xlu0 %1941
  %1944 = vset.pattern.permute.xlu0 6
  %1945 = vperm.xlu0 %1944, %v73
  %v1946 = vpop.permute.xlu0 %1945
  %1948 = vset.pattern.permute.xlu0 6
  %1949 = vperm.xlu0 %1948, %v74
  %v1950 = vpop.permute.xlu0 %1949
  %1952 = vset.pattern.permute.xlu0 6
  %1953 = vperm.xlu0 %1952, %v75
  %v1954 = vpop.permute.xlu0 %1953
  %1956 = vset.pattern.permute.xlu0 6
  %1957 = vperm.xlu0 %1956, %v76
  %v1958 = vpop.permute.xlu0 %1957
  %1960 = vset.pattern.permute.xlu0 6
  %1961 = vperm.xlu0 %1960, %v77
  %v1962 = vpop.permute.xlu0 %1961
  %1964 = vset.pattern.permute.xlu0 6
  %1965 = vperm.xlu0 %1964, %v78
  %v1966 = vpop.permute.xlu0 %1965
  %1968 = vset.pattern.permute.xlu0 6
  %1969 = vperm.xlu0 %1968, %v79
  %v1970 = vpop.permute.xlu0 %1969
  %1972 = vset.pattern.permute.xlu0 6
  %1973 = vperm.xlu0 %1972, %v80
  %v1974 = vpop.permute.xlu0 %1973
  %1976 = vset.pattern.permute.xlu0 6
  %1977 = vperm.xlu0 %1976, %v81
  %v1978 = vpop.permute.xlu0 %1977
  %1980 = vset.pattern.permute.xlu0 6
  %1981 = vperm.xlu0 %1980, %v82
  %v1982 = vpop.permute.xlu0 %1981
  %1984 = vset.pattern.permute.xlu0 6
  %1985 = vperm.xlu0 %1984, %v83
  %v1986 = vpop.permute.xlu0 %1985
  %1988 = vset.pattern.permute.xlu0 6
  %1989 = vperm.xlu0 %1988, %v84
  %v1990 = vpop.permute.xlu0 %1989
  %1992 = vset.pattern.permute.xlu0 6
  %1993 = vperm.xlu0 %1992, %v85
  %v1994 = vpop.permute.xlu0 %1993
  %1996 = vset.pattern.permute.xlu0 6
  %1997 = vperm.xlu0 %1996, %v86
  %v1998 = vpop.permute.xlu0 %1997
  %2000 = vset.pattern.permute.xlu0 6
  %2001 = vperm.xlu0 %2000, %v87
  %v2002 = vpop.permute.xlu0 %2001
  %2004 = vset.pattern.permute.xlu0 6
  %2005 = vperm.xlu0 %2004, %v88
  %v2006 = vpop.permute.xlu0 %2005
  %2008 = vset.pattern.permute.xlu0 6
  %2009 = vperm.xlu0 %2008, %v89
  %v2010 = vpop.permute.xlu0 %2009
  %2012 = vset.pattern.permute.xlu0 6
  %2013 = vperm.xlu0 %2012, %v90
  %v2014 = vpop.permute.xlu0 %2013
  %2016 = vset.pattern.permute.xlu0 6
  %2017 = vperm.xlu0 %2016, %v91
  %v2018 = vpop.permute.xlu0 %2017
  %2020 = vset.pattern.permute.xlu0 6
  %2021 = vperm.xlu0 %2020, %v92
  %v2022 = vpop.permute.xlu0 %2021
  %2024 = vset.pattern.permute.xlu0 6
  %2025 = vperm.xlu0 %2024, %v93
  %v2026 = vpop.permute.xlu0 %2025
  %2028 = vset.pattern.permute.xlu0 6
  %2029 = vperm.xlu0 %2028, %v94
  %v2030 = vpop.permute.xlu0 %2029
  %2032 = vset.pattern.permute.xlu0 6
  %2033 = vperm.xlu0 %2032, %v95
  %v2034 = vpop.permute.xlu0 %2033
  %2036 = vset.pattern.permute.xlu0 6
  %2037 = vperm.xlu0 %2036, %v96
  %v2038 = vpop.permute.xlu0 %2037
  %2040 = vset.pattern.permute.xlu0 6
  %2041 = vperm.xlu0 %2040, %v97
  %v2042 = vpop.permute.xlu0 %2041
  %2044 = vset.pattern.permute.xlu0 6
  %2045 = vperm.xlu0 %2044, %v98
  %v2046 = vpop.permute.xlu0 %2045
  %2048 = vset.pattern.permute.xlu0 6
  %2049 = vperm.xlu0 %2048, %v99
  %v2050 = vpop.permute.xlu0 %2049
  %2052 = vset.pattern.permute.xlu0 6
  %2053 = vperm.xlu0 %2052, %v100
  %v2054 = vpop.permute.xlu0 %2053
  %2056 = vset.pattern.permute.xlu0 6
  %2057 = vperm.xlu0 %2056, %v101
  %v2058 = vpop.permute.xlu0 %2057
  %2060 = vset.pattern.permute.xlu0 6
  %2061 = vperm.xlu0 %2060, %v102
  %v2062 = vpop.permute.xlu0 %2061
  %2064 = vset.pattern.permute.xlu0 6
  %2065 = vperm.xlu0 %2064, %v103
  %v2066 = vpop.permute.xlu0 %2065
  %2068 = vset.pattern.permute.xlu0 6
  %2069 = vperm.xlu0 %2068, %v104
  %v2070 = vpop.permute.xlu0 %2069
  %2072 = vset.pattern.permute.xlu0 6
  %2073 = vperm.xlu0 %2072, %v105
  %v2074 = vpop.permute.xlu0 %2073
  %2076 = vset.pattern.permute.xlu0 6
  %2077 = vperm.xlu0 %2076, %v106
  %v2078 = vpop.permute.xlu0 %2077
  %2080 = vset.pattern.permute.xlu0 6
  %2081 = vperm.xlu0 %2080, %v107
  %v2082 = vpop.permute.xlu0 %2081
  %2084 = vset.pattern.permute.xlu0 6
  %2085 = vperm.xlu0 %2084, %v108
  %v2086 = vpop.permute.xlu0 %2085
  %2088 = vset.pattern.permute.xlu0 6
  %2089 = vperm.xlu0 %2088, %v109
  %v2090 = vpop.permute.xlu0 %2089
  %2092 = vset.pattern.permute.xlu0 6
  %2093 = vperm.xlu0 %2092, %v110
  %v2094 = vpop.permute.xlu0 %2093
  %2096 = vset.pattern.permute.xlu0 6
  %2097 = vperm.xlu0 %2096, %v111
  %v2098 = vpop.permute.xlu0 %2097
  %v2100 = vlaneseq
  %v2101 = vshrl.u32 %v2100, 7
  %v2102 = vsub.s32 6, %v2101
  %v2103 = vrot.slane %v114, %v2102
  %v2104 = vmul.f32 %v1906, %v2103
  %v2105 = vmul.f32 %v1910, %v2103
  %v2106 = vmul.f32 %v1914, %v2103
  %v2107 = vmul.f32 %v1918, %v2103
  %v2108 = vmul.f32 %v1922, %v2103
  %v2109 = vmul.f32 %v1926, %v2103
  %v2110 = vmul.f32 %v1930, %v2103
  %v2111 = vmul.f32 %v1934, %v2103
  %v2112 = vmul.f32 %v1938, %v2103
  %v2113 = vmul.f32 %v1942, %v2103
  %v2114 = vmul.f32 %v1946, %v2103
  %v2115 = vmul.f32 %v1950, %v2103
  %v2116 = vmul.f32 %v1954, %v2103
  %v2117 = vmul.f32 %v1958, %v2103
  %v2118 = vmul.f32 %v1962, %v2103
  %v2119 = vmul.f32 %v1966, %v2103
  %v2120 = vmul.f32 %v1970, %v2103
  %v2121 = vmul.f32 %v1974, %v2103
  %v2122 = vmul.f32 %v1978, %v2103
  %v2123 = vmul.f32 %v1982, %v2103
  %v2124 = vmul.f32 %v1986, %v2103
  %v2125 = vmul.f32 %v1990, %v2103
  %v2126 = vmul.f32 %v1994, %v2103
  %v2127 = vmul.f32 %v1998, %v2103
  %v2128 = vmul.f32 %v2002, %v2103
  %v2129 = vmul.f32 %v2006, %v2103
  %v2130 = vmul.f32 %v2010, %v2103
  %v2131 = vmul.f32 %v2014, %v2103
  %v2132 = vmul.f32 %v2018, %v2103
  %v2133 = vmul.f32 %v2022, %v2103
  %v2134 = vmul.f32 %v2026, %v2103
  %v2135 = vmul.f32 %v2030, %v2103
  %v2136 = vmul.f32 %v2034, %v2103
  %v2137 = vmul.f32 %v2038, %v2103
  %v2138 = vmul.f32 %v2042, %v2103
  %v2139 = vmul.f32 %v2046, %v2103
  %v2140 = vmul.f32 %v2050, %v2103
  %v2141 = vmul.f32 %v2054, %v2103
  %v2142 = vmul.f32 %v2058, %v2103
  %v2143 = vmul.f32 %v2062, %v2103
  %v2144 = vmul.f32 %v2066, %v2103
  %v2145 = vmul.f32 %v2070, %v2103
  %v2146 = vmul.f32 %v2074, %v2103
  %v2147 = vmul.f32 %v2078, %v2103
  %v2148 = vmul.f32 %v2082, %v2103
  %v2149 = vmul.f32 %v2086, %v2103
  %v2150 = vmul.f32 %v2090, %v2103
  %v2151 = vmul.f32 %v2094, %v2103
  %v2152 = vmul.f32 %v2098, %v2103
  %v2153 = vadd.f32 %v1855, %v2104
  %v2154 = vadd.f32 %v1856, %v2105
  %v2155 = vadd.f32 %v1857, %v2106
  %v2156 = vadd.f32 %v1858, %v2107
  %v2157 = vadd.f32 %v1859, %v2108
  %v2158 = vadd.f32 %v1860, %v2109
  %v2159 = vadd.f32 %v1861, %v2110
  %v2160 = vadd.f32 %v1862, %v2111
  %v2161 = vadd.f32 %v1863, %v2112
  %v2162 = vadd.f32 %v1864, %v2113
  %v2163 = vadd.f32 %v1865, %v2114
  %v2164 = vadd.f32 %v1866, %v2115
  %v2165 = vadd.f32 %v1867, %v2116
  %v2166 = vadd.f32 %v1868, %v2117
  %v2167 = vadd.f32 %v1869, %v2118
  %v2168 = vadd.f32 %v1870, %v2119
  %v2169 = vadd.f32 %v1871, %v2120
  %v2170 = vadd.f32 %v1872, %v2121
  %v2171 = vadd.f32 %v1873, %v2122
  %v2172 = vadd.f32 %v1874, %v2123
  %v2173 = vadd.f32 %v1875, %v2124
  %v2174 = vadd.f32 %v1876, %v2125
  %v2175 = vadd.f32 %v1877, %v2126
  %v2176 = vadd.f32 %v1878, %v2127
  %v2177 = vadd.f32 %v1879, %v2128
  %v2178 = vadd.f32 %v1880, %v2129
  %v2179 = vadd.f32 %v1881, %v2130
  %v2180 = vadd.f32 %v1882, %v2131
  %v2181 = vadd.f32 %v1883, %v2132
  %v2182 = vadd.f32 %v1884, %v2133
  %v2183 = vadd.f32 %v1885, %v2134
  %v2184 = vadd.f32 %v1886, %v2135
  %v2185 = vadd.f32 %v1887, %v2136
  %v2186 = vadd.f32 %v1888, %v2137
  %v2187 = vadd.f32 %v1889, %v2138
  %v2188 = vadd.f32 %v1890, %v2139
  %v2189 = vadd.f32 %v1891, %v2140
  %v2190 = vadd.f32 %v1892, %v2141
  %v2191 = vadd.f32 %v1893, %v2142
  %v2192 = vadd.f32 %v1894, %v2143
  %v2193 = vadd.f32 %v1895, %v2144
  %v2194 = vadd.f32 %v1896, %v2145
  %v2195 = vadd.f32 %v1897, %v2146
  %v2196 = vadd.f32 %v1898, %v2147
  %v2197 = vadd.f32 %v1899, %v2148
  %v2198 = vadd.f32 %v1900, %v2149
  %v2199 = vadd.f32 %v1901, %v2150
  %v2200 = vadd.f32 %v1902, %v2151
  %v2201 = vadd.f32 %v1903, %v2152
  %2202 = vset.pattern.permute.xlu0 7
  %2203 = vperm.xlu0 %2202, %v63
  %v2204 = vpop.permute.xlu0 %2203
  %2206 = vset.pattern.permute.xlu0 7
  %2207 = vperm.xlu0 %2206, %v64
  %v2208 = vpop.permute.xlu0 %2207
  %2210 = vset.pattern.permute.xlu0 7
  %2211 = vperm.xlu0 %2210, %v65
  %v2212 = vpop.permute.xlu0 %2211
  %2214 = vset.pattern.permute.xlu0 7
  %2215 = vperm.xlu0 %2214, %v66
  %v2216 = vpop.permute.xlu0 %2215
  %2218 = vset.pattern.permute.xlu0 7
  %2219 = vperm.xlu0 %2218, %v67
  %v2220 = vpop.permute.xlu0 %2219
  %2222 = vset.pattern.permute.xlu0 7
  %2223 = vperm.xlu0 %2222, %v68
  %v2224 = vpop.permute.xlu0 %2223
  %2226 = vset.pattern.permute.xlu0 7
  %2227 = vperm.xlu0 %2226, %v69
  %v2228 = vpop.permute.xlu0 %2227
  %2230 = vset.pattern.permute.xlu0 7
  %2231 = vperm.xlu0 %2230, %v70
  %v2232 = vpop.permute.xlu0 %2231
  %2234 = vset.pattern.permute.xlu0 7
  %2235 = vperm.xlu0 %2234, %v71
  %v2236 = vpop.permute.xlu0 %2235
  %2238 = vset.pattern.permute.xlu0 7
  %2239 = vperm.xlu0 %2238, %v72
  %v2240 = vpop.permute.xlu0 %2239
  %2242 = vset.pattern.permute.xlu0 7
  %2243 = vperm.xlu0 %2242, %v73
  %v2244 = vpop.permute.xlu0 %2243
  %2246 = vset.pattern.permute.xlu0 7
  %2247 = vperm.xlu0 %2246, %v74
  %v2248 = vpop.permute.xlu0 %2247
  %2250 = vset.pattern.permute.xlu0 7
  %2251 = vperm.xlu0 %2250, %v75
  %v2252 = vpop.permute.xlu0 %2251
  %2254 = vset.pattern.permute.xlu0 7
  %2255 = vperm.xlu0 %2254, %v76
  %v2256 = vpop.permute.xlu0 %2255
  %2258 = vset.pattern.permute.xlu0 7
  %2259 = vperm.xlu0 %2258, %v77
  %v2260 = vpop.permute.xlu0 %2259
  %2262 = vset.pattern.permute.xlu0 7
  %2263 = vperm.xlu0 %2262, %v78
  %v2264 = vpop.permute.xlu0 %2263
  %2266 = vset.pattern.permute.xlu0 7
  %2267 = vperm.xlu0 %2266, %v79
  %v2268 = vpop.permute.xlu0 %2267
  %2270 = vset.pattern.permute.xlu0 7
  %2271 = vperm.xlu0 %2270, %v80
  %v2272 = vpop.permute.xlu0 %2271
  %2274 = vset.pattern.permute.xlu0 7
  %2275 = vperm.xlu0 %2274, %v81
  %v2276 = vpop.permute.xlu0 %2275
  %2278 = vset.pattern.permute.xlu0 7
  %2279 = vperm.xlu0 %2278, %v82
  %v2280 = vpop.permute.xlu0 %2279
  %2282 = vset.pattern.permute.xlu0 7
  %2283 = vperm.xlu0 %2282, %v83
  %v2284 = vpop.permute.xlu0 %2283
  %2286 = vset.pattern.permute.xlu0 7
  %2287 = vperm.xlu0 %2286, %v84
  %v2288 = vpop.permute.xlu0 %2287
  %2290 = vset.pattern.permute.xlu0 7
  %2291 = vperm.xlu0 %2290, %v85
  %v2292 = vpop.permute.xlu0 %2291
  %2294 = vset.pattern.permute.xlu0 7
  %2295 = vperm.xlu0 %2294, %v86
  %v2296 = vpop.permute.xlu0 %2295
  %2298 = vset.pattern.permute.xlu0 7
  %2299 = vperm.xlu0 %2298, %v87
  %v2300 = vpop.permute.xlu0 %2299
  %2302 = vset.pattern.permute.xlu0 7
  %2303 = vperm.xlu0 %2302, %v88
  %v2304 = vpop.permute.xlu0 %2303
  %2306 = vset.pattern.permute.xlu0 7
  %2307 = vperm.xlu0 %2306, %v89
  %v2308 = vpop.permute.xlu0 %2307
  %2310 = vset.pattern.permute.xlu0 7
  %2311 = vperm.xlu0 %2310, %v90
  %v2312 = vpop.permute.xlu0 %2311
  %2314 = vset.pattern.permute.xlu0 7
  %2315 = vperm.xlu0 %2314, %v91
  %v2316 = vpop.permute.xlu0 %2315
  %2318 = vset.pattern.permute.xlu0 7
  %2319 = vperm.xlu0 %2318, %v92
  %v2320 = vpop.permute.xlu0 %2319
  %2322 = vset.pattern.permute.xlu0 7
  %2323 = vperm.xlu0 %2322, %v93
  %v2324 = vpop.permute.xlu0 %2323
  %2326 = vset.pattern.permute.xlu0 7
  %2327 = vperm.xlu0 %2326, %v94
  %v2328 = vpop.permute.xlu0 %2327
  %2330 = vset.pattern.permute.xlu0 7
  %2331 = vperm.xlu0 %2330, %v95
  %v2332 = vpop.permute.xlu0 %2331
  %2334 = vset.pattern.permute.xlu0 7
  %2335 = vperm.xlu0 %2334, %v96
  %v2336 = vpop.permute.xlu0 %2335
  %2338 = vset.pattern.permute.xlu0 7
  %2339 = vperm.xlu0 %2338, %v97
  %v2340 = vpop.permute.xlu0 %2339
  %2342 = vset.pattern.permute.xlu0 7
  %2343 = vperm.xlu0 %2342, %v98
  %v2344 = vpop.permute.xlu0 %2343
  %2346 = vset.pattern.permute.xlu0 7
  %2347 = vperm.xlu0 %2346, %v99
  %v2348 = vpop.permute.xlu0 %2347
  %2350 = vset.pattern.permute.xlu0 7
  %2351 = vperm.xlu0 %2350, %v100
  %v2352 = vpop.permute.xlu0 %2351
  %2354 = vset.pattern.permute.xlu0 7
  %2355 = vperm.xlu0 %2354, %v101
  %v2356 = vpop.permute.xlu0 %2355
  %2358 = vset.pattern.permute.xlu0 7
  %2359 = vperm.xlu0 %2358, %v102
  %v2360 = vpop.permute.xlu0 %2359
  %2362 = vset.pattern.permute.xlu0 7
  %2363 = vperm.xlu0 %2362, %v103
  %v2364 = vpop.permute.xlu0 %2363
  %2366 = vset.pattern.permute.xlu0 7
  %2367 = vperm.xlu0 %2366, %v104
  %v2368 = vpop.permute.xlu0 %2367
  %2370 = vset.pattern.permute.xlu0 7
  %2371 = vperm.xlu0 %2370, %v105
  %v2372 = vpop.permute.xlu0 %2371
  %2374 = vset.pattern.permute.xlu0 7
  %2375 = vperm.xlu0 %2374, %v106
  %v2376 = vpop.permute.xlu0 %2375
  %2378 = vset.pattern.permute.xlu0 7
  %2379 = vperm.xlu0 %2378, %v107
  %v2380 = vpop.permute.xlu0 %2379
  %2382 = vset.pattern.permute.xlu0 7
  %2383 = vperm.xlu0 %2382, %v108
  %v2384 = vpop.permute.xlu0 %2383
  %2386 = vset.pattern.permute.xlu0 7
  %2387 = vperm.xlu0 %2386, %v109
  %v2388 = vpop.permute.xlu0 %2387
  %2390 = vset.pattern.permute.xlu0 7
  %2391 = vperm.xlu0 %2390, %v110
  %v2392 = vpop.permute.xlu0 %2391
  %2394 = vset.pattern.permute.xlu0 7
  %2395 = vperm.xlu0 %2394, %v111
  %v2396 = vpop.permute.xlu0 %2395
  %v2398 = vlaneseq
  %v2399 = vshrl.u32 %v2398, 7
  %v2400 = vsub.s32 7, %v2399
  %v2401 = vrot.slane %v114, %v2400
  %v2402 = vmul.f32 %v2204, %v2401
  %v2403 = vmul.f32 %v2208, %v2401
  %v2404 = vmul.f32 %v2212, %v2401
  %v2405 = vmul.f32 %v2216, %v2401
  %v2406 = vmul.f32 %v2220, %v2401
  %v2407 = vmul.f32 %v2224, %v2401
  %v2408 = vmul.f32 %v2228, %v2401
  %v2409 = vmul.f32 %v2232, %v2401
  %v2410 = vmul.f32 %v2236, %v2401
  %v2411 = vmul.f32 %v2240, %v2401
  %v2412 = vmul.f32 %v2244, %v2401
  %v2413 = vmul.f32 %v2248, %v2401
  %v2414 = vmul.f32 %v2252, %v2401
  %v2415 = vmul.f32 %v2256, %v2401
  %v2416 = vmul.f32 %v2260, %v2401
  %v2417 = vmul.f32 %v2264, %v2401
  %v2418 = vmul.f32 %v2268, %v2401
  %v2419 = vmul.f32 %v2272, %v2401
  %v2420 = vmul.f32 %v2276, %v2401
  %v2421 = vmul.f32 %v2280, %v2401
  %v2422 = vmul.f32 %v2284, %v2401
  %v2423 = vmul.f32 %v2288, %v2401
  %v2424 = vmul.f32 %v2292, %v2401
  %v2425 = vmul.f32 %v2296, %v2401
  %v2426 = vmul.f32 %v2300, %v2401
  %v2427 = vmul.f32 %v2304, %v2401
  %v2428 = vmul.f32 %v2308, %v2401
  %v2429 = vmul.f32 %v2312, %v2401
  %v2430 = vmul.f32 %v2316, %v2401
  %v2431 = vmul.f32 %v2320, %v2401
  %v2432 = vmul.f32 %v2324, %v2401
  %v2433 = vmul.f32 %v2328, %v2401
  %v2434 = vmul.f32 %v2332, %v2401
  %v2435 = vmul.f32 %v2336, %v2401
  %v2436 = vmul.f32 %v2340, %v2401
  %v2437 = vmul.f32 %v2344, %v2401
  %v2438 = vmul.f32 %v2348, %v2401
  %v2439 = vmul.f32 %v2352, %v2401
  %v2440 = vmul.f32 %v2356, %v2401
  %v2441 = vmul.f32 %v2360, %v2401
  %v2442 = vmul.f32 %v2364, %v2401
  %v2443 = vmul.f32 %v2368, %v2401
  %v2444 = vmul.f32 %v2372, %v2401
  %v2445 = vmul.f32 %v2376, %v2401
  %v2446 = vmul.f32 %v2380, %v2401
  %v2447 = vmul.f32 %v2384, %v2401
  %v2448 = vmul.f32 %v2388, %v2401
  %v2449 = vmul.f32 %v2392, %v2401
  %v2450 = vmul.f32 %v2396, %v2401
  %v2451 = vadd.f32 %v2153, %v2402
  %v2452 = vadd.f32 %v2154, %v2403
  %v2453 = vadd.f32 %v2155, %v2404
  %v2454 = vadd.f32 %v2156, %v2405
  %v2455 = vadd.f32 %v2157, %v2406
  %v2456 = vadd.f32 %v2158, %v2407
  %v2457 = vadd.f32 %v2159, %v2408
  %v2458 = vadd.f32 %v2160, %v2409
  %v2459 = vadd.f32 %v2161, %v2410
  %v2460 = vadd.f32 %v2162, %v2411
  %v2461 = vadd.f32 %v2163, %v2412
  %v2462 = vadd.f32 %v2164, %v2413
  %v2463 = vadd.f32 %v2165, %v2414
  %v2464 = vadd.f32 %v2166, %v2415
  %v2465 = vadd.f32 %v2167, %v2416
  %v2466 = vadd.f32 %v2168, %v2417
  %v2467 = vadd.f32 %v2169, %v2418
  %v2468 = vadd.f32 %v2170, %v2419
  %v2469 = vadd.f32 %v2171, %v2420
  %v2470 = vadd.f32 %v2172, %v2421
  %v2471 = vadd.f32 %v2173, %v2422
  %v2472 = vadd.f32 %v2174, %v2423
  %v2473 = vadd.f32 %v2175, %v2424
  %v2474 = vadd.f32 %v2176, %v2425
  %v2475 = vadd.f32 %v2177, %v2426
  %v2476 = vadd.f32 %v2178, %v2427
  %v2477 = vadd.f32 %v2179, %v2428
  %v2478 = vadd.f32 %v2180, %v2429
  %v2479 = vadd.f32 %v2181, %v2430
  %v2480 = vadd.f32 %v2182, %v2431
  %v2481 = vadd.f32 %v2183, %v2432
  %v2482 = vadd.f32 %v2184, %v2433
  %v2483 = vadd.f32 %v2185, %v2434
  %v2484 = vadd.f32 %v2186, %v2435
  %v2485 = vadd.f32 %v2187, %v2436
  %v2486 = vadd.f32 %v2188, %v2437
  %v2487 = vadd.f32 %v2189, %v2438
  %v2488 = vadd.f32 %v2190, %v2439
  %v2489 = vadd.f32 %v2191, %v2440
  %v2490 = vadd.f32 %v2192, %v2441
  %v2491 = vadd.f32 %v2193, %v2442
  %v2492 = vadd.f32 %v2194, %v2443
  %v2493 = vadd.f32 %v2195, %v2444
  %v2494 = vadd.f32 %v2196, %v2445
  %v2495 = vadd.f32 %v2197, %v2446
  %v2496 = vadd.f32 %v2198, %v2447
  %v2497 = vadd.f32 %v2199, %v2448
  %v2498 = vadd.f32 %v2200, %v2449
  %v2499 = vadd.f32 %v2201, %v2450
  %2500 = vset.pattern.permute.xlu0 8
  %2501 = vperm.xlu0 %2500, %v63
  %v2502 = vpop.permute.xlu0 %2501
  %2504 = vset.pattern.permute.xlu0 8
  %2505 = vperm.xlu0 %2504, %v64
  %v2506 = vpop.permute.xlu0 %2505
  %2508 = vset.pattern.permute.xlu0 8
  %2509 = vperm.xlu0 %2508, %v65
  %v2510 = vpop.permute.xlu0 %2509
  %2512 = vset.pattern.permute.xlu0 8
  %2513 = vperm.xlu0 %2512, %v66
  %v2514 = vpop.permute.xlu0 %2513
  %2516 = vset.pattern.permute.xlu0 8
  %2517 = vperm.xlu0 %2516, %v67
  %v2518 = vpop.permute.xlu0 %2517
  %2520 = vset.pattern.permute.xlu0 8
  %2521 = vperm.xlu0 %2520, %v68
  %v2522 = vpop.permute.xlu0 %2521
  %2524 = vset.pattern.permute.xlu0 8
  %2525 = vperm.xlu0 %2524, %v69
  %v2526 = vpop.permute.xlu0 %2525
  %2528 = vset.pattern.permute.xlu0 8
  %2529 = vperm.xlu0 %2528, %v70
  %v2530 = vpop.permute.xlu0 %2529
  %2532 = vset.pattern.permute.xlu0 8
  %2533 = vperm.xlu0 %2532, %v71
  %v2534 = vpop.permute.xlu0 %2533
  %2536 = vset.pattern.permute.xlu0 8
  %2537 = vperm.xlu0 %2536, %v72
  %v2538 = vpop.permute.xlu0 %2537
  %2540 = vset.pattern.permute.xlu0 8
  %2541 = vperm.xlu0 %2540, %v73
  %v2542 = vpop.permute.xlu0 %2541
  %2544 = vset.pattern.permute.xlu0 8
  %2545 = vperm.xlu0 %2544, %v74
  %v2546 = vpop.permute.xlu0 %2545
  %2548 = vset.pattern.permute.xlu0 8
  %2549 = vperm.xlu0 %2548, %v75
  %v2550 = vpop.permute.xlu0 %2549
  %2552 = vset.pattern.permute.xlu0 8
  %2553 = vperm.xlu0 %2552, %v76
  %v2554 = vpop.permute.xlu0 %2553
  %2556 = vset.pattern.permute.xlu0 8
  %2557 = vperm.xlu0 %2556, %v77
  %v2558 = vpop.permute.xlu0 %2557
  %2560 = vset.pattern.permute.xlu0 8
  %2561 = vperm.xlu0 %2560, %v78
  %v2562 = vpop.permute.xlu0 %2561
  %2564 = vset.pattern.permute.xlu0 8
  %2565 = vperm.xlu0 %2564, %v79
  %v2566 = vpop.permute.xlu0 %2565
  %2568 = vset.pattern.permute.xlu0 8
  %2569 = vperm.xlu0 %2568, %v80
  %v2570 = vpop.permute.xlu0 %2569
  %2572 = vset.pattern.permute.xlu0 8
  %2573 = vperm.xlu0 %2572, %v81
  %v2574 = vpop.permute.xlu0 %2573
  %2576 = vset.pattern.permute.xlu0 8
  %2577 = vperm.xlu0 %2576, %v82
  %v2578 = vpop.permute.xlu0 %2577
  %2580 = vset.pattern.permute.xlu0 8
  %2581 = vperm.xlu0 %2580, %v83
  %v2582 = vpop.permute.xlu0 %2581
  %2584 = vset.pattern.permute.xlu0 8
  %2585 = vperm.xlu0 %2584, %v84
  %v2586 = vpop.permute.xlu0 %2585
  %2588 = vset.pattern.permute.xlu0 8
  %2589 = vperm.xlu0 %2588, %v85
  %v2590 = vpop.permute.xlu0 %2589
  %2592 = vset.pattern.permute.xlu0 8
  %2593 = vperm.xlu0 %2592, %v86
  %v2594 = vpop.permute.xlu0 %2593
  %2596 = vset.pattern.permute.xlu0 8
  %2597 = vperm.xlu0 %2596, %v87
  %v2598 = vpop.permute.xlu0 %2597
  %2600 = vset.pattern.permute.xlu0 8
  %2601 = vperm.xlu0 %2600, %v88
  %v2602 = vpop.permute.xlu0 %2601
  %2604 = vset.pattern.permute.xlu0 8
  %2605 = vperm.xlu0 %2604, %v89
  %v2606 = vpop.permute.xlu0 %2605
  %2608 = vset.pattern.permute.xlu0 8
  %2609 = vperm.xlu0 %2608, %v90
  %v2610 = vpop.permute.xlu0 %2609
  %2612 = vset.pattern.permute.xlu0 8
  %2613 = vperm.xlu0 %2612, %v91
  %v2614 = vpop.permute.xlu0 %2613
  %2616 = vset.pattern.permute.xlu0 8
  %2617 = vperm.xlu0 %2616, %v92
  %v2618 = vpop.permute.xlu0 %2617
  %2620 = vset.pattern.permute.xlu0 8
  %2621 = vperm.xlu0 %2620, %v93
  %v2622 = vpop.permute.xlu0 %2621
  %2624 = vset.pattern.permute.xlu0 8
  %2625 = vperm.xlu0 %2624, %v94
  %v2626 = vpop.permute.xlu0 %2625
  %2628 = vset.pattern.permute.xlu0 8
  %2629 = vperm.xlu0 %2628, %v95
  %v2630 = vpop.permute.xlu0 %2629
  %2632 = vset.pattern.permute.xlu0 8
  %2633 = vperm.xlu0 %2632, %v96
  %v2634 = vpop.permute.xlu0 %2633
  %2636 = vset.pattern.permute.xlu0 8
  %2637 = vperm.xlu0 %2636, %v97
  %v2638 = vpop.permute.xlu0 %2637
  %2640 = vset.pattern.permute.xlu0 8
  %2641 = vperm.xlu0 %2640, %v98
  %v2642 = vpop.permute.xlu0 %2641
  %2644 = vset.pattern.permute.xlu0 8
  %2645 = vperm.xlu0 %2644, %v99
  %v2646 = vpop.permute.xlu0 %2645
  %2648 = vset.pattern.permute.xlu0 8
  %2649 = vperm.xlu0 %2648, %v100
  %v2650 = vpop.permute.xlu0 %2649
  %2652 = vset.pattern.permute.xlu0 8
  %2653 = vperm.xlu0 %2652, %v101
  %v2654 = vpop.permute.xlu0 %2653
  %2656 = vset.pattern.permute.xlu0 8
  %2657 = vperm.xlu0 %2656, %v102
  %v2658 = vpop.permute.xlu0 %2657
  %2660 = vset.pattern.permute.xlu0 8
  %2661 = vperm.xlu0 %2660, %v103
  %v2662 = vpop.permute.xlu0 %2661
  %2664 = vset.pattern.permute.xlu0 8
  %2665 = vperm.xlu0 %2664, %v104
  %v2666 = vpop.permute.xlu0 %2665
  %2668 = vset.pattern.permute.xlu0 8
  %2669 = vperm.xlu0 %2668, %v105
  %v2670 = vpop.permute.xlu0 %2669
  %2672 = vset.pattern.permute.xlu0 8
  %2673 = vperm.xlu0 %2672, %v106
  %v2674 = vpop.permute.xlu0 %2673
  %2676 = vset.pattern.permute.xlu0 8
  %2677 = vperm.xlu0 %2676, %v107
  %v2678 = vpop.permute.xlu0 %2677
  %2680 = vset.pattern.permute.xlu0 8
  %2681 = vperm.xlu0 %2680, %v108
  %v2682 = vpop.permute.xlu0 %2681
  %2684 = vset.pattern.permute.xlu0 8
  %2685 = vperm.xlu0 %2684, %v109
  %v2686 = vpop.permute.xlu0 %2685
  %2688 = vset.pattern.permute.xlu0 8
  %2689 = vperm.xlu0 %2688, %v110
  %v2690 = vpop.permute.xlu0 %2689
  %2692 = vset.pattern.permute.xlu0 8
  %2693 = vperm.xlu0 %2692, %v111
  %v2694 = vpop.permute.xlu0 %2693
  %v2696 = vlaneseq
  %v2697 = vshrl.u32 %v2696, 7
  %v2698 = vsub.s32 0, %v2697
  %v2699 = vrot.slane %v115, %v2698
  %v2700 = vmul.f32 %v2502, %v2699
  %v2701 = vmul.f32 %v2506, %v2699
  %v2702 = vmul.f32 %v2510, %v2699
  %v2703 = vmul.f32 %v2514, %v2699
  %v2704 = vmul.f32 %v2518, %v2699
  %v2705 = vmul.f32 %v2522, %v2699
  %v2706 = vmul.f32 %v2526, %v2699
  %v2707 = vmul.f32 %v2530, %v2699
  %v2708 = vmul.f32 %v2534, %v2699
  %v2709 = vmul.f32 %v2538, %v2699
  %v2710 = vmul.f32 %v2542, %v2699
  %v2711 = vmul.f32 %v2546, %v2699
  %v2712 = vmul.f32 %v2550, %v2699
  %v2713 = vmul.f32 %v2554, %v2699
  %v2714 = vmul.f32 %v2558, %v2699
  %v2715 = vmul.f32 %v2562, %v2699
  %v2716 = vmul.f32 %v2566, %v2699
  %v2717 = vmul.f32 %v2570, %v2699
  %v2718 = vmul.f32 %v2574, %v2699
  %v2719 = vmul.f32 %v2578, %v2699
  %v2720 = vmul.f32 %v2582, %v2699
  %v2721 = vmul.f32 %v2586, %v2699
  %v2722 = vmul.f32 %v2590, %v2699
  %v2723 = vmul.f32 %v2594, %v2699
  %v2724 = vmul.f32 %v2598, %v2699
  %v2725 = vmul.f32 %v2602, %v2699
  %v2726 = vmul.f32 %v2606, %v2699
  %v2727 = vmul.f32 %v2610, %v2699
  %v2728 = vmul.f32 %v2614, %v2699
  %v2729 = vmul.f32 %v2618, %v2699
  %v2730 = vmul.f32 %v2622, %v2699
  %v2731 = vmul.f32 %v2626, %v2699
  %v2732 = vmul.f32 %v2630, %v2699
  %v2733 = vmul.f32 %v2634, %v2699
  %v2734 = vmul.f32 %v2638, %v2699
  %v2735 = vmul.f32 %v2642, %v2699
  %v2736 = vmul.f32 %v2646, %v2699
  %v2737 = vmul.f32 %v2650, %v2699
  %v2738 = vmul.f32 %v2654, %v2699
  %v2739 = vmul.f32 %v2658, %v2699
  %v2740 = vmul.f32 %v2662, %v2699
  %v2741 = vmul.f32 %v2666, %v2699
  %v2742 = vmul.f32 %v2670, %v2699
  %v2743 = vmul.f32 %v2674, %v2699
  %v2744 = vmul.f32 %v2678, %v2699
  %v2745 = vmul.f32 %v2682, %v2699
  %v2746 = vmul.f32 %v2686, %v2699
  %v2747 = vmul.f32 %v2690, %v2699
  %v2748 = vmul.f32 %v2694, %v2699
  %v2749 = vadd.f32 %v2451, %v2700
  %v2750 = vadd.f32 %v2452, %v2701
  %v2751 = vadd.f32 %v2453, %v2702
  %v2752 = vadd.f32 %v2454, %v2703
  %v2753 = vadd.f32 %v2455, %v2704
  %v2754 = vadd.f32 %v2456, %v2705
  %v2755 = vadd.f32 %v2457, %v2706
  %v2756 = vadd.f32 %v2458, %v2707
  %v2757 = vadd.f32 %v2459, %v2708
  %v2758 = vadd.f32 %v2460, %v2709
  %v2759 = vadd.f32 %v2461, %v2710
  %v2760 = vadd.f32 %v2462, %v2711
  %v2761 = vadd.f32 %v2463, %v2712
  %v2762 = vadd.f32 %v2464, %v2713
  %v2763 = vadd.f32 %v2465, %v2714
  %v2764 = vadd.f32 %v2466, %v2715
  %v2765 = vadd.f32 %v2467, %v2716
  %v2766 = vadd.f32 %v2468, %v2717
  %v2767 = vadd.f32 %v2469, %v2718
  %v2768 = vadd.f32 %v2470, %v2719
  %v2769 = vadd.f32 %v2471, %v2720
  %v2770 = vadd.f32 %v2472, %v2721
  %v2771 = vadd.f32 %v2473, %v2722
  %v2772 = vadd.f32 %v2474, %v2723
  %v2773 = vadd.f32 %v2475, %v2724
  %v2774 = vadd.f32 %v2476, %v2725
  %v2775 = vadd.f32 %v2477, %v2726
  %v2776 = vadd.f32 %v2478, %v2727
  %v2777 = vadd.f32 %v2479, %v2728
  %v2778 = vadd.f32 %v2480, %v2729
  %v2779 = vadd.f32 %v2481, %v2730
  %v2780 = vadd.f32 %v2482, %v2731
  %v2781 = vadd.f32 %v2483, %v2732
  %v2782 = vadd.f32 %v2484, %v2733
  %v2783 = vadd.f32 %v2485, %v2734
  %v2784 = vadd.f32 %v2486, %v2735
  %v2785 = vadd.f32 %v2487, %v2736
  %v2786 = vadd.f32 %v2488, %v2737
  %v2787 = vadd.f32 %v2489, %v2738
  %v2788 = vadd.f32 %v2490, %v2739
  %v2789 = vadd.f32 %v2491, %v2740
  %v2790 = vadd.f32 %v2492, %v2741
  %v2791 = vadd.f32 %v2493, %v2742
  %v2792 = vadd.f32 %v2494, %v2743
  %v2793 = vadd.f32 %v2495, %v2744
  %v2794 = vadd.f32 %v2496, %v2745
  %v2795 = vadd.f32 %v2497, %v2746
  %v2796 = vadd.f32 %v2498, %v2747
  %v2797 = vadd.f32 %v2499, %v2748
  %2798 = vset.pattern.permute.xlu0 9
  %2799 = vperm.xlu0 %2798, %v63
  %v2800 = vpop.permute.xlu0 %2799
  %2802 = vset.pattern.permute.xlu0 9
  %2803 = vperm.xlu0 %2802, %v64
  %v2804 = vpop.permute.xlu0 %2803
  %2806 = vset.pattern.permute.xlu0 9
  %2807 = vperm.xlu0 %2806, %v65
  %v2808 = vpop.permute.xlu0 %2807
  %2810 = vset.pattern.permute.xlu0 9
  %2811 = vperm.xlu0 %2810, %v66
  %v2812 = vpop.permute.xlu0 %2811
  %2814 = vset.pattern.permute.xlu0 9
  %2815 = vperm.xlu0 %2814, %v67
  %v2816 = vpop.permute.xlu0 %2815
  %2818 = vset.pattern.permute.xlu0 9
  %2819 = vperm.xlu0 %2818, %v68
  %v2820 = vpop.permute.xlu0 %2819
  %2822 = vset.pattern.permute.xlu0 9
  %2823 = vperm.xlu0 %2822, %v69
  %v2824 = vpop.permute.xlu0 %2823
  %2826 = vset.pattern.permute.xlu0 9
  %2827 = vperm.xlu0 %2826, %v70
  %v2828 = vpop.permute.xlu0 %2827
  %2830 = vset.pattern.permute.xlu0 9
  %2831 = vperm.xlu0 %2830, %v71
  %v2832 = vpop.permute.xlu0 %2831
  %2834 = vset.pattern.permute.xlu0 9
  %2835 = vperm.xlu0 %2834, %v72
  %v2836 = vpop.permute.xlu0 %2835
  %2838 = vset.pattern.permute.xlu0 9
  %2839 = vperm.xlu0 %2838, %v73
  %v2840 = vpop.permute.xlu0 %2839
  %2842 = vset.pattern.permute.xlu0 9
  %2843 = vperm.xlu0 %2842, %v74
  %v2844 = vpop.permute.xlu0 %2843
  %2846 = vset.pattern.permute.xlu0 9
  %2847 = vperm.xlu0 %2846, %v75
  %v2848 = vpop.permute.xlu0 %2847
  %2850 = vset.pattern.permute.xlu0 9
  %2851 = vperm.xlu0 %2850, %v76
  %v2852 = vpop.permute.xlu0 %2851
  %2854 = vset.pattern.permute.xlu0 9
  %2855 = vperm.xlu0 %2854, %v77
  %v2856 = vpop.permute.xlu0 %2855
  %2858 = vset.pattern.permute.xlu0 9
  %2859 = vperm.xlu0 %2858, %v78
  %v2860 = vpop.permute.xlu0 %2859
  %2862 = vset.pattern.permute.xlu0 9
  %2863 = vperm.xlu0 %2862, %v79
  %v2864 = vpop.permute.xlu0 %2863
  %2866 = vset.pattern.permute.xlu0 9
  %2867 = vperm.xlu0 %2866, %v80
  %v2868 = vpop.permute.xlu0 %2867
  %2870 = vset.pattern.permute.xlu0 9
  %2871 = vperm.xlu0 %2870, %v81
  %v2872 = vpop.permute.xlu0 %2871
  %2874 = vset.pattern.permute.xlu0 9
  %2875 = vperm.xlu0 %2874, %v82
  %v2876 = vpop.permute.xlu0 %2875
  %2878 = vset.pattern.permute.xlu0 9
  %2879 = vperm.xlu0 %2878, %v83
  %v2880 = vpop.permute.xlu0 %2879
  %2882 = vset.pattern.permute.xlu0 9
  %2883 = vperm.xlu0 %2882, %v84
  %v2884 = vpop.permute.xlu0 %2883
  %2886 = vset.pattern.permute.xlu0 9
  %2887 = vperm.xlu0 %2886, %v85
  %v2888 = vpop.permute.xlu0 %2887
  %2890 = vset.pattern.permute.xlu0 9
  %2891 = vperm.xlu0 %2890, %v86
  %v2892 = vpop.permute.xlu0 %2891
  %2894 = vset.pattern.permute.xlu0 9
  %2895 = vperm.xlu0 %2894, %v87
  %v2896 = vpop.permute.xlu0 %2895
  %2898 = vset.pattern.permute.xlu0 9
  %2899 = vperm.xlu0 %2898, %v88
  %v2900 = vpop.permute.xlu0 %2899
  %2902 = vset.pattern.permute.xlu0 9
  %2903 = vperm.xlu0 %2902, %v89
  %v2904 = vpop.permute.xlu0 %2903
  %2906 = vset.pattern.permute.xlu0 9
  %2907 = vperm.xlu0 %2906, %v90
  %v2908 = vpop.permute.xlu0 %2907
  %2910 = vset.pattern.permute.xlu0 9
  %2911 = vperm.xlu0 %2910, %v91
  %v2912 = vpop.permute.xlu0 %2911
  %2914 = vset.pattern.permute.xlu0 9
  %2915 = vperm.xlu0 %2914, %v92
  %v2916 = vpop.permute.xlu0 %2915
  %2918 = vset.pattern.permute.xlu0 9
  %2919 = vperm.xlu0 %2918, %v93
  %v2920 = vpop.permute.xlu0 %2919
  %2922 = vset.pattern.permute.xlu0 9
  %2923 = vperm.xlu0 %2922, %v94
  %v2924 = vpop.permute.xlu0 %2923
  %2926 = vset.pattern.permute.xlu0 9
  %2927 = vperm.xlu0 %2926, %v95
  %v2928 = vpop.permute.xlu0 %2927
  %2930 = vset.pattern.permute.xlu0 9
  %2931 = vperm.xlu0 %2930, %v96
  %v2932 = vpop.permute.xlu0 %2931
  %2934 = vset.pattern.permute.xlu0 9
  %2935 = vperm.xlu0 %2934, %v97
  %v2936 = vpop.permute.xlu0 %2935
  %2938 = vset.pattern.permute.xlu0 9
  %2939 = vperm.xlu0 %2938, %v98
  %v2940 = vpop.permute.xlu0 %2939
  %2942 = vset.pattern.permute.xlu0 9
  %2943 = vperm.xlu0 %2942, %v99
  %v2944 = vpop.permute.xlu0 %2943
  %2946 = vset.pattern.permute.xlu0 9
  %2947 = vperm.xlu0 %2946, %v100
  %v2948 = vpop.permute.xlu0 %2947
  %2950 = vset.pattern.permute.xlu0 9
  %2951 = vperm.xlu0 %2950, %v101
  %v2952 = vpop.permute.xlu0 %2951
  %2954 = vset.pattern.permute.xlu0 9
  %2955 = vperm.xlu0 %2954, %v102
  %v2956 = vpop.permute.xlu0 %2955
  %2958 = vset.pattern.permute.xlu0 9
  %2959 = vperm.xlu0 %2958, %v103
  %v2960 = vpop.permute.xlu0 %2959
  %2962 = vset.pattern.permute.xlu0 9
  %2963 = vperm.xlu0 %2962, %v104
  %v2964 = vpop.permute.xlu0 %2963
  %2966 = vset.pattern.permute.xlu0 9
  %2967 = vperm.xlu0 %2966, %v105
  %v2968 = vpop.permute.xlu0 %2967
  %2970 = vset.pattern.permute.xlu0 9
  %2971 = vperm.xlu0 %2970, %v106
  %v2972 = vpop.permute.xlu0 %2971
  %2974 = vset.pattern.permute.xlu0 9
  %2975 = vperm.xlu0 %2974, %v107
  %v2976 = vpop.permute.xlu0 %2975
  %2978 = vset.pattern.permute.xlu0 9
  %2979 = vperm.xlu0 %2978, %v108
  %v2980 = vpop.permute.xlu0 %2979
  %2982 = vset.pattern.permute.xlu0 9
  %2983 = vperm.xlu0 %2982, %v109
  %v2984 = vpop.permute.xlu0 %2983
  %2986 = vset.pattern.permute.xlu0 9
  %2987 = vperm.xlu0 %2986, %v110
  %v2988 = vpop.permute.xlu0 %2987
  %2990 = vset.pattern.permute.xlu0 9
  %2991 = vperm.xlu0 %2990, %v111
  %v2992 = vpop.permute.xlu0 %2991
  %v2994 = vlaneseq
  %v2995 = vshrl.u32 %v2994, 7
  %v2996 = vsub.s32 1, %v2995
  %v2997 = vrot.slane %v115, %v2996
  %v2998 = vmul.f32 %v2800, %v2997
  %v2999 = vmul.f32 %v2804, %v2997
  %v3000 = vmul.f32 %v2808, %v2997
  %v3001 = vmul.f32 %v2812, %v2997
  %v3002 = vmul.f32 %v2816, %v2997
  %v3003 = vmul.f32 %v2820, %v2997
  %v3004 = vmul.f32 %v2824, %v2997
  %v3005 = vmul.f32 %v2828, %v2997
  %v3006 = vmul.f32 %v2832, %v2997
  %v3007 = vmul.f32 %v2836, %v2997
  %v3008 = vmul.f32 %v2840, %v2997
  %v3009 = vmul.f32 %v2844, %v2997
  %v3010 = vmul.f32 %v2848, %v2997
  %v3011 = vmul.f32 %v2852, %v2997
  %v3012 = vmul.f32 %v2856, %v2997
  %v3013 = vmul.f32 %v2860, %v2997
  %v3014 = vmul.f32 %v2864, %v2997
  %v3015 = vmul.f32 %v2868, %v2997
  %v3016 = vmul.f32 %v2872, %v2997
  %v3017 = vmul.f32 %v2876, %v2997
  %v3018 = vmul.f32 %v2880, %v2997
  %v3019 = vmul.f32 %v2884, %v2997
  %v3020 = vmul.f32 %v2888, %v2997
  %v3021 = vmul.f32 %v2892, %v2997
  %v3022 = vmul.f32 %v2896, %v2997
  %v3023 = vmul.f32 %v2900, %v2997
  %v3024 = vmul.f32 %v2904, %v2997
  %v3025 = vmul.f32 %v2908, %v2997
  %v3026 = vmul.f32 %v2912, %v2997
  %v3027 = vmul.f32 %v2916, %v2997
  %v3028 = vmul.f32 %v2920, %v2997
  %v3029 = vmul.f32 %v2924, %v2997
  %v3030 = vmul.f32 %v2928, %v2997
  %v3031 = vmul.f32 %v2932, %v2997
  %v3032 = vmul.f32 %v2936, %v2997
  %v3033 = vmul.f32 %v2940, %v2997
  %v3034 = vmul.f32 %v2944, %v2997
  %v3035 = vmul.f32 %v2948, %v2997
  %v3036 = vmul.f32 %v2952, %v2997
  %v3037 = vmul.f32 %v2956, %v2997
  %v3038 = vmul.f32 %v2960, %v2997
  %v3039 = vmul.f32 %v2964, %v2997
  %v3040 = vmul.f32 %v2968, %v2997
  %v3041 = vmul.f32 %v2972, %v2997
  %v3042 = vmul.f32 %v2976, %v2997
  %v3043 = vmul.f32 %v2980, %v2997
  %v3044 = vmul.f32 %v2984, %v2997
  %v3045 = vmul.f32 %v2988, %v2997
  %v3046 = vmul.f32 %v2992, %v2997
  %v3047 = vadd.f32 %v2749, %v2998
  %v3048 = vadd.f32 %v2750, %v2999
  %v3049 = vadd.f32 %v2751, %v3000
  %v3050 = vadd.f32 %v2752, %v3001
  %v3051 = vadd.f32 %v2753, %v3002
  %v3052 = vadd.f32 %v2754, %v3003
  %v3053 = vadd.f32 %v2755, %v3004
  %v3054 = vadd.f32 %v2756, %v3005
  %v3055 = vadd.f32 %v2757, %v3006
  %v3056 = vadd.f32 %v2758, %v3007
  %v3057 = vadd.f32 %v2759, %v3008
  %v3058 = vadd.f32 %v2760, %v3009
  %v3059 = vadd.f32 %v2761, %v3010
  %v3060 = vadd.f32 %v2762, %v3011
  %v3061 = vadd.f32 %v2763, %v3012
  %v3062 = vadd.f32 %v2764, %v3013
  %v3063 = vadd.f32 %v2765, %v3014
  %v3064 = vadd.f32 %v2766, %v3015
  %v3065 = vadd.f32 %v2767, %v3016
  %v3066 = vadd.f32 %v2768, %v3017
  %v3067 = vadd.f32 %v2769, %v3018
  %v3068 = vadd.f32 %v2770, %v3019
  %v3069 = vadd.f32 %v2771, %v3020
  %v3070 = vadd.f32 %v2772, %v3021
  %v3071 = vadd.f32 %v2773, %v3022
  %v3072 = vadd.f32 %v2774, %v3023
  %v3073 = vadd.f32 %v2775, %v3024
  %v3074 = vadd.f32 %v2776, %v3025
  %v3075 = vadd.f32 %v2777, %v3026
  %v3076 = vadd.f32 %v2778, %v3027
  %v3077 = vadd.f32 %v2779, %v3028
  %v3078 = vadd.f32 %v2780, %v3029
  %v3079 = vadd.f32 %v2781, %v3030
  %v3080 = vadd.f32 %v2782, %v3031
  %v3081 = vadd.f32 %v2783, %v3032
  %v3082 = vadd.f32 %v2784, %v3033
  %v3083 = vadd.f32 %v2785, %v3034
  %v3084 = vadd.f32 %v2786, %v3035
  %v3085 = vadd.f32 %v2787, %v3036
  %v3086 = vadd.f32 %v2788, %v3037
  %v3087 = vadd.f32 %v2789, %v3038
  %v3088 = vadd.f32 %v2790, %v3039
  %v3089 = vadd.f32 %v2791, %v3040
  %v3090 = vadd.f32 %v2792, %v3041
  %v3091 = vadd.f32 %v2793, %v3042
  %v3092 = vadd.f32 %v2794, %v3043
  %v3093 = vadd.f32 %v2795, %v3044
  %v3094 = vadd.f32 %v2796, %v3045
  %v3095 = vadd.f32 %v2797, %v3046
  %3096 = vset.pattern.permute.xlu0 10
  %3097 = vperm.xlu0 %3096, %v63
  %v3098 = vpop.permute.xlu0 %3097
  %3100 = vset.pattern.permute.xlu0 10
  %3101 = vperm.xlu0 %3100, %v64
  %v3102 = vpop.permute.xlu0 %3101
  %3104 = vset.pattern.permute.xlu0 10
  %3105 = vperm.xlu0 %3104, %v65
  %v3106 = vpop.permute.xlu0 %3105
  %3108 = vset.pattern.permute.xlu0 10
  %3109 = vperm.xlu0 %3108, %v66
  %v3110 = vpop.permute.xlu0 %3109
  %3112 = vset.pattern.permute.xlu0 10
  %3113 = vperm.xlu0 %3112, %v67
  %v3114 = vpop.permute.xlu0 %3113
  %3116 = vset.pattern.permute.xlu0 10
  %3117 = vperm.xlu0 %3116, %v68
  %v3118 = vpop.permute.xlu0 %3117
  %3120 = vset.pattern.permute.xlu0 10
  %3121 = vperm.xlu0 %3120, %v69
  %v3122 = vpop.permute.xlu0 %3121
  %3124 = vset.pattern.permute.xlu0 10
  %3125 = vperm.xlu0 %3124, %v70
  %v3126 = vpop.permute.xlu0 %3125
  %3128 = vset.pattern.permute.xlu0 10
  %3129 = vperm.xlu0 %3128, %v71
  %v3130 = vpop.permute.xlu0 %3129
  %3132 = vset.pattern.permute.xlu0 10
  %3133 = vperm.xlu0 %3132, %v72
  %v3134 = vpop.permute.xlu0 %3133
  %3136 = vset.pattern.permute.xlu0 10
  %3137 = vperm.xlu0 %3136, %v73
  %v3138 = vpop.permute.xlu0 %3137
  %3140 = vset.pattern.permute.xlu0 10
  %3141 = vperm.xlu0 %3140, %v74
  %v3142 = vpop.permute.xlu0 %3141
  %3144 = vset.pattern.permute.xlu0 10
  %3145 = vperm.xlu0 %3144, %v75
  %v3146 = vpop.permute.xlu0 %3145
  %3148 = vset.pattern.permute.xlu0 10
  %3149 = vperm.xlu0 %3148, %v76
  %v3150 = vpop.permute.xlu0 %3149
  %3152 = vset.pattern.permute.xlu0 10
  %3153 = vperm.xlu0 %3152, %v77
  %v3154 = vpop.permute.xlu0 %3153
  %3156 = vset.pattern.permute.xlu0 10
  %3157 = vperm.xlu0 %3156, %v78
  %v3158 = vpop.permute.xlu0 %3157
  %3160 = vset.pattern.permute.xlu0 10
  %3161 = vperm.xlu0 %3160, %v79
  %v3162 = vpop.permute.xlu0 %3161
  %3164 = vset.pattern.permute.xlu0 10
  %3165 = vperm.xlu0 %3164, %v80
  %v3166 = vpop.permute.xlu0 %3165
  %3168 = vset.pattern.permute.xlu0 10
  %3169 = vperm.xlu0 %3168, %v81
  %v3170 = vpop.permute.xlu0 %3169
  %3172 = vset.pattern.permute.xlu0 10
  %3173 = vperm.xlu0 %3172, %v82
  %v3174 = vpop.permute.xlu0 %3173
  %3176 = vset.pattern.permute.xlu0 10
  %3177 = vperm.xlu0 %3176, %v83
  %v3178 = vpop.permute.xlu0 %3177
  %3180 = vset.pattern.permute.xlu0 10
  %3181 = vperm.xlu0 %3180, %v84
  %v3182 = vpop.permute.xlu0 %3181
  %3184 = vset.pattern.permute.xlu0 10
  %3185 = vperm.xlu0 %3184, %v85
  %v3186 = vpop.permute.xlu0 %3185
  %3188 = vset.pattern.permute.xlu0 10
  %3189 = vperm.xlu0 %3188, %v86
  %v3190 = vpop.permute.xlu0 %3189
  %3192 = vset.pattern.permute.xlu0 10
  %3193 = vperm.xlu0 %3192, %v87
  %v3194 = vpop.permute.xlu0 %3193
  %3196 = vset.pattern.permute.xlu0 10
  %3197 = vperm.xlu0 %3196, %v88
  %v3198 = vpop.permute.xlu0 %3197
  %3200 = vset.pattern.permute.xlu0 10
  %3201 = vperm.xlu0 %3200, %v89
  %v3202 = vpop.permute.xlu0 %3201
  %3204 = vset.pattern.permute.xlu0 10
  %3205 = vperm.xlu0 %3204, %v90
  %v3206 = vpop.permute.xlu0 %3205
  %3208 = vset.pattern.permute.xlu0 10
  %3209 = vperm.xlu0 %3208, %v91
  %v3210 = vpop.permute.xlu0 %3209
  %3212 = vset.pattern.permute.xlu0 10
  %3213 = vperm.xlu0 %3212, %v92
  %v3214 = vpop.permute.xlu0 %3213
  %3216 = vset.pattern.permute.xlu0 10
  %3217 = vperm.xlu0 %3216, %v93
  %v3218 = vpop.permute.xlu0 %3217
  %3220 = vset.pattern.permute.xlu0 10
  %3221 = vperm.xlu0 %3220, %v94
  %v3222 = vpop.permute.xlu0 %3221
  %3224 = vset.pattern.permute.xlu0 10
  %3225 = vperm.xlu0 %3224, %v95
  %v3226 = vpop.permute.xlu0 %3225
  %3228 = vset.pattern.permute.xlu0 10
  %3229 = vperm.xlu0 %3228, %v96
  %v3230 = vpop.permute.xlu0 %3229
  %3232 = vset.pattern.permute.xlu0 10
  %3233 = vperm.xlu0 %3232, %v97
  %v3234 = vpop.permute.xlu0 %3233
  %3236 = vset.pattern.permute.xlu0 10
  %3237 = vperm.xlu0 %3236, %v98
  %v3238 = vpop.permute.xlu0 %3237
  %3240 = vset.pattern.permute.xlu0 10
  %3241 = vperm.xlu0 %3240, %v99
  %v3242 = vpop.permute.xlu0 %3241
  %3244 = vset.pattern.permute.xlu0 10
  %3245 = vperm.xlu0 %3244, %v100
  %v3246 = vpop.permute.xlu0 %3245
  %3248 = vset.pattern.permute.xlu0 10
  %3249 = vperm.xlu0 %3248, %v101
  %v3250 = vpop.permute.xlu0 %3249
  %3252 = vset.pattern.permute.xlu0 10
  %3253 = vperm.xlu0 %3252, %v102
  %v3254 = vpop.permute.xlu0 %3253
  %3256 = vset.pattern.permute.xlu0 10
  %3257 = vperm.xlu0 %3256, %v103
  %v3258 = vpop.permute.xlu0 %3257
  %3260 = vset.pattern.permute.xlu0 10
  %3261 = vperm.xlu0 %3260, %v104
  %v3262 = vpop.permute.xlu0 %3261
  %3264 = vset.pattern.permute.xlu0 10
  %3265 = vperm.xlu0 %3264, %v105
  %v3266 = vpop.permute.xlu0 %3265
  %3268 = vset.pattern.permute.xlu0 10
  %3269 = vperm.xlu0 %3268, %v106
  %v3270 = vpop.permute.xlu0 %3269
  %3272 = vset.pattern.permute.xlu0 10
  %3273 = vperm.xlu0 %3272, %v107
  %v3274 = vpop.permute.xlu0 %3273
  %3276 = vset.pattern.permute.xlu0 10
  %3277 = vperm.xlu0 %3276, %v108
  %v3278 = vpop.permute.xlu0 %3277
  %3280 = vset.pattern.permute.xlu0 10
  %3281 = vperm.xlu0 %3280, %v109
  %v3282 = vpop.permute.xlu0 %3281
  %3284 = vset.pattern.permute.xlu0 10
  %3285 = vperm.xlu0 %3284, %v110
  %v3286 = vpop.permute.xlu0 %3285
  %3288 = vset.pattern.permute.xlu0 10
  %3289 = vperm.xlu0 %3288, %v111
  %v3290 = vpop.permute.xlu0 %3289
  %v3292 = vlaneseq
  %v3293 = vshrl.u32 %v3292, 7
  %v3294 = vsub.s32 2, %v3293
  %v3295 = vrot.slane %v115, %v3294
  %v3296 = vmul.f32 %v3098, %v3295
  %v3297 = vmul.f32 %v3102, %v3295
  %v3298 = vmul.f32 %v3106, %v3295
  %v3299 = vmul.f32 %v3110, %v3295
  %v3300 = vmul.f32 %v3114, %v3295
  %v3301 = vmul.f32 %v3118, %v3295
  %v3302 = vmul.f32 %v3122, %v3295
  %v3303 = vmul.f32 %v3126, %v3295
  %v3304 = vmul.f32 %v3130, %v3295
  %v3305 = vmul.f32 %v3134, %v3295
  %v3306 = vmul.f32 %v3138, %v3295
  %v3307 = vmul.f32 %v3142, %v3295
  %v3308 = vmul.f32 %v3146, %v3295
  %v3309 = vmul.f32 %v3150, %v3295
  %v3310 = vmul.f32 %v3154, %v3295
  %v3311 = vmul.f32 %v3158, %v3295
  %v3312 = vmul.f32 %v3162, %v3295
  %v3313 = vmul.f32 %v3166, %v3295
  %v3314 = vmul.f32 %v3170, %v3295
  %v3315 = vmul.f32 %v3174, %v3295
  %v3316 = vmul.f32 %v3178, %v3295
  %v3317 = vmul.f32 %v3182, %v3295
  %v3318 = vmul.f32 %v3186, %v3295
  %v3319 = vmul.f32 %v3190, %v3295
  %v3320 = vmul.f32 %v3194, %v3295
  %v3321 = vmul.f32 %v3198, %v3295
  %v3322 = vmul.f32 %v3202, %v3295
  %v3323 = vmul.f32 %v3206, %v3295
  %v3324 = vmul.f32 %v3210, %v3295
  %v3325 = vmul.f32 %v3214, %v3295
  %v3326 = vmul.f32 %v3218, %v3295
  %v3327 = vmul.f32 %v3222, %v3295
  %v3328 = vmul.f32 %v3226, %v3295
  %v3329 = vmul.f32 %v3230, %v3295
  %v3330 = vmul.f32 %v3234, %v3295
  %v3331 = vmul.f32 %v3238, %v3295
  %v3332 = vmul.f32 %v3242, %v3295
  %v3333 = vmul.f32 %v3246, %v3295
  %v3334 = vmul.f32 %v3250, %v3295
  %v3335 = vmul.f32 %v3254, %v3295
  %v3336 = vmul.f32 %v3258, %v3295
  %v3337 = vmul.f32 %v3262, %v3295
  %v3338 = vmul.f32 %v3266, %v3295
  %v3339 = vmul.f32 %v3270, %v3295
  %v3340 = vmul.f32 %v3274, %v3295
  %v3341 = vmul.f32 %v3278, %v3295
  %v3342 = vmul.f32 %v3282, %v3295
  %v3343 = vmul.f32 %v3286, %v3295
  %v3344 = vmul.f32 %v3290, %v3295
  %v3345 = vadd.f32 %v3047, %v3296
  %v3346 = vadd.f32 %v3048, %v3297
  %v3347 = vadd.f32 %v3049, %v3298
  %v3348 = vadd.f32 %v3050, %v3299
  %v3349 = vadd.f32 %v3051, %v3300
  %v3350 = vadd.f32 %v3052, %v3301
  %v3351 = vadd.f32 %v3053, %v3302
  %v3352 = vadd.f32 %v3054, %v3303
  %v3353 = vadd.f32 %v3055, %v3304
  %v3354 = vadd.f32 %v3056, %v3305
  %v3355 = vadd.f32 %v3057, %v3306
  %v3356 = vadd.f32 %v3058, %v3307
  %v3357 = vadd.f32 %v3059, %v3308
  %v3358 = vadd.f32 %v3060, %v3309
  %v3359 = vadd.f32 %v3061, %v3310
  %v3360 = vadd.f32 %v3062, %v3311
  %v3361 = vadd.f32 %v3063, %v3312
  %v3362 = vadd.f32 %v3064, %v3313
  %v3363 = vadd.f32 %v3065, %v3314
  %v3364 = vadd.f32 %v3066, %v3315
  %v3365 = vadd.f32 %v3067, %v3316
  %v3366 = vadd.f32 %v3068, %v3317
  %v3367 = vadd.f32 %v3069, %v3318
  %v3368 = vadd.f32 %v3070, %v3319
  %v3369 = vadd.f32 %v3071, %v3320
  %v3370 = vadd.f32 %v3072, %v3321
  %v3371 = vadd.f32 %v3073, %v3322
  %v3372 = vadd.f32 %v3074, %v3323
  %v3373 = vadd.f32 %v3075, %v3324
  %v3374 = vadd.f32 %v3076, %v3325
  %v3375 = vadd.f32 %v3077, %v3326
  %v3376 = vadd.f32 %v3078, %v3327
  %v3377 = vadd.f32 %v3079, %v3328
  %v3378 = vadd.f32 %v3080, %v3329
  %v3379 = vadd.f32 %v3081, %v3330
  %v3380 = vadd.f32 %v3082, %v3331
  %v3381 = vadd.f32 %v3083, %v3332
  %v3382 = vadd.f32 %v3084, %v3333
  %v3383 = vadd.f32 %v3085, %v3334
  %v3384 = vadd.f32 %v3086, %v3335
  %v3385 = vadd.f32 %v3087, %v3336
  %v3386 = vadd.f32 %v3088, %v3337
  %v3387 = vadd.f32 %v3089, %v3338
  %v3388 = vadd.f32 %v3090, %v3339
  %v3389 = vadd.f32 %v3091, %v3340
  %v3390 = vadd.f32 %v3092, %v3341
  %v3391 = vadd.f32 %v3093, %v3342
  %v3392 = vadd.f32 %v3094, %v3343
  %v3393 = vadd.f32 %v3095, %v3344
  %3394 = vset.pattern.permute.xlu0 11
  %3395 = vperm.xlu0 %3394, %v63
  %v3396 = vpop.permute.xlu0 %3395
  %3398 = vset.pattern.permute.xlu0 11
  %3399 = vperm.xlu0 %3398, %v64
  %v3400 = vpop.permute.xlu0 %3399
  %3402 = vset.pattern.permute.xlu0 11
  %3403 = vperm.xlu0 %3402, %v65
  %v3404 = vpop.permute.xlu0 %3403
  %3406 = vset.pattern.permute.xlu0 11
  %3407 = vperm.xlu0 %3406, %v66
  %v3408 = vpop.permute.xlu0 %3407
  %3410 = vset.pattern.permute.xlu0 11
  %3411 = vperm.xlu0 %3410, %v67
  %v3412 = vpop.permute.xlu0 %3411
  %3414 = vset.pattern.permute.xlu0 11
  %3415 = vperm.xlu0 %3414, %v68
  %v3416 = vpop.permute.xlu0 %3415
  %3418 = vset.pattern.permute.xlu0 11
  %3419 = vperm.xlu0 %3418, %v69
  %v3420 = vpop.permute.xlu0 %3419
  %3422 = vset.pattern.permute.xlu0 11
  %3423 = vperm.xlu0 %3422, %v70
  %v3424 = vpop.permute.xlu0 %3423
  %3426 = vset.pattern.permute.xlu0 11
  %3427 = vperm.xlu0 %3426, %v71
  %v3428 = vpop.permute.xlu0 %3427
  %3430 = vset.pattern.permute.xlu0 11
  %3431 = vperm.xlu0 %3430, %v72
  %v3432 = vpop.permute.xlu0 %3431
  %3434 = vset.pattern.permute.xlu0 11
  %3435 = vperm.xlu0 %3434, %v73
  %v3436 = vpop.permute.xlu0 %3435
  %3438 = vset.pattern.permute.xlu0 11
  %3439 = vperm.xlu0 %3438, %v74
  %v3440 = vpop.permute.xlu0 %3439
  %3442 = vset.pattern.permute.xlu0 11
  %3443 = vperm.xlu0 %3442, %v75
  %v3444 = vpop.permute.xlu0 %3443
  %3446 = vset.pattern.permute.xlu0 11
  %3447 = vperm.xlu0 %3446, %v76
  %v3448 = vpop.permute.xlu0 %3447
  %3450 = vset.pattern.permute.xlu0 11
  %3451 = vperm.xlu0 %3450, %v77
  %v3452 = vpop.permute.xlu0 %3451
  %3454 = vset.pattern.permute.xlu0 11
  %3455 = vperm.xlu0 %3454, %v78
  %v3456 = vpop.permute.xlu0 %3455
  %3458 = vset.pattern.permute.xlu0 11
  %3459 = vperm.xlu0 %3458, %v79
  %v3460 = vpop.permute.xlu0 %3459
  %3462 = vset.pattern.permute.xlu0 11
  %3463 = vperm.xlu0 %3462, %v80
  %v3464 = vpop.permute.xlu0 %3463
  %3466 = vset.pattern.permute.xlu0 11
  %3467 = vperm.xlu0 %3466, %v81
  %v3468 = vpop.permute.xlu0 %3467
  %3470 = vset.pattern.permute.xlu0 11
  %3471 = vperm.xlu0 %3470, %v82
  %v3472 = vpop.permute.xlu0 %3471
  %3474 = vset.pattern.permute.xlu0 11
  %3475 = vperm.xlu0 %3474, %v83
  %v3476 = vpop.permute.xlu0 %3475
  %3478 = vset.pattern.permute.xlu0 11
  %3479 = vperm.xlu0 %3478, %v84
  %v3480 = vpop.permute.xlu0 %3479
  %3482 = vset.pattern.permute.xlu0 11
  %3483 = vperm.xlu0 %3482, %v85
  %v3484 = vpop.permute.xlu0 %3483
  %3486 = vset.pattern.permute.xlu0 11
  %3487 = vperm.xlu0 %3486, %v86
  %v3488 = vpop.permute.xlu0 %3487
  %3490 = vset.pattern.permute.xlu0 11
  %3491 = vperm.xlu0 %3490, %v87
  %v3492 = vpop.permute.xlu0 %3491
  %3494 = vset.pattern.permute.xlu0 11
  %3495 = vperm.xlu0 %3494, %v88
  %v3496 = vpop.permute.xlu0 %3495
  %3498 = vset.pattern.permute.xlu0 11
  %3499 = vperm.xlu0 %3498, %v89
  %v3500 = vpop.permute.xlu0 %3499
  %3502 = vset.pattern.permute.xlu0 11
  %3503 = vperm.xlu0 %3502, %v90
  %v3504 = vpop.permute.xlu0 %3503
  %3506 = vset.pattern.permute.xlu0 11
  %3507 = vperm.xlu0 %3506, %v91
  %v3508 = vpop.permute.xlu0 %3507
  %3510 = vset.pattern.permute.xlu0 11
  %3511 = vperm.xlu0 %3510, %v92
  %v3512 = vpop.permute.xlu0 %3511
  %3514 = vset.pattern.permute.xlu0 11
  %3515 = vperm.xlu0 %3514, %v93
  %v3516 = vpop.permute.xlu0 %3515
  %3518 = vset.pattern.permute.xlu0 11
  %3519 = vperm.xlu0 %3518, %v94
  %v3520 = vpop.permute.xlu0 %3519
  %3522 = vset.pattern.permute.xlu0 11
  %3523 = vperm.xlu0 %3522, %v95
  %v3524 = vpop.permute.xlu0 %3523
  %3526 = vset.pattern.permute.xlu0 11
  %3527 = vperm.xlu0 %3526, %v96
  %v3528 = vpop.permute.xlu0 %3527
  %3530 = vset.pattern.permute.xlu0 11
  %3531 = vperm.xlu0 %3530, %v97
  %v3532 = vpop.permute.xlu0 %3531
  %3534 = vset.pattern.permute.xlu0 11
  %3535 = vperm.xlu0 %3534, %v98
  %v3536 = vpop.permute.xlu0 %3535
  %3538 = vset.pattern.permute.xlu0 11
  %3539 = vperm.xlu0 %3538, %v99
  %v3540 = vpop.permute.xlu0 %3539
  %3542 = vset.pattern.permute.xlu0 11
  %3543 = vperm.xlu0 %3542, %v100
  %v3544 = vpop.permute.xlu0 %3543
  %3546 = vset.pattern.permute.xlu0 11
  %3547 = vperm.xlu0 %3546, %v101
  %v3548 = vpop.permute.xlu0 %3547
  %3550 = vset.pattern.permute.xlu0 11
  %3551 = vperm.xlu0 %3550, %v102
  %v3552 = vpop.permute.xlu0 %3551
  %3554 = vset.pattern.permute.xlu0 11
  %3555 = vperm.xlu0 %3554, %v103
  %v3556 = vpop.permute.xlu0 %3555
  %3558 = vset.pattern.permute.xlu0 11
  %3559 = vperm.xlu0 %3558, %v104
  %v3560 = vpop.permute.xlu0 %3559
  %3562 = vset.pattern.permute.xlu0 11
  %3563 = vperm.xlu0 %3562, %v105
  %v3564 = vpop.permute.xlu0 %3563
  %3566 = vset.pattern.permute.xlu0 11
  %3567 = vperm.xlu0 %3566, %v106
  %v3568 = vpop.permute.xlu0 %3567
  %3570 = vset.pattern.permute.xlu0 11
  %3571 = vperm.xlu0 %3570, %v107
  %v3572 = vpop.permute.xlu0 %3571
  %3574 = vset.pattern.permute.xlu0 11
  %3575 = vperm.xlu0 %3574, %v108
  %v3576 = vpop.permute.xlu0 %3575
  %3578 = vset.pattern.permute.xlu0 11
  %3579 = vperm.xlu0 %3578, %v109
  %v3580 = vpop.permute.xlu0 %3579
  %3582 = vset.pattern.permute.xlu0 11
  %3583 = vperm.xlu0 %3582, %v110
  %v3584 = vpop.permute.xlu0 %3583
  %3586 = vset.pattern.permute.xlu0 11
  %3587 = vperm.xlu0 %3586, %v111
  %v3588 = vpop.permute.xlu0 %3587
  %v3590 = vlaneseq
  %v3591 = vshrl.u32 %v3590, 7
  %v3592 = vsub.s32 3, %v3591
  %v3593 = vrot.slane %v115, %v3592
  %v3594 = vmul.f32 %v3396, %v3593
  %v3595 = vmul.f32 %v3400, %v3593
  %v3596 = vmul.f32 %v3404, %v3593
  %v3597 = vmul.f32 %v3408, %v3593
  %v3598 = vmul.f32 %v3412, %v3593
  %v3599 = vmul.f32 %v3416, %v3593
  %v3600 = vmul.f32 %v3420, %v3593
  %v3601 = vmul.f32 %v3424, %v3593
  %v3602 = vmul.f32 %v3428, %v3593
  %v3603 = vmul.f32 %v3432, %v3593
  %v3604 = vmul.f32 %v3436, %v3593
  %v3605 = vmul.f32 %v3440, %v3593
  %v3606 = vmul.f32 %v3444, %v3593
  %v3607 = vmul.f32 %v3448, %v3593
  %v3608 = vmul.f32 %v3452, %v3593
  %v3609 = vmul.f32 %v3456, %v3593
  %v3610 = vmul.f32 %v3460, %v3593
  %v3611 = vmul.f32 %v3464, %v3593
  %v3612 = vmul.f32 %v3468, %v3593
  %v3613 = vmul.f32 %v3472, %v3593
  %v3614 = vmul.f32 %v3476, %v3593
  %v3615 = vmul.f32 %v3480, %v3593
  %v3616 = vmul.f32 %v3484, %v3593
  %v3617 = vmul.f32 %v3488, %v3593
  %v3618 = vmul.f32 %v3492, %v3593
  %v3619 = vmul.f32 %v3496, %v3593
  %v3620 = vmul.f32 %v3500, %v3593
  %v3621 = vmul.f32 %v3504, %v3593
  %v3622 = vmul.f32 %v3508, %v3593
  %v3623 = vmul.f32 %v3512, %v3593
  %v3624 = vmul.f32 %v3516, %v3593
  %v3625 = vmul.f32 %v3520, %v3593
  %v3626 = vmul.f32 %v3524, %v3593
  %v3627 = vmul.f32 %v3528, %v3593
  %v3628 = vmul.f32 %v3532, %v3593
  %v3629 = vmul.f32 %v3536, %v3593
  %v3630 = vmul.f32 %v3540, %v3593
  %v3631 = vmul.f32 %v3544, %v3593
  %v3632 = vmul.f32 %v3548, %v3593
  %v3633 = vmul.f32 %v3552, %v3593
  %v3634 = vmul.f32 %v3556, %v3593
  %v3635 = vmul.f32 %v3560, %v3593
  %v3636 = vmul.f32 %v3564, %v3593
  %v3637 = vmul.f32 %v3568, %v3593
  %v3638 = vmul.f32 %v3572, %v3593
  %v3639 = vmul.f32 %v3576, %v3593
  %v3640 = vmul.f32 %v3580, %v3593
  %v3641 = vmul.f32 %v3584, %v3593
  %v3642 = vmul.f32 %v3588, %v3593
  %v3643 = vadd.f32 %v3345, %v3594
  %v3644 = vadd.f32 %v3346, %v3595
  %v3645 = vadd.f32 %v3347, %v3596
  %v3646 = vadd.f32 %v3348, %v3597
  %v3647 = vadd.f32 %v3349, %v3598
  %v3648 = vadd.f32 %v3350, %v3599
  %v3649 = vadd.f32 %v3351, %v3600
  %v3650 = vadd.f32 %v3352, %v3601
  %v3651 = vadd.f32 %v3353, %v3602
  %v3652 = vadd.f32 %v3354, %v3603
  %v3653 = vadd.f32 %v3355, %v3604
  %v3654 = vadd.f32 %v3356, %v3605
  %v3655 = vadd.f32 %v3357, %v3606
  %v3656 = vadd.f32 %v3358, %v3607
  %v3657 = vadd.f32 %v3359, %v3608
  %v3658 = vadd.f32 %v3360, %v3609
  %v3659 = vadd.f32 %v3361, %v3610
  %v3660 = vadd.f32 %v3362, %v3611
  %v3661 = vadd.f32 %v3363, %v3612
  %v3662 = vadd.f32 %v3364, %v3613
  %v3663 = vadd.f32 %v3365, %v3614
  %v3664 = vadd.f32 %v3366, %v3615
  %v3665 = vadd.f32 %v3367, %v3616
  %v3666 = vadd.f32 %v3368, %v3617
  %v3667 = vadd.f32 %v3369, %v3618
  %v3668 = vadd.f32 %v3370, %v3619
  %v3669 = vadd.f32 %v3371, %v3620
  %v3670 = vadd.f32 %v3372, %v3621
  %v3671 = vadd.f32 %v3373, %v3622
  %v3672 = vadd.f32 %v3374, %v3623
  %v3673 = vadd.f32 %v3375, %v3624
  %v3674 = vadd.f32 %v3376, %v3625
  %v3675 = vadd.f32 %v3377, %v3626
  %v3676 = vadd.f32 %v3378, %v3627
  %v3677 = vadd.f32 %v3379, %v3628
  %v3678 = vadd.f32 %v3380, %v3629
  %v3679 = vadd.f32 %v3381, %v3630
  %v3680 = vadd.f32 %v3382, %v3631
  %v3681 = vadd.f32 %v3383, %v3632
  %v3682 = vadd.f32 %v3384, %v3633
  %v3683 = vadd.f32 %v3385, %v3634
  %v3684 = vadd.f32 %v3386, %v3635
  %v3685 = vadd.f32 %v3387, %v3636
  %v3686 = vadd.f32 %v3388, %v3637
  %v3687 = vadd.f32 %v3389, %v3638
  %v3688 = vadd.f32 %v3390, %v3639
  %v3689 = vadd.f32 %v3391, %v3640
  %v3690 = vadd.f32 %v3392, %v3641
  %v3691 = vadd.f32 %v3393, %v3642
  %3692 = vset.pattern.permute.xlu0 12
  %3693 = vperm.xlu0 %3692, %v63
  %v3694 = vpop.permute.xlu0 %3693
  %3696 = vset.pattern.permute.xlu0 12
  %3697 = vperm.xlu0 %3696, %v64
  %v3698 = vpop.permute.xlu0 %3697
  %3700 = vset.pattern.permute.xlu0 12
  %3701 = vperm.xlu0 %3700, %v65
  %v3702 = vpop.permute.xlu0 %3701
  %3704 = vset.pattern.permute.xlu0 12
  %3705 = vperm.xlu0 %3704, %v66
  %v3706 = vpop.permute.xlu0 %3705
  %3708 = vset.pattern.permute.xlu0 12
  %3709 = vperm.xlu0 %3708, %v67
  %v3710 = vpop.permute.xlu0 %3709
  %3712 = vset.pattern.permute.xlu0 12
  %3713 = vperm.xlu0 %3712, %v68
  %v3714 = vpop.permute.xlu0 %3713
  %3716 = vset.pattern.permute.xlu0 12
  %3717 = vperm.xlu0 %3716, %v69
  %v3718 = vpop.permute.xlu0 %3717
  %3720 = vset.pattern.permute.xlu0 12
  %3721 = vperm.xlu0 %3720, %v70
  %v3722 = vpop.permute.xlu0 %3721
  %3724 = vset.pattern.permute.xlu0 12
  %3725 = vperm.xlu0 %3724, %v71
  %v3726 = vpop.permute.xlu0 %3725
  %3728 = vset.pattern.permute.xlu0 12
  %3729 = vperm.xlu0 %3728, %v72
  %v3730 = vpop.permute.xlu0 %3729
  %3732 = vset.pattern.permute.xlu0 12
  %3733 = vperm.xlu0 %3732, %v73
  %v3734 = vpop.permute.xlu0 %3733
  %3736 = vset.pattern.permute.xlu0 12
  %3737 = vperm.xlu0 %3736, %v74
  %v3738 = vpop.permute.xlu0 %3737
  %3740 = vset.pattern.permute.xlu0 12
  %3741 = vperm.xlu0 %3740, %v75
  %v3742 = vpop.permute.xlu0 %3741
  %3744 = vset.pattern.permute.xlu0 12
  %3745 = vperm.xlu0 %3744, %v76
  %v3746 = vpop.permute.xlu0 %3745
  %3748 = vset.pattern.permute.xlu0 12
  %3749 = vperm.xlu0 %3748, %v77
  %v3750 = vpop.permute.xlu0 %3749
  %3752 = vset.pattern.permute.xlu0 12
  %3753 = vperm.xlu0 %3752, %v78
  %v3754 = vpop.permute.xlu0 %3753
  %3756 = vset.pattern.permute.xlu0 12
  %3757 = vperm.xlu0 %3756, %v79
  %v3758 = vpop.permute.xlu0 %3757
  %3760 = vset.pattern.permute.xlu0 12
  %3761 = vperm.xlu0 %3760, %v80
  %v3762 = vpop.permute.xlu0 %3761
  %3764 = vset.pattern.permute.xlu0 12
  %3765 = vperm.xlu0 %3764, %v81
  %v3766 = vpop.permute.xlu0 %3765
  %3768 = vset.pattern.permute.xlu0 12
  %3769 = vperm.xlu0 %3768, %v82
  %v3770 = vpop.permute.xlu0 %3769
  %3772 = vset.pattern.permute.xlu0 12
  %3773 = vperm.xlu0 %3772, %v83
  %v3774 = vpop.permute.xlu0 %3773
  %3776 = vset.pattern.permute.xlu0 12
  %3777 = vperm.xlu0 %3776, %v84
  %v3778 = vpop.permute.xlu0 %3777
  %3780 = vset.pattern.permute.xlu0 12
  %3781 = vperm.xlu0 %3780, %v85
  %v3782 = vpop.permute.xlu0 %3781
  %3784 = vset.pattern.permute.xlu0 12
  %3785 = vperm.xlu0 %3784, %v86
  %v3786 = vpop.permute.xlu0 %3785
  %3788 = vset.pattern.permute.xlu0 12
  %3789 = vperm.xlu0 %3788, %v87
  %v3790 = vpop.permute.xlu0 %3789
  %3792 = vset.pattern.permute.xlu0 12
  %3793 = vperm.xlu0 %3792, %v88
  %v3794 = vpop.permute.xlu0 %3793
  %3796 = vset.pattern.permute.xlu0 12
  %3797 = vperm.xlu0 %3796, %v89
  %v3798 = vpop.permute.xlu0 %3797
  %3800 = vset.pattern.permute.xlu0 12
  %3801 = vperm.xlu0 %3800, %v90
  %v3802 = vpop.permute.xlu0 %3801
  %3804 = vset.pattern.permute.xlu0 12
  %3805 = vperm.xlu0 %3804, %v91
  %v3806 = vpop.permute.xlu0 %3805
  %3808 = vset.pattern.permute.xlu0 12
  %3809 = vperm.xlu0 %3808, %v92
  %v3810 = vpop.permute.xlu0 %3809
  %3812 = vset.pattern.permute.xlu0 12
  %3813 = vperm.xlu0 %3812, %v93
  %v3814 = vpop.permute.xlu0 %3813
  %3816 = vset.pattern.permute.xlu0 12
  %3817 = vperm.xlu0 %3816, %v94
  %v3818 = vpop.permute.xlu0 %3817
  %3820 = vset.pattern.permute.xlu0 12
  %3821 = vperm.xlu0 %3820, %v95
  %v3822 = vpop.permute.xlu0 %3821
  %3824 = vset.pattern.permute.xlu0 12
  %3825 = vperm.xlu0 %3824, %v96
  %v3826 = vpop.permute.xlu0 %3825
  %3828 = vset.pattern.permute.xlu0 12
  %3829 = vperm.xlu0 %3828, %v97
  %v3830 = vpop.permute.xlu0 %3829
  %3832 = vset.pattern.permute.xlu0 12
  %3833 = vperm.xlu0 %3832, %v98
  %v3834 = vpop.permute.xlu0 %3833
  %3836 = vset.pattern.permute.xlu0 12
  %3837 = vperm.xlu0 %3836, %v99
  %v3838 = vpop.permute.xlu0 %3837
  %3840 = vset.pattern.permute.xlu0 12
  %3841 = vperm.xlu0 %3840, %v100
  %v3842 = vpop.permute.xlu0 %3841
  %3844 = vset.pattern.permute.xlu0 12
  %3845 = vperm.xlu0 %3844, %v101
  %v3846 = vpop.permute.xlu0 %3845
  %3848 = vset.pattern.permute.xlu0 12
  %3849 = vperm.xlu0 %3848, %v102
  %v3850 = vpop.permute.xlu0 %3849
  %3852 = vset.pattern.permute.xlu0 12
  %3853 = vperm.xlu0 %3852, %v103
  %v3854 = vpop.permute.xlu0 %3853
  %3856 = vset.pattern.permute.xlu0 12
  %3857 = vperm.xlu0 %3856, %v104
  %v3858 = vpop.permute.xlu0 %3857
  %3860 = vset.pattern.permute.xlu0 12
  %3861 = vperm.xlu0 %3860, %v105
  %v3862 = vpop.permute.xlu0 %3861
  %3864 = vset.pattern.permute.xlu0 12
  %3865 = vperm.xlu0 %3864, %v106
  %v3866 = vpop.permute.xlu0 %3865
  %3868 = vset.pattern.permute.xlu0 12
  %3869 = vperm.xlu0 %3868, %v107
  %v3870 = vpop.permute.xlu0 %3869
  %3872 = vset.pattern.permute.xlu0 12
  %3873 = vperm.xlu0 %3872, %v108
  %v3874 = vpop.permute.xlu0 %3873
  %3876 = vset.pattern.permute.xlu0 12
  %3877 = vperm.xlu0 %3876, %v109
  %v3878 = vpop.permute.xlu0 %3877
  %3880 = vset.pattern.permute.xlu0 12
  %3881 = vperm.xlu0 %3880, %v110
  %v3882 = vpop.permute.xlu0 %3881
  %3884 = vset.pattern.permute.xlu0 12
  %3885 = vperm.xlu0 %3884, %v111
  %v3886 = vpop.permute.xlu0 %3885
  %v3888 = vlaneseq
  %v3889 = vshrl.u32 %v3888, 7
  %v3890 = vsub.s32 4, %v3889
  %v3891 = vrot.slane %v115, %v3890
  %v3892 = vmul.f32 %v3694, %v3891
  %v3893 = vmul.f32 %v3698, %v3891
  %v3894 = vmul.f32 %v3702, %v3891
  %v3895 = vmul.f32 %v3706, %v3891
  %v3896 = vmul.f32 %v3710, %v3891
  %v3897 = vmul.f32 %v3714, %v3891
  %v3898 = vmul.f32 %v3718, %v3891
  %v3899 = vmul.f32 %v3722, %v3891
  %v3900 = vmul.f32 %v3726, %v3891
  %v3901 = vmul.f32 %v3730, %v3891
  %v3902 = vmul.f32 %v3734, %v3891
  %v3903 = vmul.f32 %v3738, %v3891
  %v3904 = vmul.f32 %v3742, %v3891
  %v3905 = vmul.f32 %v3746, %v3891
  %v3906 = vmul.f32 %v3750, %v3891
  %v3907 = vmul.f32 %v3754, %v3891
  %v3908 = vmul.f32 %v3758, %v3891
  %v3909 = vmul.f32 %v3762, %v3891
  %v3910 = vmul.f32 %v3766, %v3891
  %v3911 = vmul.f32 %v3770, %v3891
  %v3912 = vmul.f32 %v3774, %v3891
  %v3913 = vmul.f32 %v3778, %v3891
  %v3914 = vmul.f32 %v3782, %v3891
  %v3915 = vmul.f32 %v3786, %v3891
  %v3916 = vmul.f32 %v3790, %v3891
  %v3917 = vmul.f32 %v3794, %v3891
  %v3918 = vmul.f32 %v3798, %v3891
  %v3919 = vmul.f32 %v3802, %v3891
  %v3920 = vmul.f32 %v3806, %v3891
  %v3921 = vmul.f32 %v3810, %v3891
  %v3922 = vmul.f32 %v3814, %v3891
  %v3923 = vmul.f32 %v3818, %v3891
  %v3924 = vmul.f32 %v3822, %v3891
  %v3925 = vmul.f32 %v3826, %v3891
  %v3926 = vmul.f32 %v3830, %v3891
  %v3927 = vmul.f32 %v3834, %v3891
  %v3928 = vmul.f32 %v3838, %v3891
  %v3929 = vmul.f32 %v3842, %v3891
  %v3930 = vmul.f32 %v3846, %v3891
  %v3931 = vmul.f32 %v3850, %v3891
  %v3932 = vmul.f32 %v3854, %v3891
  %v3933 = vmul.f32 %v3858, %v3891
  %v3934 = vmul.f32 %v3862, %v3891
  %v3935 = vmul.f32 %v3866, %v3891
  %v3936 = vmul.f32 %v3870, %v3891
  %v3937 = vmul.f32 %v3874, %v3891
  %v3938 = vmul.f32 %v3878, %v3891
  %v3939 = vmul.f32 %v3882, %v3891
  %v3940 = vmul.f32 %v3886, %v3891
  %v3941 = vadd.f32 %v3643, %v3892
  %v3942 = vadd.f32 %v3644, %v3893
  %v3943 = vadd.f32 %v3645, %v3894
  %v3944 = vadd.f32 %v3646, %v3895
  %v3945 = vadd.f32 %v3647, %v3896
  %v3946 = vadd.f32 %v3648, %v3897
  %v3947 = vadd.f32 %v3649, %v3898
  %v3948 = vadd.f32 %v3650, %v3899
  %v3949 = vadd.f32 %v3651, %v3900
  %v3950 = vadd.f32 %v3652, %v3901
  %v3951 = vadd.f32 %v3653, %v3902
  %v3952 = vadd.f32 %v3654, %v3903
  %v3953 = vadd.f32 %v3655, %v3904
  %v3954 = vadd.f32 %v3656, %v3905
  %v3955 = vadd.f32 %v3657, %v3906
  %v3956 = vadd.f32 %v3658, %v3907
  %v3957 = vadd.f32 %v3659, %v3908
  %v3958 = vadd.f32 %v3660, %v3909
  %v3959 = vadd.f32 %v3661, %v3910
  %v3960 = vadd.f32 %v3662, %v3911
  %v3961 = vadd.f32 %v3663, %v3912
  %v3962 = vadd.f32 %v3664, %v3913
  %v3963 = vadd.f32 %v3665, %v3914
  %v3964 = vadd.f32 %v3666, %v3915
  %v3965 = vadd.f32 %v3667, %v3916
  %v3966 = vadd.f32 %v3668, %v3917
  %v3967 = vadd.f32 %v3669, %v3918
  %v3968 = vadd.f32 %v3670, %v3919
  %v3969 = vadd.f32 %v3671, %v3920
  %v3970 = vadd.f32 %v3672, %v3921
  %v3971 = vadd.f32 %v3673, %v3922
  %v3972 = vadd.f32 %v3674, %v3923
  %v3973 = vadd.f32 %v3675, %v3924
  %v3974 = vadd.f32 %v3676, %v3925
  %v3975 = vadd.f32 %v3677, %v3926
  %v3976 = vadd.f32 %v3678, %v3927
  %v3977 = vadd.f32 %v3679, %v3928
  %v3978 = vadd.f32 %v3680, %v3929
  %v3979 = vadd.f32 %v3681, %v3930
  %v3980 = vadd.f32 %v3682, %v3931
  %v3981 = vadd.f32 %v3683, %v3932
  %v3982 = vadd.f32 %v3684, %v3933
  %v3983 = vadd.f32 %v3685, %v3934
  %v3984 = vadd.f32 %v3686, %v3935
  %v3985 = vadd.f32 %v3687, %v3936
  %v3986 = vadd.f32 %v3688, %v3937
  %v3987 = vadd.f32 %v3689, %v3938
  %v3988 = vadd.f32 %v3690, %v3939
  %v3989 = vadd.f32 %v3691, %v3940
  %3990 = vset.pattern.permute.xlu0 13
  %3991 = vperm.xlu0 %3990, %v63
  %v3992 = vpop.permute.xlu0 %3991
  %3994 = vset.pattern.permute.xlu0 13
  %3995 = vperm.xlu0 %3994, %v64
  %v3996 = vpop.permute.xlu0 %3995
  %3998 = vset.pattern.permute.xlu0 13
  %3999 = vperm.xlu0 %3998, %v65
  %v4000 = vpop.permute.xlu0 %3999
  %4002 = vset.pattern.permute.xlu0 13
  %4003 = vperm.xlu0 %4002, %v66
  %v4004 = vpop.permute.xlu0 %4003
  %4006 = vset.pattern.permute.xlu0 13
  %4007 = vperm.xlu0 %4006, %v67
  %v4008 = vpop.permute.xlu0 %4007
  %4010 = vset.pattern.permute.xlu0 13
  %4011 = vperm.xlu0 %4010, %v68
  %v4012 = vpop.permute.xlu0 %4011
  %4014 = vset.pattern.permute.xlu0 13
  %4015 = vperm.xlu0 %4014, %v69
  %v4016 = vpop.permute.xlu0 %4015
  %4018 = vset.pattern.permute.xlu0 13
  %4019 = vperm.xlu0 %4018, %v70
  %v4020 = vpop.permute.xlu0 %4019
  %4022 = vset.pattern.permute.xlu0 13
  %4023 = vperm.xlu0 %4022, %v71
  %v4024 = vpop.permute.xlu0 %4023
  %4026 = vset.pattern.permute.xlu0 13
  %4027 = vperm.xlu0 %4026, %v72
  %v4028 = vpop.permute.xlu0 %4027
  %4030 = vset.pattern.permute.xlu0 13
  %4031 = vperm.xlu0 %4030, %v73
  %v4032 = vpop.permute.xlu0 %4031
  %4034 = vset.pattern.permute.xlu0 13
  %4035 = vperm.xlu0 %4034, %v74
  %v4036 = vpop.permute.xlu0 %4035
  %4038 = vset.pattern.permute.xlu0 13
  %4039 = vperm.xlu0 %4038, %v75
  %v4040 = vpop.permute.xlu0 %4039
  %4042 = vset.pattern.permute.xlu0 13
  %4043 = vperm.xlu0 %4042, %v76
  %v4044 = vpop.permute.xlu0 %4043
  %4046 = vset.pattern.permute.xlu0 13
  %4047 = vperm.xlu0 %4046, %v77
  %v4048 = vpop.permute.xlu0 %4047
  %4050 = vset.pattern.permute.xlu0 13
  %4051 = vperm.xlu0 %4050, %v78
  %v4052 = vpop.permute.xlu0 %4051
  %4054 = vset.pattern.permute.xlu0 13
  %4055 = vperm.xlu0 %4054, %v79
  %v4056 = vpop.permute.xlu0 %4055
  %4058 = vset.pattern.permute.xlu0 13
  %4059 = vperm.xlu0 %4058, %v80
  %v4060 = vpop.permute.xlu0 %4059
  %4062 = vset.pattern.permute.xlu0 13
  %4063 = vperm.xlu0 %4062, %v81
  %v4064 = vpop.permute.xlu0 %4063
  %4066 = vset.pattern.permute.xlu0 13
  %4067 = vperm.xlu0 %4066, %v82
  %v4068 = vpop.permute.xlu0 %4067
  %4070 = vset.pattern.permute.xlu0 13
  %4071 = vperm.xlu0 %4070, %v83
  %v4072 = vpop.permute.xlu0 %4071
  %4074 = vset.pattern.permute.xlu0 13
  %4075 = vperm.xlu0 %4074, %v84
  %v4076 = vpop.permute.xlu0 %4075
  %4078 = vset.pattern.permute.xlu0 13
  %4079 = vperm.xlu0 %4078, %v85
  %v4080 = vpop.permute.xlu0 %4079
  %4082 = vset.pattern.permute.xlu0 13
  %4083 = vperm.xlu0 %4082, %v86
  %v4084 = vpop.permute.xlu0 %4083
  %4086 = vset.pattern.permute.xlu0 13
  %4087 = vperm.xlu0 %4086, %v87
  %v4088 = vpop.permute.xlu0 %4087
  %4090 = vset.pattern.permute.xlu0 13
  %4091 = vperm.xlu0 %4090, %v88
  %v4092 = vpop.permute.xlu0 %4091
  %4094 = vset.pattern.permute.xlu0 13
  %4095 = vperm.xlu0 %4094, %v89
  %v4096 = vpop.permute.xlu0 %4095
  %4098 = vset.pattern.permute.xlu0 13
  %4099 = vperm.xlu0 %4098, %v90
  %v4100 = vpop.permute.xlu0 %4099
  %4102 = vset.pattern.permute.xlu0 13
  %4103 = vperm.xlu0 %4102, %v91
  %v4104 = vpop.permute.xlu0 %4103
  %4106 = vset.pattern.permute.xlu0 13
  %4107 = vperm.xlu0 %4106, %v92
  %v4108 = vpop.permute.xlu0 %4107
  %4110 = vset.pattern.permute.xlu0 13
  %4111 = vperm.xlu0 %4110, %v93
  %v4112 = vpop.permute.xlu0 %4111
  %4114 = vset.pattern.permute.xlu0 13
  %4115 = vperm.xlu0 %4114, %v94
  %v4116 = vpop.permute.xlu0 %4115
  %4118 = vset.pattern.permute.xlu0 13
  %4119 = vperm.xlu0 %4118, %v95
  %v4120 = vpop.permute.xlu0 %4119
  %4122 = vset.pattern.permute.xlu0 13
  %4123 = vperm.xlu0 %4122, %v96
  %v4124 = vpop.permute.xlu0 %4123
  %4126 = vset.pattern.permute.xlu0 13
  %4127 = vperm.xlu0 %4126, %v97
  %v4128 = vpop.permute.xlu0 %4127
  %4130 = vset.pattern.permute.xlu0 13
  %4131 = vperm.xlu0 %4130, %v98
  %v4132 = vpop.permute.xlu0 %4131
  %4134 = vset.pattern.permute.xlu0 13
  %4135 = vperm.xlu0 %4134, %v99
  %v4136 = vpop.permute.xlu0 %4135
  %4138 = vset.pattern.permute.xlu0 13
  %4139 = vperm.xlu0 %4138, %v100
  %v4140 = vpop.permute.xlu0 %4139
  %4142 = vset.pattern.permute.xlu0 13
  %4143 = vperm.xlu0 %4142, %v101
  %v4144 = vpop.permute.xlu0 %4143
  %4146 = vset.pattern.permute.xlu0 13
  %4147 = vperm.xlu0 %4146, %v102
  %v4148 = vpop.permute.xlu0 %4147
  %4150 = vset.pattern.permute.xlu0 13
  %4151 = vperm.xlu0 %4150, %v103
  %v4152 = vpop.permute.xlu0 %4151
  %4154 = vset.pattern.permute.xlu0 13
  %4155 = vperm.xlu0 %4154, %v104
  %v4156 = vpop.permute.xlu0 %4155
  %4158 = vset.pattern.permute.xlu0 13
  %4159 = vperm.xlu0 %4158, %v105
  %v4160 = vpop.permute.xlu0 %4159
  %4162 = vset.pattern.permute.xlu0 13
  %4163 = vperm.xlu0 %4162, %v106
  %v4164 = vpop.permute.xlu0 %4163
  %4166 = vset.pattern.permute.xlu0 13
  %4167 = vperm.xlu0 %4166, %v107
  %v4168 = vpop.permute.xlu0 %4167
  %4170 = vset.pattern.permute.xlu0 13
  %4171 = vperm.xlu0 %4170, %v108
  %v4172 = vpop.permute.xlu0 %4171
  %4174 = vset.pattern.permute.xlu0 13
  %4175 = vperm.xlu0 %4174, %v109
  %v4176 = vpop.permute.xlu0 %4175
  %4178 = vset.pattern.permute.xlu0 13
  %4179 = vperm.xlu0 %4178, %v110
  %v4180 = vpop.permute.xlu0 %4179
  %4182 = vset.pattern.permute.xlu0 13
  %4183 = vperm.xlu0 %4182, %v111
  %v4184 = vpop.permute.xlu0 %4183
  %v4186 = vlaneseq
  %v4187 = vshrl.u32 %v4186, 7
  %v4188 = vsub.s32 5, %v4187
  %v4189 = vrot.slane %v115, %v4188
  %v4190 = vmul.f32 %v3992, %v4189
  %v4191 = vmul.f32 %v3996, %v4189
  %v4192 = vmul.f32 %v4000, %v4189
  %v4193 = vmul.f32 %v4004, %v4189
  %v4194 = vmul.f32 %v4008, %v4189
  %v4195 = vmul.f32 %v4012, %v4189
  %v4196 = vmul.f32 %v4016, %v4189
  %v4197 = vmul.f32 %v4020, %v4189
  %v4198 = vmul.f32 %v4024, %v4189
  %v4199 = vmul.f32 %v4028, %v4189
  %v4200 = vmul.f32 %v4032, %v4189
  %v4201 = vmul.f32 %v4036, %v4189
  %v4202 = vmul.f32 %v4040, %v4189
  %v4203 = vmul.f32 %v4044, %v4189
  %v4204 = vmul.f32 %v4048, %v4189
  %v4205 = vmul.f32 %v4052, %v4189
  %v4206 = vmul.f32 %v4056, %v4189
  %v4207 = vmul.f32 %v4060, %v4189
  %v4208 = vmul.f32 %v4064, %v4189
  %v4209 = vmul.f32 %v4068, %v4189
  %v4210 = vmul.f32 %v4072, %v4189
  %v4211 = vmul.f32 %v4076, %v4189
  %v4212 = vmul.f32 %v4080, %v4189
  %v4213 = vmul.f32 %v4084, %v4189
  %v4214 = vmul.f32 %v4088, %v4189
  %v4215 = vmul.f32 %v4092, %v4189
  %v4216 = vmul.f32 %v4096, %v4189
  %v4217 = vmul.f32 %v4100, %v4189
  %v4218 = vmul.f32 %v4104, %v4189
  %v4219 = vmul.f32 %v4108, %v4189
  %v4220 = vmul.f32 %v4112, %v4189
  %v4221 = vmul.f32 %v4116, %v4189
  %v4222 = vmul.f32 %v4120, %v4189
  %v4223 = vmul.f32 %v4124, %v4189
  %v4224 = vmul.f32 %v4128, %v4189
  %v4225 = vmul.f32 %v4132, %v4189
  %v4226 = vmul.f32 %v4136, %v4189
  %v4227 = vmul.f32 %v4140, %v4189
  %v4228 = vmul.f32 %v4144, %v4189
  %v4229 = vmul.f32 %v4148, %v4189
  %v4230 = vmul.f32 %v4152, %v4189
  %v4231 = vmul.f32 %v4156, %v4189
  %v4232 = vmul.f32 %v4160, %v4189
  %v4233 = vmul.f32 %v4164, %v4189
  %v4234 = vmul.f32 %v4168, %v4189
  %v4235 = vmul.f32 %v4172, %v4189
  %v4236 = vmul.f32 %v4176, %v4189
  %v4237 = vmul.f32 %v4180, %v4189
  %v4238 = vmul.f32 %v4184, %v4189
  %v4239 = vadd.f32 %v3941, %v4190
  %v4240 = vadd.f32 %v3942, %v4191
  %v4241 = vadd.f32 %v3943, %v4192
  %v4242 = vadd.f32 %v3944, %v4193
  %v4243 = vadd.f32 %v3945, %v4194
  %v4244 = vadd.f32 %v3946, %v4195
  %v4245 = vadd.f32 %v3947, %v4196
  %v4246 = vadd.f32 %v3948, %v4197
  %v4247 = vadd.f32 %v3949, %v4198
  %v4248 = vadd.f32 %v3950, %v4199
  %v4249 = vadd.f32 %v3951, %v4200
  %v4250 = vadd.f32 %v3952, %v4201
  %v4251 = vadd.f32 %v3953, %v4202
  %v4252 = vadd.f32 %v3954, %v4203
  %v4253 = vadd.f32 %v3955, %v4204
  %v4254 = vadd.f32 %v3956, %v4205
  %v4255 = vadd.f32 %v3957, %v4206
  %v4256 = vadd.f32 %v3958, %v4207
  %v4257 = vadd.f32 %v3959, %v4208
  %v4258 = vadd.f32 %v3960, %v4209
  %v4259 = vadd.f32 %v3961, %v4210
  %v4260 = vadd.f32 %v3962, %v4211
  %v4261 = vadd.f32 %v3963, %v4212
  %v4262 = vadd.f32 %v3964, %v4213
  %v4263 = vadd.f32 %v3965, %v4214
  %v4264 = vadd.f32 %v3966, %v4215
  %v4265 = vadd.f32 %v3967, %v4216
  %v4266 = vadd.f32 %v3968, %v4217
  %v4267 = vadd.f32 %v3969, %v4218
  %v4268 = vadd.f32 %v3970, %v4219
  %v4269 = vadd.f32 %v3971, %v4220
  %v4270 = vadd.f32 %v3972, %v4221
  %v4271 = vadd.f32 %v3973, %v4222
  %v4272 = vadd.f32 %v3974, %v4223
  %v4273 = vadd.f32 %v3975, %v4224
  %v4274 = vadd.f32 %v3976, %v4225
  %v4275 = vadd.f32 %v3977, %v4226
  %v4276 = vadd.f32 %v3978, %v4227
  %v4277 = vadd.f32 %v3979, %v4228
  %v4278 = vadd.f32 %v3980, %v4229
  %v4279 = vadd.f32 %v3981, %v4230
  %v4280 = vadd.f32 %v3982, %v4231
  %v4281 = vadd.f32 %v3983, %v4232
  %v4282 = vadd.f32 %v3984, %v4233
  %v4283 = vadd.f32 %v3985, %v4234
  %v4284 = vadd.f32 %v3986, %v4235
  %v4285 = vadd.f32 %v3987, %v4236
  %v4286 = vadd.f32 %v3988, %v4237
  %v4287 = vadd.f32 %v3989, %v4238
  %4288 = vset.pattern.permute.xlu0 14
  %4289 = vperm.xlu0 %4288, %v63
  %v4290 = vpop.permute.xlu0 %4289
  %4292 = vset.pattern.permute.xlu0 14
  %4293 = vperm.xlu0 %4292, %v64
  %v4294 = vpop.permute.xlu0 %4293
  %4296 = vset.pattern.permute.xlu0 14
  %4297 = vperm.xlu0 %4296, %v65
  %v4298 = vpop.permute.xlu0 %4297
  %4300 = vset.pattern.permute.xlu0 14
  %4301 = vperm.xlu0 %4300, %v66
  %v4302 = vpop.permute.xlu0 %4301
  %4304 = vset.pattern.permute.xlu0 14
  %4305 = vperm.xlu0 %4304, %v67
  %v4306 = vpop.permute.xlu0 %4305
  %4308 = vset.pattern.permute.xlu0 14
  %4309 = vperm.xlu0 %4308, %v68
  %v4310 = vpop.permute.xlu0 %4309
  %4312 = vset.pattern.permute.xlu0 14
  %4313 = vperm.xlu0 %4312, %v69
  %v4314 = vpop.permute.xlu0 %4313
  %4316 = vset.pattern.permute.xlu0 14
  %4317 = vperm.xlu0 %4316, %v70
  %v4318 = vpop.permute.xlu0 %4317
  %4320 = vset.pattern.permute.xlu0 14
  %4321 = vperm.xlu0 %4320, %v71
  %v4322 = vpop.permute.xlu0 %4321
  %4324 = vset.pattern.permute.xlu0 14
  %4325 = vperm.xlu0 %4324, %v72
  %v4326 = vpop.permute.xlu0 %4325
  %4328 = vset.pattern.permute.xlu0 14
  %4329 = vperm.xlu0 %4328, %v73
  %v4330 = vpop.permute.xlu0 %4329
  %4332 = vset.pattern.permute.xlu0 14
  %4333 = vperm.xlu0 %4332, %v74
  %v4334 = vpop.permute.xlu0 %4333
  %4336 = vset.pattern.permute.xlu0 14
  %4337 = vperm.xlu0 %4336, %v75
  %v4338 = vpop.permute.xlu0 %4337
  %4340 = vset.pattern.permute.xlu0 14
  %4341 = vperm.xlu0 %4340, %v76
  %v4342 = vpop.permute.xlu0 %4341
  %4344 = vset.pattern.permute.xlu0 14
  %4345 = vperm.xlu0 %4344, %v77
  %v4346 = vpop.permute.xlu0 %4345
  %4348 = vset.pattern.permute.xlu0 14
  %4349 = vperm.xlu0 %4348, %v78
  %v4350 = vpop.permute.xlu0 %4349
  %4352 = vset.pattern.permute.xlu0 14
  %4353 = vperm.xlu0 %4352, %v79
  %v4354 = vpop.permute.xlu0 %4353
  %4356 = vset.pattern.permute.xlu0 14
  %4357 = vperm.xlu0 %4356, %v80
  %v4358 = vpop.permute.xlu0 %4357
  %4360 = vset.pattern.permute.xlu0 14
  %4361 = vperm.xlu0 %4360, %v81
  %v4362 = vpop.permute.xlu0 %4361
  %4364 = vset.pattern.permute.xlu0 14
  %4365 = vperm.xlu0 %4364, %v82
  %v4366 = vpop.permute.xlu0 %4365
  %4368 = vset.pattern.permute.xlu0 14
  %4369 = vperm.xlu0 %4368, %v83
  %v4370 = vpop.permute.xlu0 %4369
  %4372 = vset.pattern.permute.xlu0 14
  %4373 = vperm.xlu0 %4372, %v84
  %v4374 = vpop.permute.xlu0 %4373
  %4376 = vset.pattern.permute.xlu0 14
  %4377 = vperm.xlu0 %4376, %v85
  %v4378 = vpop.permute.xlu0 %4377
  %4380 = vset.pattern.permute.xlu0 14
  %4381 = vperm.xlu0 %4380, %v86
  %v4382 = vpop.permute.xlu0 %4381
  %4384 = vset.pattern.permute.xlu0 14
  %4385 = vperm.xlu0 %4384, %v87
  %v4386 = vpop.permute.xlu0 %4385
  %4388 = vset.pattern.permute.xlu0 14
  %4389 = vperm.xlu0 %4388, %v88
  %v4390 = vpop.permute.xlu0 %4389
  %4392 = vset.pattern.permute.xlu0 14
  %4393 = vperm.xlu0 %4392, %v89
  %v4394 = vpop.permute.xlu0 %4393
  %4396 = vset.pattern.permute.xlu0 14
  %4397 = vperm.xlu0 %4396, %v90
  %v4398 = vpop.permute.xlu0 %4397
  %4400 = vset.pattern.permute.xlu0 14
  %4401 = vperm.xlu0 %4400, %v91
  %v4402 = vpop.permute.xlu0 %4401
  %4404 = vset.pattern.permute.xlu0 14
  %4405 = vperm.xlu0 %4404, %v92
  %v4406 = vpop.permute.xlu0 %4405
  %4408 = vset.pattern.permute.xlu0 14
  %4409 = vperm.xlu0 %4408, %v93
  %v4410 = vpop.permute.xlu0 %4409
  %4412 = vset.pattern.permute.xlu0 14
  %4413 = vperm.xlu0 %4412, %v94
  %v4414 = vpop.permute.xlu0 %4413
  %4416 = vset.pattern.permute.xlu0 14
  %4417 = vperm.xlu0 %4416, %v95
  %v4418 = vpop.permute.xlu0 %4417
  %4420 = vset.pattern.permute.xlu0 14
  %4421 = vperm.xlu0 %4420, %v96
  %v4422 = vpop.permute.xlu0 %4421
  %4424 = vset.pattern.permute.xlu0 14
  %4425 = vperm.xlu0 %4424, %v97
  %v4426 = vpop.permute.xlu0 %4425
  %4428 = vset.pattern.permute.xlu0 14
  %4429 = vperm.xlu0 %4428, %v98
  %v4430 = vpop.permute.xlu0 %4429
  %4432 = vset.pattern.permute.xlu0 14
  %4433 = vperm.xlu0 %4432, %v99
  %v4434 = vpop.permute.xlu0 %4433
  %4436 = vset.pattern.permute.xlu0 14
  %4437 = vperm.xlu0 %4436, %v100
  %v4438 = vpop.permute.xlu0 %4437
  %4440 = vset.pattern.permute.xlu0 14
  %4441 = vperm.xlu0 %4440, %v101
  %v4442 = vpop.permute.xlu0 %4441
  %4444 = vset.pattern.permute.xlu0 14
  %4445 = vperm.xlu0 %4444, %v102
  %v4446 = vpop.permute.xlu0 %4445
  %4448 = vset.pattern.permute.xlu0 14
  %4449 = vperm.xlu0 %4448, %v103
  %v4450 = vpop.permute.xlu0 %4449
  %4452 = vset.pattern.permute.xlu0 14
  %4453 = vperm.xlu0 %4452, %v104
  %v4454 = vpop.permute.xlu0 %4453
  %4456 = vset.pattern.permute.xlu0 14
  %4457 = vperm.xlu0 %4456, %v105
  %v4458 = vpop.permute.xlu0 %4457
  %4460 = vset.pattern.permute.xlu0 14
  %4461 = vperm.xlu0 %4460, %v106
  %v4462 = vpop.permute.xlu0 %4461
  %4464 = vset.pattern.permute.xlu0 14
  %4465 = vperm.xlu0 %4464, %v107
  %v4466 = vpop.permute.xlu0 %4465
  %4468 = vset.pattern.permute.xlu0 14
  %4469 = vperm.xlu0 %4468, %v108
  %v4470 = vpop.permute.xlu0 %4469
  %4472 = vset.pattern.permute.xlu0 14
  %4473 = vperm.xlu0 %4472, %v109
  %v4474 = vpop.permute.xlu0 %4473
  %4476 = vset.pattern.permute.xlu0 14
  %4477 = vperm.xlu0 %4476, %v110
  %v4478 = vpop.permute.xlu0 %4477
  %4480 = vset.pattern.permute.xlu0 14
  %4481 = vperm.xlu0 %4480, %v111
  %v4482 = vpop.permute.xlu0 %4481
  %v4484 = vlaneseq
  %v4485 = vshrl.u32 %v4484, 7
  %v4486 = vsub.s32 6, %v4485
  %v4487 = vrot.slane %v115, %v4486
  %v4488 = vmul.f32 %v4290, %v4487
  %v4489 = vmul.f32 %v4294, %v4487
  %v4490 = vmul.f32 %v4298, %v4487
  %v4491 = vmul.f32 %v4302, %v4487
  %v4492 = vmul.f32 %v4306, %v4487
  %v4493 = vmul.f32 %v4310, %v4487
  %v4494 = vmul.f32 %v4314, %v4487
  %v4495 = vmul.f32 %v4318, %v4487
  %v4496 = vmul.f32 %v4322, %v4487
  %v4497 = vmul.f32 %v4326, %v4487
  %v4498 = vmul.f32 %v4330, %v4487
  %v4499 = vmul.f32 %v4334, %v4487
  %v4500 = vmul.f32 %v4338, %v4487
  %v4501 = vmul.f32 %v4342, %v4487
  %v4502 = vmul.f32 %v4346, %v4487
  %v4503 = vmul.f32 %v4350, %v4487
  %v4504 = vmul.f32 %v4354, %v4487
  %v4505 = vmul.f32 %v4358, %v4487
  %v4506 = vmul.f32 %v4362, %v4487
  %v4507 = vmul.f32 %v4366, %v4487
  %v4508 = vmul.f32 %v4370, %v4487
  %v4509 = vmul.f32 %v4374, %v4487
  %v4510 = vmul.f32 %v4378, %v4487
  %v4511 = vmul.f32 %v4382, %v4487
  %v4512 = vmul.f32 %v4386, %v4487
  %v4513 = vmul.f32 %v4390, %v4487
  %v4514 = vmul.f32 %v4394, %v4487
  %v4515 = vmul.f32 %v4398, %v4487
  %v4516 = vmul.f32 %v4402, %v4487
  %v4517 = vmul.f32 %v4406, %v4487
  %v4518 = vmul.f32 %v4410, %v4487
  %v4519 = vmul.f32 %v4414, %v4487
  %v4520 = vmul.f32 %v4418, %v4487
  %v4521 = vmul.f32 %v4422, %v4487
  %v4522 = vmul.f32 %v4426, %v4487
  %v4523 = vmul.f32 %v4430, %v4487
  %v4524 = vmul.f32 %v4434, %v4487
  %v4525 = vmul.f32 %v4438, %v4487
  %v4526 = vmul.f32 %v4442, %v4487
  %v4527 = vmul.f32 %v4446, %v4487
  %v4528 = vmul.f32 %v4450, %v4487
  %v4529 = vmul.f32 %v4454, %v4487
  %v4530 = vmul.f32 %v4458, %v4487
  %v4531 = vmul.f32 %v4462, %v4487
  %v4532 = vmul.f32 %v4466, %v4487
  %v4533 = vmul.f32 %v4470, %v4487
  %v4534 = vmul.f32 %v4474, %v4487
  %v4535 = vmul.f32 %v4478, %v4487
  %v4536 = vmul.f32 %v4482, %v4487
  %v4537 = vadd.f32 %v4239, %v4488
  %v4538 = vadd.f32 %v4240, %v4489
  %v4539 = vadd.f32 %v4241, %v4490
  %v4540 = vadd.f32 %v4242, %v4491
  %v4541 = vadd.f32 %v4243, %v4492
  %v4542 = vadd.f32 %v4244, %v4493
  %v4543 = vadd.f32 %v4245, %v4494
  %v4544 = vadd.f32 %v4246, %v4495
  %v4545 = vadd.f32 %v4247, %v4496
  %v4546 = vadd.f32 %v4248, %v4497
  %v4547 = vadd.f32 %v4249, %v4498
  %v4548 = vadd.f32 %v4250, %v4499
  %v4549 = vadd.f32 %v4251, %v4500
  %v4550 = vadd.f32 %v4252, %v4501
  %v4551 = vadd.f32 %v4253, %v4502
  %v4552 = vadd.f32 %v4254, %v4503
  %v4553 = vadd.f32 %v4255, %v4504
  %v4554 = vadd.f32 %v4256, %v4505
  %v4555 = vadd.f32 %v4257, %v4506
  %v4556 = vadd.f32 %v4258, %v4507
  %v4557 = vadd.f32 %v4259, %v4508
  %v4558 = vadd.f32 %v4260, %v4509
  %v4559 = vadd.f32 %v4261, %v4510
  %v4560 = vadd.f32 %v4262, %v4511
  %v4561 = vadd.f32 %v4263, %v4512
  %v4562 = vadd.f32 %v4264, %v4513
  %v4563 = vadd.f32 %v4265, %v4514
  %v4564 = vadd.f32 %v4266, %v4515
  %v4565 = vadd.f32 %v4267, %v4516
  %v4566 = vadd.f32 %v4268, %v4517
  %v4567 = vadd.f32 %v4269, %v4518
  %v4568 = vadd.f32 %v4270, %v4519
  %v4569 = vadd.f32 %v4271, %v4520
  %v4570 = vadd.f32 %v4272, %v4521
  %v4571 = vadd.f32 %v4273, %v4522
  %v4572 = vadd.f32 %v4274, %v4523
  %v4573 = vadd.f32 %v4275, %v4524
  %v4574 = vadd.f32 %v4276, %v4525
  %v4575 = vadd.f32 %v4277, %v4526
  %v4576 = vadd.f32 %v4278, %v4527
  %v4577 = vadd.f32 %v4279, %v4528
  %v4578 = vadd.f32 %v4280, %v4529
  %v4579 = vadd.f32 %v4281, %v4530
  %v4580 = vadd.f32 %v4282, %v4531
  %v4581 = vadd.f32 %v4283, %v4532
  %v4582 = vadd.f32 %v4284, %v4533
  %v4583 = vadd.f32 %v4285, %v4534
  %v4584 = vadd.f32 %v4286, %v4535
  %v4585 = vadd.f32 %v4287, %v4536
  %4586 = vset.pattern.permute.xlu0 15
  %4587 = vperm.xlu0 %4586, %v63
  %v4588 = vpop.permute.xlu0 %4587
  %4590 = vset.pattern.permute.xlu0 15
  %4591 = vperm.xlu0 %4590, %v64
  %v4592 = vpop.permute.xlu0 %4591
  %4594 = vset.pattern.permute.xlu0 15
  %4595 = vperm.xlu0 %4594, %v65
  %v4596 = vpop.permute.xlu0 %4595
  %4598 = vset.pattern.permute.xlu0 15
  %4599 = vperm.xlu0 %4598, %v66
  %v4600 = vpop.permute.xlu0 %4599
  %4602 = vset.pattern.permute.xlu0 15
  %4603 = vperm.xlu0 %4602, %v67
  %v4604 = vpop.permute.xlu0 %4603
  %4606 = vset.pattern.permute.xlu0 15
  %4607 = vperm.xlu0 %4606, %v68
  %v4608 = vpop.permute.xlu0 %4607
  %4610 = vset.pattern.permute.xlu0 15
  %4611 = vperm.xlu0 %4610, %v69
  %v4612 = vpop.permute.xlu0 %4611
  %4614 = vset.pattern.permute.xlu0 15
  %4615 = vperm.xlu0 %4614, %v70
  %v4616 = vpop.permute.xlu0 %4615
  %4618 = vset.pattern.permute.xlu0 15
  %4619 = vperm.xlu0 %4618, %v71
  %v4620 = vpop.permute.xlu0 %4619
  %4622 = vset.pattern.permute.xlu0 15
  %4623 = vperm.xlu0 %4622, %v72
  %v4624 = vpop.permute.xlu0 %4623
  %4626 = vset.pattern.permute.xlu0 15
  %4627 = vperm.xlu0 %4626, %v73
  %v4628 = vpop.permute.xlu0 %4627
  %4630 = vset.pattern.permute.xlu0 15
  %4631 = vperm.xlu0 %4630, %v74
  %v4632 = vpop.permute.xlu0 %4631
  %4634 = vset.pattern.permute.xlu0 15
  %4635 = vperm.xlu0 %4634, %v75
  %v4636 = vpop.permute.xlu0 %4635
  %4638 = vset.pattern.permute.xlu0 15
  %4639 = vperm.xlu0 %4638, %v76
  %v4640 = vpop.permute.xlu0 %4639
  %4642 = vset.pattern.permute.xlu0 15
  %4643 = vperm.xlu0 %4642, %v77
  %v4644 = vpop.permute.xlu0 %4643
  %4646 = vset.pattern.permute.xlu0 15
  %4647 = vperm.xlu0 %4646, %v78
  %v4648 = vpop.permute.xlu0 %4647
  %4650 = vset.pattern.permute.xlu0 15
  %4651 = vperm.xlu0 %4650, %v79
  %v4652 = vpop.permute.xlu0 %4651
  %4654 = vset.pattern.permute.xlu0 15
  %4655 = vperm.xlu0 %4654, %v80
  %v4656 = vpop.permute.xlu0 %4655
  %4658 = vset.pattern.permute.xlu0 15
  %4659 = vperm.xlu0 %4658, %v81
  %v4660 = vpop.permute.xlu0 %4659
  %4662 = vset.pattern.permute.xlu0 15
  %4663 = vperm.xlu0 %4662, %v82
  %v4664 = vpop.permute.xlu0 %4663
  %4666 = vset.pattern.permute.xlu0 15
  %4667 = vperm.xlu0 %4666, %v83
  %v4668 = vpop.permute.xlu0 %4667
  %4670 = vset.pattern.permute.xlu0 15
  %4671 = vperm.xlu0 %4670, %v84
  %v4672 = vpop.permute.xlu0 %4671
  %4674 = vset.pattern.permute.xlu0 15
  %4675 = vperm.xlu0 %4674, %v85
  %v4676 = vpop.permute.xlu0 %4675
  %4678 = vset.pattern.permute.xlu0 15
  %4679 = vperm.xlu0 %4678, %v86
  %v4680 = vpop.permute.xlu0 %4679
  %4682 = vset.pattern.permute.xlu0 15
  %4683 = vperm.xlu0 %4682, %v87
  %v4684 = vpop.permute.xlu0 %4683
  %4686 = vset.pattern.permute.xlu0 15
  %4687 = vperm.xlu0 %4686, %v88
  %v4688 = vpop.permute.xlu0 %4687
  %4690 = vset.pattern.permute.xlu0 15
  %4691 = vperm.xlu0 %4690, %v89
  %v4692 = vpop.permute.xlu0 %4691
  %4694 = vset.pattern.permute.xlu0 15
  %4695 = vperm.xlu0 %4694, %v90
  %v4696 = vpop.permute.xlu0 %4695
  %4698 = vset.pattern.permute.xlu0 15
  %4699 = vperm.xlu0 %4698, %v91
  %v4700 = vpop.permute.xlu0 %4699
  %4702 = vset.pattern.permute.xlu0 15
  %4703 = vperm.xlu0 %4702, %v92
  %v4704 = vpop.permute.xlu0 %4703
  %4706 = vset.pattern.permute.xlu0 15
  %4707 = vperm.xlu0 %4706, %v93
  %v4708 = vpop.permute.xlu0 %4707
  %4710 = vset.pattern.permute.xlu0 15
  %4711 = vperm.xlu0 %4710, %v94
  %v4712 = vpop.permute.xlu0 %4711
  %4714 = vset.pattern.permute.xlu0 15
  %4715 = vperm.xlu0 %4714, %v95
  %v4716 = vpop.permute.xlu0 %4715
  %4718 = vset.pattern.permute.xlu0 15
  %4719 = vperm.xlu0 %4718, %v96
  %v4720 = vpop.permute.xlu0 %4719
  %4722 = vset.pattern.permute.xlu0 15
  %4723 = vperm.xlu0 %4722, %v97
  %v4724 = vpop.permute.xlu0 %4723
  %4726 = vset.pattern.permute.xlu0 15
  %4727 = vperm.xlu0 %4726, %v98
  %v4728 = vpop.permute.xlu0 %4727
  %4730 = vset.pattern.permute.xlu0 15
  %4731 = vperm.xlu0 %4730, %v99
  %v4732 = vpop.permute.xlu0 %4731
  %4734 = vset.pattern.permute.xlu0 15
  %4735 = vperm.xlu0 %4734, %v100
  %v4736 = vpop.permute.xlu0 %4735
  %4738 = vset.pattern.permute.xlu0 15
  %4739 = vperm.xlu0 %4738, %v101
  %v4740 = vpop.permute.xlu0 %4739
  %4742 = vset.pattern.permute.xlu0 15
  %4743 = vperm.xlu0 %4742, %v102
  %v4744 = vpop.permute.xlu0 %4743
  %4746 = vset.pattern.permute.xlu0 15
  %4747 = vperm.xlu0 %4746, %v103
  %v4748 = vpop.permute.xlu0 %4747
  %4750 = vset.pattern.permute.xlu0 15
  %4751 = vperm.xlu0 %4750, %v104
  %v4752 = vpop.permute.xlu0 %4751
  %4754 = vset.pattern.permute.xlu0 15
  %4755 = vperm.xlu0 %4754, %v105
  %v4756 = vpop.permute.xlu0 %4755
  %4758 = vset.pattern.permute.xlu0 15
  %4759 = vperm.xlu0 %4758, %v106
  %v4760 = vpop.permute.xlu0 %4759
  %4762 = vset.pattern.permute.xlu0 15
  %4763 = vperm.xlu0 %4762, %v107
  %v4764 = vpop.permute.xlu0 %4763
  %4766 = vset.pattern.permute.xlu0 15
  %4767 = vperm.xlu0 %4766, %v108
  %v4768 = vpop.permute.xlu0 %4767
  %4770 = vset.pattern.permute.xlu0 15
  %4771 = vperm.xlu0 %4770, %v109
  %v4772 = vpop.permute.xlu0 %4771
  %4774 = vset.pattern.permute.xlu0 15
  %4775 = vperm.xlu0 %4774, %v110
  %v4776 = vpop.permute.xlu0 %4775
  %4778 = vset.pattern.permute.xlu0 15
  %4779 = vperm.xlu0 %4778, %v111
  %v4780 = vpop.permute.xlu0 %4779
  %v4782 = vlaneseq
  %v4783 = vshrl.u32 %v4782, 7
  %v4784 = vsub.s32 7, %v4783
  %v4785 = vrot.slane %v115, %v4784
  %v4786 = vmul.f32 %v4588, %v4785
  %v4787 = vmul.f32 %v4592, %v4785
  %v4788 = vmul.f32 %v4596, %v4785
  %v4789 = vmul.f32 %v4600, %v4785
  %v4790 = vmul.f32 %v4604, %v4785
  %v4791 = vmul.f32 %v4608, %v4785
  %v4792 = vmul.f32 %v4612, %v4785
  %v4793 = vmul.f32 %v4616, %v4785
  %v4794 = vmul.f32 %v4620, %v4785
  %v4795 = vmul.f32 %v4624, %v4785
  %v4796 = vmul.f32 %v4628, %v4785
  %v4797 = vmul.f32 %v4632, %v4785
  %v4798 = vmul.f32 %v4636, %v4785
  %v4799 = vmul.f32 %v4640, %v4785
  %v4800 = vmul.f32 %v4644, %v4785
  %v4801 = vmul.f32 %v4648, %v4785
  %v4802 = vmul.f32 %v4652, %v4785
  %v4803 = vmul.f32 %v4656, %v4785
  %v4804 = vmul.f32 %v4660, %v4785
  %v4805 = vmul.f32 %v4664, %v4785
  %v4806 = vmul.f32 %v4668, %v4785
  %v4807 = vmul.f32 %v4672, %v4785
  %v4808 = vmul.f32 %v4676, %v4785
  %v4809 = vmul.f32 %v4680, %v4785
  %v4810 = vmul.f32 %v4684, %v4785
  %v4811 = vmul.f32 %v4688, %v4785
  %v4812 = vmul.f32 %v4692, %v4785
  %v4813 = vmul.f32 %v4696, %v4785
  %v4814 = vmul.f32 %v4700, %v4785
  %v4815 = vmul.f32 %v4704, %v4785
  %v4816 = vmul.f32 %v4708, %v4785
  %v4817 = vmul.f32 %v4712, %v4785
  %v4818 = vmul.f32 %v4716, %v4785
  %v4819 = vmul.f32 %v4720, %v4785
  %v4820 = vmul.f32 %v4724, %v4785
  %v4821 = vmul.f32 %v4728, %v4785
  %v4822 = vmul.f32 %v4732, %v4785
  %v4823 = vmul.f32 %v4736, %v4785
  %v4824 = vmul.f32 %v4740, %v4785
  %v4825 = vmul.f32 %v4744, %v4785
  %v4826 = vmul.f32 %v4748, %v4785
  %v4827 = vmul.f32 %v4752, %v4785
  %v4828 = vmul.f32 %v4756, %v4785
  %v4829 = vmul.f32 %v4760, %v4785
  %v4830 = vmul.f32 %v4764, %v4785
  %v4831 = vmul.f32 %v4768, %v4785
  %v4832 = vmul.f32 %v4772, %v4785
  %v4833 = vmul.f32 %v4776, %v4785
  %v4834 = vmul.f32 %v4780, %v4785
  %v4835 = vadd.f32 %v4537, %v4786
  %v4836 = vadd.f32 %v4538, %v4787
  %v4837 = vadd.f32 %v4539, %v4788
  %v4838 = vadd.f32 %v4540, %v4789
  %v4839 = vadd.f32 %v4541, %v4790
  %v4840 = vadd.f32 %v4542, %v4791
  %v4841 = vadd.f32 %v4543, %v4792
  %v4842 = vadd.f32 %v4544, %v4793
  %v4843 = vadd.f32 %v4545, %v4794
  %v4844 = vadd.f32 %v4546, %v4795
  %v4845 = vadd.f32 %v4547, %v4796
  %v4846 = vadd.f32 %v4548, %v4797
  %v4847 = vadd.f32 %v4549, %v4798
  %v4848 = vadd.f32 %v4550, %v4799
  %v4849 = vadd.f32 %v4551, %v4800
  %v4850 = vadd.f32 %v4552, %v4801
  %v4851 = vadd.f32 %v4553, %v4802
  %v4852 = vadd.f32 %v4554, %v4803
  %v4853 = vadd.f32 %v4555, %v4804
  %v4854 = vadd.f32 %v4556, %v4805
  %v4855 = vadd.f32 %v4557, %v4806
  %v4856 = vadd.f32 %v4558, %v4807
  %v4857 = vadd.f32 %v4559, %v4808
  %v4858 = vadd.f32 %v4560, %v4809
  %v4859 = vadd.f32 %v4561, %v4810
  %v4860 = vadd.f32 %v4562, %v4811
  %v4861 = vadd.f32 %v4563, %v4812
  %v4862 = vadd.f32 %v4564, %v4813
  %v4863 = vadd.f32 %v4565, %v4814
  %v4864 = vadd.f32 %v4566, %v4815
  %v4865 = vadd.f32 %v4567, %v4816
  %v4866 = vadd.f32 %v4568, %v4817
  %v4867 = vadd.f32 %v4569, %v4818
  %v4868 = vadd.f32 %v4570, %v4819
  %v4869 = vadd.f32 %v4571, %v4820
  %v4870 = vadd.f32 %v4572, %v4821
  %v4871 = vadd.f32 %v4573, %v4822
  %v4872 = vadd.f32 %v4574, %v4823
  %v4873 = vadd.f32 %v4575, %v4824
  %v4874 = vadd.f32 %v4576, %v4825
  %v4875 = vadd.f32 %v4577, %v4826
  %v4876 = vadd.f32 %v4578, %v4827
  %v4877 = vadd.f32 %v4579, %v4828
  %v4878 = vadd.f32 %v4580, %v4829
  %v4879 = vadd.f32 %v4581, %v4830
  %v4880 = vadd.f32 %v4582, %v4831
  %v4881 = vadd.f32 %v4583, %v4832
  %v4882 = vadd.f32 %v4584, %v4833
  %v4883 = vadd.f32 %v4585, %v4834
  %v4884 = vld [vmem:[%s2] sm:$0x1]
  %v4886 = vlaneseq
  %v4887 = vshrl.u32 %v4886, 7
  %v4888 = vsub.s32 0, %v4887
  %v4889 = vrot.slane %v4884, %v4888
  %v4891 = vadd.f32 %v4835, %v4889
  %v4892 = vadd.f32 %v4836, %v4889
  %v4893 = vadd.f32 %v4837, %v4889
  %v4894 = vadd.f32 %v4838, %v4889
  %v4895 = vadd.f32 %v4839, %v4889
  %v4896 = vadd.f32 %v4840, %v4889
  %v4897 = vadd.f32 %v4841, %v4889
  %v4898 = vadd.f32 %v4842, %v4889
  %v4899 = vadd.f32 %v4843, %v4889
  %v4900 = vadd.f32 %v4844, %v4889
  %v4901 = vadd.f32 %v4845, %v4889
  %v4902 = vadd.f32 %v4846, %v4889
  %v4903 = vadd.f32 %v4847, %v4889
  %v4904 = vadd.f32 %v4848, %v4889
  %v4905 = vadd.f32 %v4849, %v4889
  %v4906 = vadd.f32 %v4850, %v4889
  %v4907 = vadd.f32 %v4851, %v4889
  %v4908 = vadd.f32 %v4852, %v4889
  %v4909 = vadd.f32 %v4853, %v4889
  %v4910 = vadd.f32 %v4854, %v4889
  %v4911 = vadd.f32 %v4855, %v4889
  %v4912 = vadd.f32 %v4856, %v4889
  %v4913 = vadd.f32 %v4857, %v4889
  %v4914 = vadd.f32 %v4858, %v4889
  %v4915 = vadd.f32 %v4859, %v4889
  %v4916 = vadd.f32 %v4860, %v4889
  %v4917 = vadd.f32 %v4861, %v4889
  %v4918 = vadd.f32 %v4862, %v4889
  %v4919 = vadd.f32 %v4863, %v4889
  %v4920 = vadd.f32 %v4864, %v4889
  %v4921 = vadd.f32 %v4865, %v4889
  %v4922 = vadd.f32 %v4866, %v4889
  %v4923 = vadd.f32 %v4867, %v4889
  %v4924 = vadd.f32 %v4868, %v4889
  %v4925 = vadd.f32 %v4869, %v4889
  %v4926 = vadd.f32 %v4870, %v4889
  %v4927 = vadd.f32 %v4871, %v4889
  %v4928 = vadd.f32 %v4872, %v4889
  %v4929 = vadd.f32 %v4873, %v4889
  %v4930 = vadd.f32 %v4874, %v4889
  %v4931 = vadd.f32 %v4875, %v4889
  %v4932 = vadd.f32 %v4876, %v4889
  %v4933 = vadd.f32 %v4877, %v4889
  %v4934 = vadd.f32 %v4878, %v4889
  %v4935 = vadd.f32 %v4879, %v4889
  %v4936 = vadd.f32 %v4880, %v4889
  %v4937 = vadd.f32 %v4881, %v4889
  %v4938 = vadd.f32 %v4882, %v4889
  %v4939 = vadd.f32 %v4883, %v4889
  %vm4940 = vcmp.ge.f32.partialorder %v4891, 0.0
  %vm4941 = vcmp.ge.f32.partialorder %v4892, 0.0
  %vm4942 = vcmp.ge.f32.partialorder %v4893, 0.0
  %vm4943 = vcmp.ge.f32.partialorder %v4894, 0.0
  %vm4944 = vcmp.ge.f32.partialorder %v4895, 0.0
  %vm4945 = vcmp.ge.f32.partialorder %v4896, 0.0
  %vm4946 = vcmp.ge.f32.partialorder %v4897, 0.0
  %vm4947 = vcmp.ge.f32.partialorder %v4898, 0.0
  %vm4948 = vcmp.ge.f32.partialorder %v4899, 0.0
  %vm4949 = vcmp.ge.f32.partialorder %v4900, 0.0
  %vm4950 = vcmp.ge.f32.partialorder %v4901, 0.0
  %vm4951 = vcmp.ge.f32.partialorder %v4902, 0.0
  %vm4952 = vcmp.ge.f32.partialorder %v4903, 0.0
  %vm4953 = vcmp.ge.f32.partialorder %v4904, 0.0
  %vm4954 = vcmp.ge.f32.partialorder %v4905, 0.0
  %vm4955 = vcmp.ge.f32.partialorder %v4906, 0.0
  %vm4956 = vcmp.ge.f32.partialorder %v4907, 0.0
  %vm4957 = vcmp.ge.f32.partialorder %v4908, 0.0
  %vm4958 = vcmp.ge.f32.partialorder %v4909, 0.0
  %vm4959 = vcmp.ge.f32.partialorder %v4910, 0.0
  %vm4960 = vcmp.ge.f32.partialorder %v4911, 0.0
  %vm4961 = vcmp.ge.f32.partialorder %v4912, 0.0
  %vm4962 = vcmp.ge.f32.partialorder %v4913, 0.0
  %vm4963 = vcmp.ge.f32.partialorder %v4914, 0.0
  %vm4964 = vcmp.ge.f32.partialorder %v4915, 0.0
  %vm4965 = vcmp.ge.f32.partialorder %v4916, 0.0
  %vm4966 = vcmp.ge.f32.partialorder %v4917, 0.0
  %vm4967 = vcmp.ge.f32.partialorder %v4918, 0.0
  %vm4968 = vcmp.ge.f32.partialorder %v4919, 0.0
  %vm4969 = vcmp.ge.f32.partialorder %v4920, 0.0
  %vm4970 = vcmp.ge.f32.partialorder %v4921, 0.0
  %vm4971 = vcmp.ge.f32.partialorder %v4922, 0.0
  %vm4972 = vcmp.ge.f32.partialorder %v4923, 0.0
  %vm4973 = vcmp.ge.f32.partialorder %v4924, 0.0
  %vm4974 = vcmp.ge.f32.partialorder %v4925, 0.0
  %vm4975 = vcmp.ge.f32.partialorder %v4926, 0.0
  %vm4976 = vcmp.ge.f32.partialorder %v4927, 0.0
  %vm4977 = vcmp.ge.f32.partialorder %v4928, 0.0
  %vm4978 = vcmp.ge.f32.partialorder %v4929, 0.0
  %vm4979 = vcmp.ge.f32.partialorder %v4930, 0.0
  %vm4980 = vcmp.ge.f32.partialorder %v4931, 0.0
  %vm4981 = vcmp.ge.f32.partialorder %v4932, 0.0
  %vm4982 = vcmp.ge.f32.partialorder %v4933, 0.0
  %vm4983 = vcmp.ge.f32.partialorder %v4934, 0.0
  %vm4984 = vcmp.ge.f32.partialorder %v4935, 0.0
  %vm4985 = vcmp.ge.f32.partialorder %v4936, 0.0
  %vm4986 = vcmp.ge.f32.partialorder %v4937, 0.0
  %vm4987 = vcmp.ge.f32.partialorder %v4938, 0.0
  %vm4988 = vcmp.ge.f32.partialorder %v4939, 0.0
  %v4989 = vmul.f32 %v4891, 0.2
  %v4990 = vmul.f32 %v4892, 0.2
  %v4991 = vmul.f32 %v4893, 0.2
  %v4992 = vmul.f32 %v4894, 0.2
  %v4993 = vmul.f32 %v4895, 0.2
  %v4994 = vmul.f32 %v4896, 0.2
  %v4995 = vmul.f32 %v4897, 0.2
  %v4996 = vmul.f32 %v4898, 0.2
  %v4997 = vmul.f32 %v4899, 0.2
  %v4998 = vmul.f32 %v4900, 0.2
  %v4999 = vmul.f32 %v4901, 0.2
  %v5000 = vmul.f32 %v4902, 0.2
  %v5001 = vmul.f32 %v4903, 0.2
  %v5002 = vmul.f32 %v4904, 0.2
  %v5003 = vmul.f32 %v4905, 0.2
  %v5004 = vmul.f32 %v4906, 0.2
  %v5005 = vmul.f32 %v4907, 0.2
  %v5006 = vmul.f32 %v4908, 0.2
  %v5007 = vmul.f32 %v4909, 0.2
  %v5008 = vmul.f32 %v4910, 0.2
  %v5009 = vmul.f32 %v4911, 0.2
  %v5010 = vmul.f32 %v4912, 0.2
  %v5011 = vmul.f32 %v4913, 0.2
  %v5012 = vmul.f32 %v4914, 0.2
  %v5013 = vmul.f32 %v4915, 0.2
  %v5014 = vmul.f32 %v4916, 0.2
  %v5015 = vmul.f32 %v4917, 0.2
  %v5016 = vmul.f32 %v4918, 0.2
  %v5017 = vmul.f32 %v4919, 0.2
  %v5018 = vmul.f32 %v4920, 0.2
  %v5019 = vmul.f32 %v4921, 0.2
  %v5020 = vmul.f32 %v4922, 0.2
  %v5021 = vmul.f32 %v4923, 0.2
  %v5022 = vmul.f32 %v4924, 0.2
  %v5023 = vmul.f32 %v4925, 0.2
  %v5024 = vmul.f32 %v4926, 0.2
  %v5025 = vmul.f32 %v4927, 0.2
  %v5026 = vmul.f32 %v4928, 0.2
  %v5027 = vmul.f32 %v4929, 0.2
  %v5028 = vmul.f32 %v4930, 0.2
  %v5029 = vmul.f32 %v4931, 0.2
  %v5030 = vmul.f32 %v4932, 0.2
  %v5031 = vmul.f32 %v4933, 0.2
  %v5032 = vmul.f32 %v4934, 0.2
  %v5033 = vmul.f32 %v4935, 0.2
  %v5034 = vmul.f32 %v4936, 0.2
  %v5035 = vmul.f32 %v4937, 0.2
  %v5036 = vmul.f32 %v4938, 0.2
  %v5037 = vmul.f32 %v4939, 0.2
  %v5038 = vsel %vm4940, %v4891, %v4989
  %v5039 = vsel %vm4941, %v4892, %v4990
  %v5040 = vsel %vm4942, %v4893, %v4991
  %v5041 = vsel %vm4943, %v4894, %v4992
  %v5042 = vsel %vm4944, %v4895, %v4993
  %v5043 = vsel %vm4945, %v4896, %v4994
  %v5044 = vsel %vm4946, %v4897, %v4995
  %v5045 = vsel %vm4947, %v4898, %v4996
  %v5046 = vsel %vm4948, %v4899, %v4997
  %v5047 = vsel %vm4949, %v4900, %v4998
  %v5048 = vsel %vm4950, %v4901, %v4999
  %v5049 = vsel %vm4951, %v4902, %v5000
  %v5050 = vsel %vm4952, %v4903, %v5001
  %v5051 = vsel %vm4953, %v4904, %v5002
  %v5052 = vsel %vm4954, %v4905, %v5003
  %v5053 = vsel %vm4955, %v4906, %v5004
  %v5054 = vsel %vm4956, %v4907, %v5005
  %v5055 = vsel %vm4957, %v4908, %v5006
  %v5056 = vsel %vm4958, %v4909, %v5007
  %v5057 = vsel %vm4959, %v4910, %v5008
  %v5058 = vsel %vm4960, %v4911, %v5009
  %v5059 = vsel %vm4961, %v4912, %v5010
  %v5060 = vsel %vm4962, %v4913, %v5011
  %v5061 = vsel %vm4963, %v4914, %v5012
  %v5062 = vsel %vm4964, %v4915, %v5013
  %v5063 = vsel %vm4965, %v4916, %v5014
  %v5064 = vsel %vm4966, %v4917, %v5015
  %v5065 = vsel %vm4967, %v4918, %v5016
  %v5066 = vsel %vm4968, %v4919, %v5017
  %v5067 = vsel %vm4969, %v4920, %v5018
  %v5068 = vsel %vm4970, %v4921, %v5019
  %v5069 = vsel %vm4971, %v4922, %v5020
  %v5070 = vsel %vm4972, %v4923, %v5021
  %v5071 = vsel %vm4973, %v4924, %v5022
  %v5072 = vsel %vm4974, %v4925, %v5023
  %v5073 = vsel %vm4975, %v4926, %v5024
  %v5074 = vsel %vm4976, %v4927, %v5025
  %v5075 = vsel %vm4977, %v4928, %v5026
  %v5076 = vsel %vm4978, %v4929, %v5027
  %v5077 = vsel %vm4979, %v4930, %v5028
  %v5078 = vsel %vm4980, %v4931, %v5029
  %v5079 = vsel %vm4981, %v4932, %v5030
  %v5080 = vsel %vm4982, %v4933, %v5031
  %v5081 = vsel %vm4983, %v4934, %v5032
  %v5082 = vsel %vm4984, %v4935, %v5033
  %v5083 = vsel %vm4985, %v4936, %v5034
  %v5084 = vsel %vm4986, %v4937, %v5035
  %v5085 = vsel %vm4987, %v4938, %v5036
  %v5086 = vsel %vm4988, %v4939, %v5037
  %v5087 = vpack.c.bf16 %v5039, %v5038
  %v5088 = vpack.c.bf16 %v5041, %v5040
  %v5089 = vpack.c.bf16 %v5043, %v5042
  %v5090 = vpack.c.bf16 %v5045, %v5044
  %v5091 = vpack.c.bf16 %v5047, %v5046
  %v5092 = vpack.c.bf16 %v5049, %v5048
  %v5093 = vpack.c.bf16 %v5051, %v5050
  %v5094 = vpack.c.bf16 %v5053, %v5052
  %v5095 = vpack.c.bf16 %v5055, %v5054
  %v5096 = vpack.c.bf16 %v5057, %v5056
  %v5097 = vpack.c.bf16 %v5059, %v5058
  %v5098 = vpack.c.bf16 %v5061, %v5060
  %v5099 = vpack.c.bf16 %v5063, %v5062
  %v5100 = vpack.c.bf16 %v5065, %v5064
  %v5101 = vpack.c.bf16 %v5067, %v5066
  %v5102 = vpack.c.bf16 %v5069, %v5068
  %v5103 = vpack.c.bf16 %v5071, %v5070
  %v5104 = vpack.c.bf16 %v5073, %v5072
  %v5105 = vpack.c.bf16 %v5075, %v5074
  %v5106 = vpack.c.bf16 %v5077, %v5076
  %v5107 = vpack.c.bf16 %v5079, %v5078
  %v5108 = vpack.c.bf16 %v5081, %v5080
  %v5109 = vpack.c.bf16 %v5083, %v5082
  %v5110 = vpack.c.bf16 %v5085, %v5084
  %v5111 = vpack.c.bf16 %v5086, %v5086
  %v5137 = vunpack.c.l.b16 %v5087
  %v5138 = vunpack.c.h.b16 %v5087
  %v5139 = vunpack.c.l.b16 %v5088
  %v5140 = vunpack.c.h.b16 %v5088
  %v5141 = vunpack.c.l.b16 %v5089
  %v5142 = vunpack.c.h.b16 %v5089
  %v5143 = vunpack.c.l.b16 %v5090
  %v5144 = vunpack.c.h.b16 %v5090
  %v5145 = vunpack.c.l.b16 %v5091
  %v5146 = vunpack.c.h.b16 %v5091
  %v5147 = vunpack.c.l.b16 %v5092
  %v5148 = vunpack.c.h.b16 %v5092
  %v5149 = vunpack.c.l.b16 %v5093
  %v5150 = vunpack.c.h.b16 %v5093
  %v5151 = vunpack.c.l.b16 %v5094
  %v5152 = vunpack.c.h.b16 %v5094
  %v5153 = vunpack.c.l.b16 %v5095
  %v5154 = vunpack.c.h.b16 %v5095
  %v5155 = vunpack.c.l.b16 %v5096
  %v5156 = vunpack.c.h.b16 %v5096
  %v5157 = vunpack.c.l.b16 %v5097
  %v5158 = vunpack.c.h.b16 %v5097
  %v5159 = vunpack.c.l.b16 %v5098
  %v5160 = vunpack.c.h.b16 %v5098
  %v5161 = vunpack.c.l.b16 %v5099
  %v5162 = vunpack.c.h.b16 %v5099
  %v5163 = vunpack.c.l.b16 %v5100
  %v5164 = vunpack.c.h.b16 %v5100
  %v5165 = vunpack.c.l.b16 %v5101
  %v5166 = vunpack.c.h.b16 %v5101
  %v5167 = vunpack.c.l.b16 %v5102
  %v5168 = vunpack.c.h.b16 %v5102
  %v5169 = vunpack.c.l.b16 %v5103
  %v5170 = vunpack.c.h.b16 %v5103
  %v5171 = vunpack.c.l.b16 %v5104
  %v5172 = vunpack.c.h.b16 %v5104
  %v5173 = vunpack.c.l.b16 %v5105
  %v5174 = vunpack.c.h.b16 %v5105
  %v5175 = vunpack.c.l.b16 %v5106
  %v5176 = vunpack.c.h.b16 %v5106
  %v5177 = vunpack.c.l.b16 %v5107
  %v5178 = vunpack.c.h.b16 %v5107
  %v5179 = vunpack.c.l.b16 %v5108
  %v5180 = vunpack.c.h.b16 %v5108
  %v5181 = vunpack.c.l.b16 %v5109
  %v5182 = vunpack.c.h.b16 %v5109
  %v5183 = vunpack.c.l.b16 %v5110
  %v5184 = vunpack.c.h.b16 %v5110
  %v5185 = vunpack.c.l.b16 %v5111
  %v5186 = vpack.c.b16 %v5137, %v5137
  %v5187 = vpack.c.b16 %v5138, %v5138
  %v5188 = vpack.c.b16 %v5139, %v5139
  %v5189 = vpack.c.b16 %v5140, %v5140
  %v5190 = vpack.c.b16 %v5141, %v5141
  %v5191 = vpack.c.b16 %v5142, %v5142
  %v5192 = vpack.c.b16 %v5143, %v5143
  %v5193 = vpack.c.b16 %v5144, %v5144
  %v5194 = vpack.c.b16 %v5145, %v5145
  %v5195 = vpack.c.b16 %v5146, %v5146
  %v5196 = vpack.c.b16 %v5147, %v5147
  %v5197 = vpack.c.b16 %v5148, %v5148
  %v5198 = vpack.c.b16 %v5149, %v5149
  %v5199 = vpack.c.b16 %v5150, %v5150
  %v5200 = vpack.c.b16 %v5151, %v5151
  %v5201 = vpack.c.b16 %v5152, %v5152
  %v5202 = vpack.c.b16 %v5153, %v5153
  %v5203 = vpack.c.b16 %v5154, %v5154
  %v5204 = vpack.c.b16 %v5155, %v5155
  %v5205 = vpack.c.b16 %v5156, %v5156
  %v5206 = vpack.c.b16 %v5157, %v5157
  %v5207 = vpack.c.b16 %v5158, %v5158
  %v5208 = vpack.c.b16 %v5159, %v5159
  %v5209 = vpack.c.b16 %v5160, %v5160
  %v5210 = vpack.c.b16 %v5161, %v5161
  %v5211 = vpack.c.b16 %v5162, %v5162
  %v5212 = vpack.c.b16 %v5163, %v5163
  %v5213 = vpack.c.b16 %v5164, %v5164
  %v5214 = vpack.c.b16 %v5165, %v5165
  %v5215 = vpack.c.b16 %v5166, %v5166
  %v5216 = vpack.c.b16 %v5167, %v5167
  %v5217 = vpack.c.b16 %v5168, %v5168
  %v5218 = vpack.c.b16 %v5169, %v5169
  %v5219 = vpack.c.b16 %v5170, %v5170
  %v5220 = vpack.c.b16 %v5171, %v5171
  %v5221 = vpack.c.b16 %v5172, %v5172
  %v5222 = vpack.c.b16 %v5173, %v5173
  %v5223 = vpack.c.b16 %v5174, %v5174
  %v5224 = vpack.c.b16 %v5175, %v5175
  %v5225 = vpack.c.b16 %v5176, %v5176
  %v5226 = vpack.c.b16 %v5177, %v5177
  %v5227 = vpack.c.b16 %v5178, %v5178
  %v5228 = vpack.c.b16 %v5179, %v5179
  %v5229 = vpack.c.b16 %v5180, %v5180
  %v5230 = vpack.c.b16 %v5181, %v5181
  %v5231 = vpack.c.b16 %v5182, %v5182
  %v5232 = vpack.c.b16 %v5183, %v5183
  %v5233 = vpack.c.b16 %v5184, %v5184
  %v5234 = vpack.c.b16 %v5185, %v5185
  %5284 = vst [vmem:[%s3] sm:$0xf] %v5186
  %5285 = vst [vmem:[%s3 + $0x4] sm:$0xf] %v5187
  %5286 = vst [vmem:[%s3 + $0x8] sm:$0xf] %v5188
  %5287 = vst [vmem:[%s3 + $0xc] sm:$0xf] %v5189
  %5288 = vst [vmem:[%s3 + $0x10] sm:$0xf] %v5190
  %5289 = vst [vmem:[%s3 + $0x14] sm:$0xf] %v5191
  %5290 = vst [vmem:[%s3 + $0x18] sm:$0xf] %v5192
  %5291 = vst [vmem:[%s3 + $0x1c] sm:$0xf] %v5193
  %5292 = vst [vmem:[%s3 + $0x20] sm:$0xf] %v5194
  %5293 = vst [vmem:[%s3 + $0x24] sm:$0xf] %v5195
  %5294 = vst [vmem:[%s3 + $0x28] sm:$0xf] %v5196
  %5295 = vst [vmem:[%s3 + $0x2c] sm:$0xf] %v5197
  %5296 = vst [vmem:[%s3 + $0x30] sm:$0xf] %v5198
  %5297 = vst [vmem:[%s3 + $0x34] sm:$0xf] %v5199
  %5298 = vst [vmem:[%s3 + $0x38] sm:$0xf] %v5200
  %5299 = vst [vmem:[%s3 + $0x3c] sm:$0xf] %v5201
  %5300 = vst [vmem:[%s3 + $0x40] sm:$0xf] %v5202
  %5301 = vst [vmem:[%s3 + $0x44] sm:$0xf] %v5203
  %5302 = vst [vmem:[%s3 + $0x48] sm:$0xf] %v5204
  %5303 = vst [vmem:[%s3 + $0x4c] sm:$0xf] %v5205
  %5304 = vst [vmem:[%s3 + $0x50] sm:$0xf] %v5206
  %5305 = vst [vmem:[%s3 + $0x54] sm:$0xf] %v5207
  %5306 = vst [vmem:[%s3 + $0x58] sm:$0xf] %v5208
  %5307 = vst [vmem:[%s3 + $0x5c] sm:$0xf] %v5209
  %5308 = vst [vmem:[%s3 + $0x60] sm:$0xf] %v5210
  %5309 = vst [vmem:[%s3 + $0x64] sm:$0xf] %v5211
  %5310 = vst [vmem:[%s3 + $0x68] sm:$0xf] %v5212
  %5311 = vst [vmem:[%s3 + $0x6c] sm:$0xf] %v5213
  %5312 = vst [vmem:[%s3 + $0x70] sm:$0xf] %v5214
  %5313 = vst [vmem:[%s3 + $0x74] sm:$0xf] %v5215
  %5314 = vst [vmem:[%s3 + $0x78] sm:$0xf] %v5216
  %5315 = vst [vmem:[%s3 + $0x7c] sm:$0xf] %v5217
  %5316 = vst [vmem:[%s3 + $0x80] sm:$0xf] %v5218
  %5317 = vst [vmem:[%s3 + $0x84] sm:$0xf] %v5219
  %5318 = vst [vmem:[%s3 + $0x88] sm:$0xf] %v5220
  %5319 = vst [vmem:[%s3 + $0x8c] sm:$0xf] %v5221
  %5320 = vst [vmem:[%s3 + $0x90] sm:$0xf] %v5222
  %5321 = vst [vmem:[%s3 + $0x94] sm:$0xf] %v5223
  %5322 = vst [vmem:[%s3 + $0x98] sm:$0xf] %v5224
  %5323 = vst [vmem:[%s3 + $0x9c] sm:$0xf] %v5225
  %5324 = vst [vmem:[%s3 + $0xa0] sm:$0xf] %v5226
  %5325 = vst [vmem:[%s3 + $0xa4] sm:$0xf] %v5227
  %5326 = vst [vmem:[%s3 + $0xa8] sm:$0xf] %v5228
  %5327 = vst [vmem:[%s3 + $0xac] sm:$0xf] %v5229
  %5328 = vst [vmem:[%s3 + $0xb0] sm:$0xf] %v5230
  %5329 = vst [vmem:[%s3 + $0xb4] sm:$0xf] %v5231
  %5330 = vst [vmem:[%s3 + $0xb8] sm:$0xf] %v5232
  %5331 = vst [vmem:[%s3 + $0xbc] sm:$0xf] %v5233
  %5332 = vst [vmem:[%s3 + $0xc0] sm:$0xf] %v5234
  // Predicated region
  $region14: #{discriminator_forward.4} parent=0 // pred_check
    _
  $region15: #{discriminator_forward.4} parent=0 // pred_check_branch
    %5334 = sbr.rel (0) target = $region17
  $region16: #{discriminator_forward.4} parent=0 // pred_region
    _
  $region17: #{discriminator_forward.4} parent=0 // pred_fallthru
    _
  // Predicated region
  $region18: #{discriminator_forward.4} parent=0 // pred_check
    _
  $region19: #{discriminator_forward.4} parent=0 // pred_check_branch
    %5336 = sbr.rel (0) target = $region21
  $region20: #{discriminator_forward.4} parent=0 // pred_region
    _
  $region21: #{discriminator_forward.4} parent=0 // pred_fallthru
    _

// kernel: tile.23
$region0: #{tile.23}
  #allocation0 [shape = 's32[1]{0}', space=sflag, size = 0x4, scoped, tag = 'scoped memory for tile.23']
  %s0 = inlined_call_operand.vmem [shape: f32[64], index: 0, kind: input, shape index: {}]
  %s1 = inlined_call_operand.vmem [shape: f32[9,64], index: 1, kind: output, shape index: {}]
  // Predicated region
  $region2: #{tile.23} parent=0 // pred_check
    _
  $region3: #{tile.23} parent=0 // pred_check_branch
    %3 = sbr.rel (0) target = $region5
  $region4: #{tile.23} parent=0 // pred_region
    _
  $region5: #{tile.23} parent=0 // pred_fallthru
    _
  %v4 = vld [vmem:[%s0] ss:$0 sm:$0xff]
  %5 = vst [vmem:[%s1] sm:$0xff] %v4
  %s6 = scalar_lea.vmem %s1, 8
  %7 = vst [vmem:[%s6] sm:$0xff] %v4

// kernel: tile.24
$region0: #{tile.24}
  %s0 = inlined_call_operand.vmem [shape: f32[9,64], index: 0, kind: input, shape index: {}]
  %s1 = inlined_call_operand.vmem [shape: f32[1,576], index: 1, kind: output, shape index: {}]
  $region1: #{tile.24} parent=0
    #allocation0 [shape = 'u8[20480]{0}', space=vmem, size = 0x5000, scoped, tag = 'scoped mem for output reshape']
    %v2 = vld [vmem:[%s0] ss:$2 sm:$0x1f]
    %vm3 = vcmask 523264
    %4 = vst.msk [vmem:[#allocation0] ss:$8 sm:$0xf] %vm3, %v2
    %s5 = scalar_lea.vmem [#allocation0], 28
    %6 = vst.msk [vmem:[%s5] sm:$0x10] %vm3, %v2
    %s7 = scalar_lea.vmem %s0, 1
    %v8 = vld [vmem:[%s7] ss:$2 sm:$0xf]
    %9 = vrot.lane.b32.xlu0 %v8, 64
    %v10 = vpop.permute.xlu0 %9
    %vm11 = vcmask 1048064
    %12 = vst.msk [vmem:[#allocation0] ss:$8 sm:$0xf] %vm11, %v10
    %s14 = sshll.u32 1, 1
    %s15 = ssub.s32 %s14, 1
    %v17 = vld [vmem:[#allocation0] sm:%s15]
    %s18 = sshll.u32 1, 1
    %s19 = ssub.s32 %s18, 1
    %20 = vst [vmem:[%s1] sm:%s19] %v17
    %s21 = scalar_lea.vmem [#allocation0], 8
    %v22 = vld [vmem:[%s21] sm:%s15]
    %s23 = sshll.u32 1, 1
    %s24 = ssub.s32 %s23, 1
    %s25 = scalar_lea.vmem %s1, 1
    %26 = vst [vmem:[%s25] sm:%s24] %v22
    %s27 = scalar_lea.vmem [#allocation0], 16
    %v28 = vld [vmem:[%s27] sm:%s15]
    %s29 = sshll.u32 1, 1
    %s30 = ssub.s32 %s29, 1
    %s31 = smul.addr 1, 2
    %s32 = scalar_lea.vmem %s1, %s31
    %33 = vst [vmem:[%s32] sm:%s30] %v28
    %s34 = scalar_lea.vmem [#allocation0], 24
    %v35 = vld [vmem:[%s34] sm:%s15]
    %s36 = sshll.u32 1, 1
    %s37 = ssub.s32 %s36, 1
    %s38 = smul.addr 1, 3
    %s39 = scalar_lea.vmem %s1, %s38
    %40 = vst [vmem:[%s39] sm:%s37] %v35
    %s41 = scalar_lea.vmem [#allocation0], 32
    %v42 = vld [vmem:[%s41] sm:%s15]
    %s43 = sshll.u32 1, 1
    %s44 = ssub.s32 %s43, 1
    %s45 = smul.addr 1, 4
    %s46 = scalar_lea.vmem %s1, %s45
    %47 = vst [vmem:[%s46] sm:%s44] %v42

// kernel: discriminator_forward.5
$region0: #{discriminator_forward.5}
  #allocation0 [shape = 'u32[]', space=smem, size = 0x4, offset = 0x4, fixed_abs, tag = 'smem constant byte address 0x4 - core index']
  #allocation1 [shape = 'u32[144,128]{1,0:T(1,128)}', space=vmem, size = 0x12000, scoped, tag = 'internal scratch']
  %s0 = inlined_call_operand.vmem [shape: bf16[104,512], index: 0, kind: input, shape index: {}]
  %s1 = inlined_call_operand.vmem [shape: bf16[512,128], index: 1, kind: input, shape index: {}]
  %s2 = inlined_call_operand.vmem [shape: bf16[104,128], index: 2, kind: output, shape index: {0}]
  %s3 = inlined_call_operand.vmem [shape: f32[1,128], index: 3, kind: output, shape index: {1}]
  %s4 = inlined_call_operand.vmem [shape: f32[1,128], index: 4, kind: output, shape index: {2}]
  %5 = xla_tuple %s2, %s3, %s4
  %s6 = sld [smem:[#allocation0]]
  $region34: #{discriminator_forward.5} parent=0
    _
  %s8 = ssub.s32 1, %s6
  %s9 = scalar_select 0, %s8, %s6
  // Predicated region
  $region2: #{discriminator_forward.5} parent=0 // pred_check
    _
  $region3: #{discriminator_forward.5} parent=0 // pred_check_branch
    %11 = sbr.rel (0) target = $region5
  $region4: #{discriminator_forward.5} parent=0 // pred_region
    _
  $region5: #{discriminator_forward.5} parent=0 // pred_fallthru
    _
  // Predicated region
  $region6: #{discriminator_forward.5} parent=0 // pred_check
    _
  $region7: #{discriminator_forward.5} parent=0 // pred_check_branch
    %13 = sbr.rel (0) target = $region9
  $region8: #{discriminator_forward.5} parent=0 // pred_region
    _
  $region9: #{discriminator_forward.5} parent=0 // pred_fallthru
    _
  %v15 = vld [vmem:[%s0] sm:$0xff]
  %v16 = vld [vmem:[%s0 + $0x8] sm:$0xff]
  %v17 = vld [vmem:[%s0 + $0x10] sm:$0xff]
  %v18 = vld [vmem:[%s0 + $0x18] sm:$0xff]
  %v19 = vld [vmem:[%s0 + $0x20] sm:$0xff]
  %v20 = vld [vmem:[%s0 + $0x28] sm:$0xff]
  %v21 = vld [vmem:[%s0 + $0x30] sm:$0xff]
  %v22 = vld [vmem:[%s0 + $0x38] sm:$0xff]
  %v23 = vld [vmem:[%s0 + $0x40] sm:$0xff]
  %v24 = vld [vmem:[%s0 + $0x48] sm:$0xff]
  %v25 = vld [vmem:[%s0 + $0x50] sm:$0xff]
  %v26 = vld [vmem:[%s0 + $0x58] sm:$0xff]
  %v27 = vld [vmem:[%s0 + $0x60] sm:$0xff]
  %v28 = vld [vmem:[%s0 + $0x68] sm:$0xff]
  %v29 = vld [vmem:[%s0 + $0x70] sm:$0xff]
  %v30 = vld [vmem:[%s0 + $0x78] sm:$0xff]
  %v31 = vld [vmem:[%s0 + $0x80] sm:$0xff]
  %v32 = vld [vmem:[%s0 + $0x88] sm:$0xff]
  %v33 = vld [vmem:[%s0 + $0x90] sm:$0xff]
  %v34 = vld [vmem:[%s0 + $0x98] sm:$0xff]
  %v35 = vld [vmem:[%s0 + $0xa0] sm:$0xff]
  %v36 = vld [vmem:[%s0 + $0xa8] sm:$0xff]
  %v37 = vld [vmem:[%s0 + $0xb0] sm:$0xff]
  %v38 = vld [vmem:[%s0 + $0xb8] sm:$0xff]
  %v39 = vld [vmem:[%s0 + $0xc0] sm:$0xff]
  %v40 = vld [vmem:[%s0 + $0xc8] sm:$0xff]
  %v41 = vld [vmem:[%s1] sm:$0xf]
  %v42 = vld [vmem:[%s1 + $0x4] sm:$0xf]
  %v43 = vld [vmem:[%s1 + $0x8] sm:$0xf]
  %v44 = vld [vmem:[%s1 + $0xc] sm:$0xf]
  %v45 = vld [vmem:[%s1 + $0x10] sm:$0xf]
  %v46 = vld [vmem:[%s1 + $0x14] sm:$0xf]
  %v47 = vld [vmem:[%s1 + $0x18] sm:$0xf]
  %v48 = vld [vmem:[%s1 + $0x1c] sm:$0xf]
  %v49 = vld [vmem:[%s1 + $0x20] sm:$0xf]
  %v50 = vld [vmem:[%s1 + $0x24] sm:$0xf]
  %v51 = vld [vmem:[%s1 + $0x28] sm:$0xf]
  %v52 = vld [vmem:[%s1 + $0x2c] sm:$0xf]
  %v53 = vld [vmem:[%s1 + $0x30] sm:$0xf]
  %v54 = vld [vmem:[%s1 + $0x34] sm:$0xf]
  %v55 = vld [vmem:[%s1 + $0x38] sm:$0xf]
  %v56 = vld [vmem:[%s1 + $0x3c] sm:$0xf]
  %v57 = vld [vmem:[%s1 + $0x40] sm:$0xf]
  %v58 = vld [vmem:[%s1 + $0x44] sm:$0xf]
  %v59 = vld [vmem:[%s1 + $0x48] sm:$0xf]
  %v60 = vld [vmem:[%s1 + $0x4c] sm:$0xf]
  %v61 = vld [vmem:[%s1 + $0x50] sm:$0xf]
  %v62 = vld [vmem:[%s1 + $0x54] sm:$0xf]
  %v63 = vld [vmem:[%s1 + $0x58] sm:$0xf]
  %v64 = vld [vmem:[%s1 + $0x5c] sm:$0xf]
  %v65 = vld [vmem:[%s1 + $0x60] sm:$0xf]
  %v66 = vld [vmem:[%s1 + $0x64] sm:$0xf]
  %v67 = vld [vmem:[%s1 + $0x68] sm:$0xf]
  %v68 = vld [vmem:[%s1 + $0x6c] sm:$0xf]
  %v69 = vld [vmem:[%s1 + $0x70] sm:$0xf]
  %v70 = vld [vmem:[%s1 + $0x74] sm:$0xf]
  %v71 = vld [vmem:[%s1 + $0x78] sm:$0xf]
  %v72 = vld [vmem:[%s1 + $0x7c] sm:$0xf]
  %v73 = vld [vmem:[%s1 + $0x80] sm:$0xf]
  %v74 = vld [vmem:[%s1 + $0x84] sm:$0xf]
  %v75 = vld [vmem:[%s1 + $0x88] sm:$0xf]
  %v76 = vld [vmem:[%s1 + $0x8c] sm:$0xf]
  %v77 = vld [vmem:[%s1 + $0x90] sm:$0xf]
  %v78 = vld [vmem:[%s1 + $0x94] sm:$0xf]
  %v79 = vld [vmem:[%s1 + $0x98] sm:$0xf]
  %v80 = vld [vmem:[%s1 + $0x9c] sm:$0xf]
  %v81 = vld [vmem:[%s1 + $0xa0] sm:$0xf]
  %v82 = vld [vmem:[%s1 + $0xa4] sm:$0xf]
  %v83 = vld [vmem:[%s1 + $0xa8] sm:$0xf]
  %v84 = vld [vmem:[%s1 + $0xac] sm:$0xf]
  %v85 = vld [vmem:[%s1 + $0xb0] sm:$0xf]
  %v86 = vld [vmem:[%s1 + $0xb4] sm:$0xf]
  %v87 = vld [vmem:[%s1 + $0xb8] sm:$0xf]
  %v88 = vld [vmem:[%s1 + $0xbc] sm:$0xf]
  %v89 = vld [vmem:[%s1 + $0xc0] sm:$0xf]
  %v90 = vld [vmem:[%s1 + $0xc4] sm:$0xf]
  %v91 = vld [vmem:[%s1 + $0xc8] sm:$0xf]
  %v92 = vld [vmem:[%s1 + $0xcc] sm:$0xf]
  %v93 = vld [vmem:[%s1 + $0xd0] sm:$0xf]
  %v94 = vld [vmem:[%s1 + $0xd4] sm:$0xf]
  %v95 = vld [vmem:[%s1 + $0xd8] sm:$0xf]
  %v96 = vld [vmem:[%s1 + $0xdc] sm:$0xf]
  %v97 = vld [vmem:[%s1 + $0xe0] sm:$0xf]
  %v98 = vld [vmem:[%s1 + $0xe4] sm:$0xf]
  %v99 = vld [vmem:[%s1 + $0xe8] sm:$0xf]
  %v100 = vld [vmem:[%s1 + $0xec] sm:$0xf]
  %v101 = vld [vmem:[%s1 + $0xf0] sm:$0xf]
  %v102 = vld [vmem:[%s1 + $0xf4] sm:$0xf]
  %v103 = vld [vmem:[%s1 + $0xf8] sm:$0xf]
  %v104 = vld [vmem:[%s1 + $0xfc] sm:$0xf]
  %v131 = vunpack.c.l.b16 %v15
  %v132 = vunpack.c.h.b16 %v15
  %v133 = vunpack.c.l.b16 %v16
  %v134 = vunpack.c.h.b16 %v16
  %v135 = vunpack.c.l.b16 %v17
  %v136 = vunpack.c.h.b16 %v17
  %v137 = vunpack.c.l.b16 %v18
  %v138 = vunpack.c.h.b16 %v18
  %v139 = vunpack.c.l.b16 %v19
  %v140 = vunpack.c.h.b16 %v19
  %v141 = vunpack.c.l.b16 %v20
  %v142 = vunpack.c.h.b16 %v20
  %v143 = vunpack.c.l.b16 %v21
  %v144 = vunpack.c.h.b16 %v21
  %v145 = vunpack.c.l.b16 %v22
  %v146 = vunpack.c.h.b16 %v22
  %v147 = vunpack.c.l.b16 %v23
  %v148 = vunpack.c.h.b16 %v23
  %v149 = vunpack.c.l.b16 %v24
  %v150 = vunpack.c.h.b16 %v24
  %v151 = vunpack.c.l.b16 %v25
  %v152 = vunpack.c.h.b16 %v25
  %v153 = vunpack.c.l.b16 %v26
  %v154 = vunpack.c.h.b16 %v26
  %v155 = vunpack.c.l.b16 %v27
  %v156 = vunpack.c.h.b16 %v27
  %v157 = vunpack.c.l.b16 %v28
  %v158 = vunpack.c.h.b16 %v28
  %v159 = vunpack.c.l.b16 %v29
  %v160 = vunpack.c.h.b16 %v29
  %v161 = vunpack.c.l.b16 %v30
  %v162 = vunpack.c.h.b16 %v30
  %v163 = vunpack.c.l.b16 %v31
  %v164 = vunpack.c.h.b16 %v31
  %v165 = vunpack.c.l.b16 %v32
  %v166 = vunpack.c.h.b16 %v32
  %v167 = vunpack.c.l.b16 %v33
  %v168 = vunpack.c.h.b16 %v33
  %v169 = vunpack.c.l.b16 %v34
  %v170 = vunpack.c.h.b16 %v34
  %v171 = vunpack.c.l.b16 %v35
  %v172 = vunpack.c.h.b16 %v35
  %v173 = vunpack.c.l.b16 %v36
  %v174 = vunpack.c.h.b16 %v36
  %v175 = vunpack.c.l.b16 %v37
  %v176 = vunpack.c.h.b16 %v37
  %v177 = vunpack.c.l.b16 %v38
  %v178 = vunpack.c.h.b16 %v38
  %v179 = vunpack.c.l.b16 %v39
  %v180 = vunpack.c.h.b16 %v39
  %v181 = vunpack.c.l.b16 %v40
  %v182 = vunpack.c.h.b16 %v40
  %v183 = vpack.c.b16 %v135, %v131
  %v184 = vpack.c.b16 %v136, %v132
  %v185 = vpack.c.b16 %v137, %v133
  %v186 = vpack.c.b16 %v138, %v134
  %v187 = vpack.c.b16 %v143, %v139
  %v188 = vpack.c.b16 %v144, %v140
  %v189 = vpack.c.b16 %v145, %v141
  %v190 = vpack.c.b16 %v146, %v142
  %v191 = vpack.c.b16 %v151, %v147
  %v192 = vpack.c.b16 %v152, %v148
  %v193 = vpack.c.b16 %v153, %v149
  %v194 = vpack.c.b16 %v154, %v150
  %v195 = vpack.c.b16 %v159, %v155
  %v196 = vpack.c.b16 %v160, %v156
  %v197 = vpack.c.b16 %v161, %v157
  %v198 = vpack.c.b16 %v162, %v158
  %v199 = vpack.c.b16 %v167, %v163
  %v200 = vpack.c.b16 %v168, %v164
  %v201 = vpack.c.b16 %v169, %v165
  %v202 = vpack.c.b16 %v170, %v166
  %v203 = vpack.c.b16 %v175, %v171
  %v204 = vpack.c.b16 %v176, %v172
  %v205 = vpack.c.b16 %v177, %v173
  %v206 = vpack.c.b16 %v178, %v174
  %v207 = vpack.c.b16 %v179, %v179
  %v208 = vpack.c.b16 %v180, %v180
  %v209 = vpack.c.b16 %v181, %v181
  %v210 = vpack.c.b16 %v182, %v182
  %v303 = vunpack.c.l.b16 %v41
  %v304 = vunpack.c.l.b16 %v42
  %v305 = vunpack.c.l.b16 %v43
  %v306 = vunpack.c.l.b16 %v44
  %v307 = vunpack.c.l.b16 %v45
  %v308 = vunpack.c.l.b16 %v46
  %v309 = vunpack.c.l.b16 %v47
  %v310 = vunpack.c.l.b16 %v48
  %v311 = vunpack.c.l.b16 %v49
  %v312 = vunpack.c.l.b16 %v50
  %v313 = vunpack.c.l.b16 %v51
  %v314 = vunpack.c.l.b16 %v52
  %v315 = vunpack.c.l.b16 %v53
  %v316 = vunpack.c.l.b16 %v54
  %v317 = vunpack.c.l.b16 %v55
  %v318 = vunpack.c.l.b16 %v56
  %v319 = vunpack.c.l.b16 %v57
  %v320 = vunpack.c.l.b16 %v58
  %v321 = vunpack.c.l.b16 %v59
  %v322 = vunpack.c.l.b16 %v60
  %v323 = vunpack.c.l.b16 %v61
  %v324 = vunpack.c.l.b16 %v62
  %v325 = vunpack.c.l.b16 %v63
  %v326 = vunpack.c.l.b16 %v64
  %v327 = vunpack.c.l.b16 %v65
  %v328 = vunpack.c.l.b16 %v66
  %v329 = vunpack.c.l.b16 %v67
  %v330 = vunpack.c.l.b16 %v68
  %v331 = vunpack.c.l.b16 %v69
  %v332 = vunpack.c.l.b16 %v70
  %v333 = vunpack.c.l.b16 %v71
  %v334 = vunpack.c.l.b16 %v72
  %v335 = vunpack.c.l.b16 %v73
  %v336 = vunpack.c.l.b16 %v74
  %v337 = vunpack.c.l.b16 %v75
  %v338 = vunpack.c.l.b16 %v76
  %v339 = vunpack.c.l.b16 %v77
  %v340 = vunpack.c.l.b16 %v78
  %v341 = vunpack.c.l.b16 %v79
  %v342 = vunpack.c.l.b16 %v80
  %v343 = vunpack.c.l.b16 %v81
  %v344 = vunpack.c.l.b16 %v82
  %v345 = vunpack.c.l.b16 %v83
  %v346 = vunpack.c.l.b16 %v84
  %v347 = vunpack.c.l.b16 %v85
  %v348 = vunpack.c.l.b16 %v86
  %v349 = vunpack.c.l.b16 %v87
  %v350 = vunpack.c.l.b16 %v88
  %v351 = vunpack.c.l.b16 %v89
  %v352 = vunpack.c.l.b16 %v90
  %v353 = vunpack.c.l.b16 %v91
  %v354 = vunpack.c.l.b16 %v92
  %v355 = vunpack.c.l.b16 %v93
  %v356 = vunpack.c.l.b16 %v94
  %v357 = vunpack.c.l.b16 %v95
  %v358 = vunpack.c.l.b16 %v96
  %v359 = vunpack.c.l.b16 %v97
  %v360 = vunpack.c.l.b16 %v98
  %v361 = vunpack.c.l.b16 %v99
  %v362 = vunpack.c.l.b16 %v100
  %v363 = vunpack.c.l.b16 %v101
  %v364 = vunpack.c.l.b16 %v102
  %v365 = vunpack.c.l.b16 %v103
  %v366 = vunpack.c.l.b16 %v104
  %v367 = vpack.c.b16 %v304, %v303
  %v368 = vpack.c.b16 %v306, %v305
  %v369 = vpack.c.b16 %v308, %v307
  %v370 = vpack.c.b16 %v310, %v309
  %v371 = vpack.c.b16 %v312, %v311
  %v372 = vpack.c.b16 %v314, %v313
  %v373 = vpack.c.b16 %v316, %v315
  %v374 = vpack.c.b16 %v318, %v317
  %v375 = vpack.c.b16 %v320, %v319
  %v376 = vpack.c.b16 %v322, %v321
  %v377 = vpack.c.b16 %v324, %v323
  %v378 = vpack.c.b16 %v326, %v325
  %v379 = vpack.c.b16 %v328, %v327
  %v380 = vpack.c.b16 %v330, %v329
  %v381 = vpack.c.b16 %v332, %v331
  %v382 = vpack.c.b16 %v334, %v333
  %v383 = vpack.c.b16 %v336, %v335
  %v384 = vpack.c.b16 %v338, %v337
  %v385 = vpack.c.b16 %v340, %v339
  %v386 = vpack.c.b16 %v342, %v341
  %v387 = vpack.c.b16 %v344, %v343
  %v388 = vpack.c.b16 %v346, %v345
  %v389 = vpack.c.b16 %v348, %v347
  %v390 = vpack.c.b16 %v350, %v349
  %v391 = vpack.c.b16 %v352, %v351
  %v392 = vpack.c.b16 %v354, %v353
  %v393 = vpack.c.b16 %v356, %v355
  %v394 = vpack.c.b16 %v358, %v357
  %v395 = vpack.c.b16 %v360, %v359
  %v396 = vpack.c.b16 %v362, %v361
  %v397 = vpack.c.b16 %v364, %v363
  %v398 = vpack.c.b16 %v366, %v365
  %431 = vmatprep.subr.bf16.mxu0 0
  %432 = vmatpush1.bf16.msra.mxu0 %v374
  %433 = vmatprep.subr.bf16.mxu0 0
  %434 = vmatpush1.bf16.msra.mxu0 %v373
  %435 = vmatprep.subr.bf16.mxu0 0
  %436 = vmatpush1.bf16.msra.mxu0 %v372
  %437 = vmatprep.subr.bf16.mxu0 0
  %438 = vmatpush1.bf16.msra.mxu0 %v371
  %439 = vmatprep.subr.bf16.mxu0 0
  %440 = vmatpush1.bf16.msra.mxu0 %v370
  %441 = vmatprep.subr.bf16.mxu0 0
  %442 = vmatpush1.bf16.msra.mxu0 %v369
  %443 = vmatprep.subr.bf16.mxu0 0
  %444 = vmatpush1.bf16.msra.mxu0 %v368
  %445 = vmatprep.subr.bf16.mxu0 0
  %446 = vmatpush1.bf16.msra.mxu0 %v367
  %447 = vmatprep.subr.bf16.mxu0 0
  %448 = vmatpush2.bf16.msra.mxu0 %v382
  %449 = vmatprep.subr.bf16.mxu0 0
  %450 = vmatpush2.bf16.msra.mxu0 %v381
  %451 = vmatprep.subr.bf16.mxu0 0
  %452 = vmatpush2.bf16.msra.mxu0 %v380
  %453 = vmatprep.subr.bf16.mxu0 0
  %454 = vmatpush2.bf16.msra.mxu0 %v379
  %455 = vmatprep.subr.bf16.mxu0 0
  %456 = vmatpush2.bf16.msra.mxu0 %v378
  %457 = vmatprep.subr.bf16.mxu0 0
  %458 = vmatpush2.bf16.msra.mxu0 %v377
  %459 = vmatprep.subr.bf16.mxu0 0
  %460 = vmatpush2.bf16.msra.mxu0 %v376
  %461 = vmatprep.subr.bf16.mxu0 0
  %462 = vmatpush2.bf16.msra.mxu0 %v375
  %463 = vmatprep.mubr.bf16.mxu0 %v184
  %464 = vmatmul.mubr.bf16.gmra.mxu0 %v183
  %v465 = vpop.f32.mrf.mxu0
  %v466 = vadd.f32 0.0, %v465
  %v467 = vpop.f32.mrf.mxu0
  %v468 = vpop.f32.mrf.mxu0
  %v469 = vadd.f32 0.0, %v468
  %v470 = vpop.f32.mrf.mxu0
  %471 = vmatprep.mubr.bf16.mxu0 %v188
  %472 = vmatmul.mubr.bf16.gmra.mxu0 %v187
  %v473 = vpop.f32.mrf.mxu0
  %v474 = vadd.f32 0.0, %v473
  %v475 = vpop.f32.mrf.mxu0
  %v476 = vpop.f32.mrf.mxu0
  %v477 = vadd.f32 0.0, %v476
  %v478 = vpop.f32.mrf.mxu0
  %479 = vmatprep.mubr.bf16.mxu0 %v192
  %480 = vmatmul.mubr.bf16.gmra.mxu0 %v191
  %v481 = vpop.f32.mrf.mxu0
  %v482 = vadd.f32 0.0, %v481
  %v483 = vpop.f32.mrf.mxu0
  %v484 = vpop.f32.mrf.mxu0
  %v485 = vadd.f32 0.0, %v484
  %v486 = vpop.f32.mrf.mxu0
  %487 = vmatprep.mubr.bf16.mxu0 %v196
  %488 = vmatmul.mubr.bf16.gmra.mxu0 %v195
  %v489 = vpop.f32.mrf.mxu0
  %v490 = vadd.f32 0.0, %v489
  %v491 = vpop.f32.mrf.mxu0
  %v492 = vpop.f32.mrf.mxu0
  %v493 = vadd.f32 0.0, %v492
  %v494 = vpop.f32.mrf.mxu0
  %495 = vmatprep.mubr.bf16.mxu0 %v200
  %496 = vmatmul.mubr.bf16.gmra.mxu0 %v199
  %v497 = vpop.f32.mrf.mxu0
  %v498 = vadd.f32 0.0, %v497
  %v499 = vpop.f32.mrf.mxu0
  %v500 = vpop.f32.mrf.mxu0
  %v501 = vadd.f32 0.0, %v500
  %v502 = vpop.f32.mrf.mxu0
  %503 = vmatprep.mubr.bf16.mxu0 %v204
  %504 = vmatmul.mubr.bf16.gmra.mxu0 %v203
  %v505 = vpop.f32.mrf.mxu0
  %v506 = vadd.f32 0.0, %v505
  %v507 = vpop.f32.mrf.mxu0
  %v508 = vpop.f32.mrf.mxu0
  %v509 = vadd.f32 0.0, %v508
  %v510 = vpop.f32.mrf.mxu0
  %511 = vmatprep.mubr.bf16.mxu0 %v208
  %512 = vmatmul.mubr.bf16.gmra.mxu0 %v207
  %v513 = vpop.f32.mrf.mxu0
  %v514 = vadd.f32 0.0, %v513
  %v515 = vpop.f32.mrf.mxu0
  %v516 = vpop.f32.mrf.mxu0
  %v517 = vpop.f32.mrf.mxu0
  %518 = vdwg.mxu0
  %519 = vmatprep.subr.bf16.mxu0 0
  %520 = vmatpush1.bf16.msra.mxu0 %v390
  %521 = vmatprep.subr.bf16.mxu0 0
  %522 = vmatpush1.bf16.msra.mxu0 %v389
  %523 = vmatprep.subr.bf16.mxu0 0
  %524 = vmatpush1.bf16.msra.mxu0 %v388
  %525 = vmatprep.subr.bf16.mxu0 0
  %526 = vmatpush1.bf16.msra.mxu0 %v387
  %527 = vmatprep.subr.bf16.mxu0 0
  %528 = vmatpush1.bf16.msra.mxu0 %v386
  %529 = vmatprep.subr.bf16.mxu0 0
  %530 = vmatpush1.bf16.msra.mxu0 %v385
  %531 = vmatprep.subr.bf16.mxu0 0
  %532 = vmatpush1.bf16.msra.mxu0 %v384
  %533 = vmatprep.subr.bf16.mxu0 0
  %534 = vmatpush1.bf16.msra.mxu0 %v383
  %535 = vmatprep.subr.bf16.mxu0 0
  %536 = vmatpush2.bf16.msra.mxu0 %v398
  %537 = vmatprep.subr.bf16.mxu0 0
  %538 = vmatpush2.bf16.msra.mxu0 %v397
  %539 = vmatprep.subr.bf16.mxu0 0
  %540 = vmatpush2.bf16.msra.mxu0 %v396
  %541 = vmatprep.subr.bf16.mxu0 0
  %542 = vmatpush2.bf16.msra.mxu0 %v395
  %543 = vmatprep.subr.bf16.mxu0 0
  %544 = vmatpush2.bf16.msra.mxu0 %v394
  %545 = vmatprep.subr.bf16.mxu0 0
  %546 = vmatpush2.bf16.msra.mxu0 %v393
  %547 = vmatprep.subr.bf16.mxu0 0
  %548 = vmatpush2.bf16.msra.mxu0 %v392
  %549 = vmatprep.subr.bf16.mxu0 0
  %550 = vmatpush2.bf16.msra.mxu0 %v391
  %551 = vmatprep.mubr.bf16.mxu0 %v186
  %552 = vmatmul.mubr.bf16.gmra.mxu0 %v185
  %v553 = vpop.f32.mrf.mxu0
  %v554 = vadd.f32 %v466, %v553
  %v555 = vpop.f32.mrf.mxu0
  %v556 = vpop.f32.mrf.mxu0
  %v557 = vadd.f32 %v469, %v556
  %v558 = vpop.f32.mrf.mxu0
  %559 = vmatprep.mubr.bf16.mxu0 %v190
  %560 = vmatmul.mubr.bf16.gmra.mxu0 %v189
  %v561 = vpop.f32.mrf.mxu0
  %v562 = vadd.f32 %v474, %v561
  %v563 = vpop.f32.mrf.mxu0
  %v564 = vpop.f32.mrf.mxu0
  %v565 = vadd.f32 %v477, %v564
  %v566 = vpop.f32.mrf.mxu0
  %567 = vmatprep.mubr.bf16.mxu0 %v194
  %568 = vmatmul.mubr.bf16.gmra.mxu0 %v193
  %v569 = vpop.f32.mrf.mxu0
  %v570 = vadd.f32 %v482, %v569
  %v571 = vpop.f32.mrf.mxu0
  %v572 = vpop.f32.mrf.mxu0
  %v573 = vadd.f32 %v485, %v572
  %v574 = vpop.f32.mrf.mxu0
  %575 = vmatprep.mubr.bf16.mxu0 %v198
  %576 = vmatmul.mubr.bf16.gmra.mxu0 %v197
  %v577 = vpop.f32.mrf.mxu0
  %v578 = vadd.f32 %v490, %v577
  %v579 = vpop.f32.mrf.mxu0
  %v580 = vpop.f32.mrf.mxu0
  %v581 = vadd.f32 %v493, %v580
  %v582 = vpop.f32.mrf.mxu0
  %583 = vmatprep.mubr.bf16.mxu0 %v202
  %584 = vmatmul.mubr.bf16.gmra.mxu0 %v201
  %v585 = vpop.f32.mrf.mxu0
  %v586 = vadd.f32 %v498, %v585
  %v587 = vpop.f32.mrf.mxu0
  %v588 = vpop.f32.mrf.mxu0
  %v589 = vadd.f32 %v501, %v588
  %v590 = vpop.f32.mrf.mxu0
  %591 = vmatprep.mubr.bf16.mxu0 %v206
  %592 = vmatmul.mubr.bf16.gmra.mxu0 %v205
  %v593 = vpop.f32.mrf.mxu0
  %v594 = vadd.f32 %v506, %v593
  %v595 = vpop.f32.mrf.mxu0
  %v596 = vpop.f32.mrf.mxu0
  %v597 = vadd.f32 %v509, %v596
  %v598 = vpop.f32.mrf.mxu0
  %599 = vmatprep.mubr.bf16.mxu0 %v210
  %600 = vmatmul.mubr.bf16.gmra.mxu0 %v209
  %v601 = vpop.f32.mrf.mxu0
  %v602 = vadd.f32 %v514, %v601
  %v603 = vpop.f32.mrf.mxu0
  %v604 = vpop.f32.mrf.mxu0
  %v605 = vpop.f32.mrf.mxu0
  %606 = vdwg.mxu0
  %v607 = vpack.c.bf16 %v557, %v554
  %v608 = vpack.c.bf16 %v565, %v562
  %v609 = vpack.c.bf16 %v573, %v570
  %v610 = vpack.c.bf16 %v581, %v578
  %v611 = vpack.c.bf16 %v589, %v586
  %v612 = vpack.c.bf16 %v597, %v594
  %v613 = vpack.c.bf16 %v602, %v602
  %v621 = vunpack.c.l.b16 %v607
  %v622 = vunpack.c.h.b16 %v607
  %v623 = vunpack.c.l.b16 %v608
  %v624 = vunpack.c.h.b16 %v608
  %v625 = vunpack.c.l.b16 %v609
  %v626 = vunpack.c.h.b16 %v609
  %v627 = vunpack.c.l.b16 %v610
  %v628 = vunpack.c.h.b16 %v610
  %v629 = vunpack.c.l.b16 %v611
  %v630 = vunpack.c.h.b16 %v611
  %v631 = vunpack.c.l.b16 %v612
  %v632 = vunpack.c.h.b16 %v612
  %v633 = vunpack.c.l.b16 %v613
  %v634 = vpack.c.b16 %v621, %v621
  %v635 = vpack.c.b16 %v622, %v622
  %v636 = vpack.c.b16 %v623, %v623
  %v637 = vpack.c.b16 %v624, %v624
  %v638 = vpack.c.b16 %v625, %v625
  %v639 = vpack.c.b16 %v626, %v626
  %v640 = vpack.c.b16 %v627, %v627
  %v641 = vpack.c.b16 %v628, %v628
  %v642 = vpack.c.b16 %v629, %v629
  %v643 = vpack.c.b16 %v630, %v630
  %v644 = vpack.c.b16 %v631, %v631
  %v645 = vpack.c.b16 %v632, %v632
  %v646 = vpack.c.b16 %v633, %v633
  %660 = vst [vmem:[%s2] sm:$0xf] %v634
  %661 = vst [vmem:[%s2 + $0x4] sm:$0xf] %v635
  %662 = vst [vmem:[%s2 + $0x8] sm:$0xf] %v636
  %663 = vst [vmem:[%s2 + $0xc] sm:$0xf] %v637
  %664 = vst [vmem:[%s2 + $0x10] sm:$0xf] %v638
  %665 = vst [vmem:[%s2 + $0x14] sm:$0xf] %v639
  %666 = vst [vmem:[%s2 + $0x18] sm:$0xf] %v640
  %667 = vst [vmem:[%s2 + $0x1c] sm:$0xf] %v641
  %668 = vst [vmem:[%s2 + $0x20] sm:$0xf] %v642
  %669 = vst [vmem:[%s2 + $0x24] sm:$0xf] %v643
  %670 = vst [vmem:[%s2 + $0x28] sm:$0xf] %v644
  %671 = vst [vmem:[%s2 + $0x2c] sm:$0xf] %v645
  %672 = vst [vmem:[%s2 + $0x30] sm:$0xf] %v646
  %s673 = smul.u32 0, 104
  %v674 = vlaneseq
  %v675 = vshrl.u32 %v674, 7
  %v676 = vadd.s32 %v675, 8
  %v677 = vadd.s32 %v675, 16
  %v678 = vadd.s32 %v675, 24
  %v679 = vadd.s32 %v675, 32
  %v680 = vadd.s32 %v675, 40
  %v681 = vadd.s32 %v675, 48
  %v682 = vadd.s32 %v675, 56
  %v683 = vadd.s32 %v675, 64
  %v684 = vadd.s32 %v675, 72
  %v685 = vadd.s32 %v675, 80
  %v686 = vadd.s32 %v675, 88
  %v687 = vadd.s32 %v675, 96
  %v688 = vstv %s673
  %v689 = vadd.s32 %v688, %v675
  %v690 = vadd.s32 %v688, %v676
  %v691 = vadd.s32 %v688, %v677
  %v692 = vadd.s32 %v688, %v678
  %v693 = vadd.s32 %v688, %v679
  %v694 = vadd.s32 %v688, %v680
  %v695 = vadd.s32 %v688, %v681
  %v696 = vadd.s32 %v688, %v682
  %v697 = vadd.s32 %v688, %v683
  %v698 = vadd.s32 %v688, %v684
  %v699 = vadd.s32 %v688, %v685
  %v700 = vadd.s32 %v688, %v686
  %v701 = vadd.s32 %v688, %v687
  %vm702 = vcmp.lt.s32.totalorder %v689, 98
  %vm703 = vcmp.lt.s32.totalorder %v690, 98
  %vm704 = vcmp.lt.s32.totalorder %v691, 98
  %vm705 = vcmp.lt.s32.totalorder %v692, 98
  %vm706 = vcmp.lt.s32.totalorder %v693, 98
  %vm707 = vcmp.lt.s32.totalorder %v694, 98
  %vm708 = vcmp.lt.s32.totalorder %v695, 98
  %vm709 = vcmp.lt.s32.totalorder %v696, 98
  %vm710 = vcmp.lt.s32.totalorder %v697, 98
  %vm711 = vcmp.lt.s32.totalorder %v698, 98
  %vm712 = vcmp.lt.s32.totalorder %v699, 98
  %vm713 = vcmp.lt.s32.totalorder %v700, 98
  %vm714 = vcmp.lt.s32.totalorder %v701, 98
  %v715 = vsel %vm702, 1, 0
  %v716 = vsel %vm703, 1, 0
  %v717 = vsel %vm704, 1, 0
  %v718 = vsel %vm705, 1, 0
  %v719 = vsel %vm706, 1, 0
  %v720 = vsel %vm707, 1, 0
  %v721 = vsel %vm708, 1, 0
  %v722 = vsel %vm709, 1, 0
  %v723 = vsel %vm710, 1, 0
  %v724 = vsel %vm711, 1, 0
  %v725 = vsel %vm712, 1, 0
  %v726 = vsel %vm713, 1, 0
  %v727 = vsel %vm714, 1, 0
  %vm728 = vcmp.eq.s32.totalorder %v715, 1
  %vm729 = vcmp.eq.s32.totalorder %v716, 1
  %vm730 = vcmp.eq.s32.totalorder %v717, 1
  %vm731 = vcmp.eq.s32.totalorder %v718, 1
  %vm732 = vcmp.eq.s32.totalorder %v719, 1
  %vm733 = vcmp.eq.s32.totalorder %v720, 1
  %vm734 = vcmp.eq.s32.totalorder %v721, 1
  %vm735 = vcmp.eq.s32.totalorder %v722, 1
  %vm736 = vcmp.eq.s32.totalorder %v723, 1
  %vm737 = vcmp.eq.s32.totalorder %v724, 1
  %vm738 = vcmp.eq.s32.totalorder %v725, 1
  %vm739 = vcmp.eq.s32.totalorder %v726, 1
  %vm740 = vcmp.eq.s32.totalorder %v727, 1
  %v741 = vsel %vm728, %v554, 0.0
  %v742 = vsel %vm729, %v557, 0.0
  %v743 = vsel %vm730, %v562, 0.0
  %v744 = vsel %vm731, %v565, 0.0
  %v745 = vsel %vm732, %v570, 0.0
  %v746 = vsel %vm733, %v573, 0.0
  %v747 = vsel %vm734, %v578, 0.0
  %v748 = vsel %vm735, %v581, 0.0
  %v749 = vsel %vm736, %v586, 0.0
  %v750 = vsel %vm737, %v589, 0.0
  %v751 = vsel %vm738, %v594, 0.0
  %v752 = vsel %vm739, %v597, 0.0
  %v753 = vsel %vm740, %v602, 0.0
  %v754 = vadd.f32 %v741, %v742
  %v755 = vadd.f32 %v754, %v743
  %v756 = vadd.f32 %v755, %v744
  %v757 = vadd.f32 %v756, %v745
  %v758 = vadd.f32 %v757, %v746
  %v759 = vadd.f32 %v758, %v747
  %v760 = vadd.f32 %v759, %v748
  %v761 = vadd.f32 %v760, %v749
  %v762 = vadd.f32 %v761, %v750
  %v763 = vadd.f32 %v762, %v751
  %v764 = vadd.f32 %v763, %v752
  %v765 = vadd.f32 %v764, %v753
  %v766 = vrot.slane %v765, 4
  %v767 = vadd.f32 %v765, %v766
  %v768 = vrot.slane %v767, 2
  %v769 = vadd.f32 %v767, %v768
  %v770 = vrot.slane %v769, 1
  %v771 = vadd.f32 %v769, %v770
  %772 = vst [vmem:[%s3] sm:$0x1] %v771
  %v773 = vmul.f32 %v741, %v741
  %v774 = vmul.f32 %v742, %v742
  %v775 = vmul.f32 %v743, %v743
  %v776 = vmul.f32 %v744, %v744
  %v777 = vmul.f32 %v745, %v745
  %v778 = vmul.f32 %v746, %v746
  %v779 = vmul.f32 %v747, %v747
  %v780 = vmul.f32 %v748, %v748
  %v781 = vmul.f32 %v749, %v749
  %v782 = vmul.f32 %v750, %v750
  %v783 = vmul.f32 %v751, %v751
  %v784 = vmul.f32 %v752, %v752
  %v785 = vmul.f32 %v753, %v753
  %v786 = vadd.f32 %v773, %v774
  %v787 = vadd.f32 %v786, %v775
  %v788 = vadd.f32 %v787, %v776
  %v789 = vadd.f32 %v788, %v777
  %v790 = vadd.f32 %v789, %v778
  %v791 = vadd.f32 %v790, %v779
  %v792 = vadd.f32 %v791, %v780
  %v793 = vadd.f32 %v792, %v781
  %v794 = vadd.f32 %v793, %v782
  %v795 = vadd.f32 %v794, %v783
  %v796 = vadd.f32 %v795, %v784
  %v797 = vadd.f32 %v796, %v785
  %v798 = vrot.slane %v797, 4
  %v799 = vadd.f32 %v797, %v798
  %v800 = vrot.slane %v799, 2
  %v801 = vadd.f32 %v799, %v800
  %v802 = vrot.slane %v801, 1
  %v803 = vadd.f32 %v801, %v802
  %804 = vst [vmem:[%s4] sm:$0x1] %v803
  // Predicated region
  $region10: #{discriminator_forward.5} parent=0 // pred_check
    _
  $region11: #{discriminator_forward.5} parent=0 // pred_check_branch
    %806 = sbr.rel (0) target = $region13
  $region12: #{discriminator_forward.5} parent=0 // pred_region
    _
  $region13: #{discriminator_forward.5} parent=0 // pred_fallthru
    _
  // Predicated region
  $region14: #{discriminator_forward.5} parent=0 // pred_check
    _
  $region15: #{discriminator_forward.5} parent=0 // pred_check_branch
    %808 = sbr.rel (0) target = $region17
  $region16: #{discriminator_forward.5} parent=0 // pred_region
    _
  $region17: #{discriminator_forward.5} parent=0 // pred_fallthru
    _
  // Predicated region
  $region18: #{discriminator_forward.5} parent=0 // pred_check
    _
  $region19: #{discriminator_forward.5} parent=0 // pred_check_branch
    %810 = sbr.rel (0) target = $region21
  $region20: #{discriminator_forward.5} parent=0 // pred_region
    _
  $region21: #{discriminator_forward.5} parent=0 // pred_fallthru
    _
  // Predicated region
  $region22: #{discriminator_forward.5} parent=0 // pred_check
    _
  $region23: #{discriminator_forward.5} parent=0 // pred_check_branch
    %812 = sbr.rel (0) target = $region25
  $region24: #{discriminator_forward.5} parent=0 // pred_region
    _
  $region25: #{discriminator_forward.5} parent=0 // pred_fallthru
    _
  // Predicated region
  $region26: #{discriminator_forward.5} parent=0 // pred_check
    _
  $region27: #{discriminator_forward.5} parent=0 // pred_check_branch
    %814 = sbr.rel (0) target = $region29
  $region28: #{discriminator_forward.5} parent=0 // pred_region
    _
  $region29: #{discriminator_forward.5} parent=0 // pred_fallthru
    _
  // Predicated region
  $region30: #{discriminator_forward.5} parent=0 // pred_check
    _
  $region31: #{discriminator_forward.5} parent=0 // pred_check_branch
    %816 = sbr.rel (0) target = $region33
  $region32: #{discriminator_forward.5} parent=0 // pred_region
    _
  $region33: #{discriminator_forward.5} parent=0 // pred_fallthru
    _

// kernel: discriminator_forward.7
$region0: #{discriminator_forward.7}
  #allocation0 [shape = 'u32[]', space=smem, size = 0x4, offset = 0x4, fixed_abs, tag = 'smem constant byte address 0x4 - core index']
  #allocation1 [shape = 'u32[144,128]{1,0:T(1,128)}', space=vmem, size = 0x12000, scoped, tag = 'internal scratch']
  #allocation2 [shape = 'f32[1,1]{1,0:T(1,128)S(1)}', space=vmem, size = 0x200, scoped, tag = 'scoped memory for discriminator_forward.7']
  %s0 = inlined_call_operand.vmem [shape: bf16[8,1152], index: 0, kind: input, shape index: {}]
  %s1 = inlined_call_operand.vmem [shape: f32[1,1152], index: 1, kind: input, shape index: {}]
  %s2 = inlined_call_operand.<no memory space> [shape: f32[1,1], index: 2, kind: input, shape index: {}]
  %s3 = inlined_call_operand.vmem [shape: f32[1,1152], index: 3, kind: input, shape index: {}]
  %s4 = inlined_call_operand.vmem [shape: f32[1,1152], index: 4, kind: input, shape index: {}]
  %s5 = inlined_call_operand.vmem [shape: f32[8,1], index: 5, kind: output, shape index: {}]
  %s6 = sld [smem:[#allocation0]]
  $region30: #{discriminator_forward.7} parent=0
    _
  %s8 = ssub.s32 1, %s6
  %s9 = scalar_select 0, %s8, %s6
  %v10 = vstv %s2
  %11 = vst [vmem:[#allocation2] sm:$0x1] %v10
  // Predicated region
  $region2: #{discriminator_forward.7} parent=0 // pred_check
    _
  $region3: #{discriminator_forward.7} parent=0 // pred_check_branch
    %13 = sbr.rel (0) target = $region5
  $region4: #{discriminator_forward.7} parent=0 // pred_region
    _
  $region5: #{discriminator_forward.7} parent=0 // pred_fallthru
    _
  // Predicated region
  $region6: #{discriminator_forward.7} parent=0 // pred_check
    _
  $region7: #{discriminator_forward.7} parent=0 // pred_check_branch
    %15 = sbr.rel (0) target = $region9
  $region8: #{discriminator_forward.7} parent=0 // pred_region
    _
  $region9: #{discriminator_forward.7} parent=0 // pred_fallthru
    _
  // Predicated region
  $region10: #{discriminator_forward.7} parent=0 // pred_check
    _
  $region11: #{discriminator_forward.7} parent=0 // pred_check_branch
    %17 = sbr.rel (0) target = $region13
  $region12: #{discriminator_forward.7} parent=0 // pred_region
    _
  $region13: #{discriminator_forward.7} parent=0 // pred_fallthru
    _
  // Predicated region
  $region14: #{discriminator_forward.7} parent=0 // pred_check
    _
  $region15: #{discriminator_forward.7} parent=0 // pred_check_branch
    %19 = sbr.rel (0) target = $region17
  $region16: #{discriminator_forward.7} parent=0 // pred_region
    _
  $region17: #{discriminator_forward.7} parent=0 // pred_fallthru
    _
  // Predicated region
  $region18: #{discriminator_forward.7} parent=0 // pred_check
    _
  $region19: #{discriminator_forward.7} parent=0 // pred_check_branch
    %21 = sbr.rel (0) target = $region21
  $region20: #{discriminator_forward.7} parent=0 // pred_region
    _
  $region21: #{discriminator_forward.7} parent=0 // pred_fallthru
    _
  %v22 = vld [vmem:[%s0] sm:$0xff]
  %v23 = vld [vmem:[%s0 + $0x8] sm:$0xff]
  %v24 = vld [vmem:[%s0 + $0x10] sm:$0xff]
  %v25 = vld [vmem:[%s0 + $0x18] sm:$0xff]
  %v26 = vld [vmem:[%s0 + $0x20] sm:$0xf]
  %v27 = vunpack.c.l.bf16 %v22
  %v28 = vunpack.c.h.bf16 %v22
  %v29 = vunpack.c.l.bf16 %v23
  %v30 = vunpack.c.h.bf16 %v23
  %v31 = vunpack.c.l.bf16 %v24
  %v32 = vunpack.c.h.bf16 %v24
  %v33 = vunpack.c.l.bf16 %v25
  %v34 = vunpack.c.h.bf16 %v25
  %v35 = vunpack.c.l.bf16 %v26
  %v36 = vld [vmem:[%s3] sm:$0xff]
  %v37 = vld [vmem:[%s3 + $0x8] sm:$0x1]
  %v40 = vlaneseq
  %v41 = vshrl.u32 %v40, 7
  %v42 = vsub.s32 0, %v41
  %v43 = vrot.slane %v36, %v42
  %v44 = vlaneseq
  %v45 = vshrl.u32 %v44, 7
  %v46 = vsub.s32 1, %v45
  %v47 = vrot.slane %v36, %v46
  %v48 = vlaneseq
  %v49 = vshrl.u32 %v48, 7
  %v50 = vsub.s32 2, %v49
  %v51 = vrot.slane %v36, %v50
  %v52 = vlaneseq
  %v53 = vshrl.u32 %v52, 7
  %v54 = vsub.s32 3, %v53
  %v55 = vrot.slane %v36, %v54
  %v56 = vlaneseq
  %v57 = vshrl.u32 %v56, 7
  %v58 = vsub.s32 4, %v57
  %v59 = vrot.slane %v36, %v58
  %v60 = vlaneseq
  %v61 = vshrl.u32 %v60, 7
  %v62 = vsub.s32 5, %v61
  %v63 = vrot.slane %v36, %v62
  %v64 = vlaneseq
  %v65 = vshrl.u32 %v64, 7
  %v66 = vsub.s32 6, %v65
  %v67 = vrot.slane %v36, %v66
  %v68 = vlaneseq
  %v69 = vshrl.u32 %v68, 7
  %v70 = vsub.s32 7, %v69
  %v71 = vrot.slane %v36, %v70
  %v72 = vlaneseq
  %v73 = vshrl.u32 %v72, 7
  %v74 = vsub.s32 0, %v73
  %v75 = vrot.slane %v37, %v74
  %v85 = vmul.f32 %v27, %v43
  %v86 = vmul.f32 %v28, %v47
  %v87 = vmul.f32 %v29, %v51
  %v88 = vmul.f32 %v30, %v55
  %v89 = vmul.f32 %v31, %v59
  %v90 = vmul.f32 %v32, %v63
  %v91 = vmul.f32 %v33, %v67
  %v92 = vmul.f32 %v34, %v71
  %v93 = vmul.f32 %v35, %v75
  %v94 = vld [vmem:[%s4] sm:$0xff]
  %v95 = vld [vmem:[%s4 + $0x8] sm:$0x1]
  %v98 = vlaneseq
  %v99 = vshrl.u32 %v98, 7
  %v100 = vsub.s32 0, %v99
  %v101 = vrot.slane %v94, %v100
  %v102 = vlaneseq
  %v103 = vshrl.u32 %v102, 7
  %v104 = vsub.s32 1, %v103
  %v105 = vrot.slane %v94, %v104
  %v106 = vlaneseq
  %v107 = vshrl.u32 %v106, 7
  %v108 = vsub.s32 2, %v107
  %v109 = vrot.slane %v94, %v108
  %v110 = vlaneseq
  %v111 = vshrl.u32 %v110, 7
  %v112 = vsub.s32 3, %v111
  %v113 = vrot.slane %v94, %v112
  %v114 = vlaneseq
  %v115 = vshrl.u32 %v114, 7
  %v116 = vsub.s32 4, %v115
  %v117 = vrot.slane %v94, %v116
  %v118 = vlaneseq
  %v119 = vshrl.u32 %v118, 7
  %v120 = vsub.s32 5, %v119
  %v121 = vrot.slane %v94, %v120
  %v122 = vlaneseq
  %v123 = vshrl.u32 %v122, 7
  %v124 = vsub.s32 6, %v123
  %v125 = vrot.slane %v94, %v124
  %v126 = vlaneseq
  %v127 = vshrl.u32 %v126, 7
  %v128 = vsub.s32 7, %v127
  %v129 = vrot.slane %v94, %v128
  %v130 = vlaneseq
  %v131 = vshrl.u32 %v130, 7
  %v132 = vsub.s32 0, %v131
  %v133 = vrot.slane %v95, %v132
  %v143 = vadd.f32 %v85, %v101
  %v144 = vadd.f32 %v86, %v105
  %v145 = vadd.f32 %v87, %v109
  %v146 = vadd.f32 %v88, %v113
  %v147 = vadd.f32 %v89, %v117
  %v148 = vadd.f32 %v90, %v121
  %v149 = vadd.f32 %v91, %v125
  %v150 = vadd.f32 %v92, %v129
  %v151 = vadd.f32 %v93, %v133
  %vm152 = vcmp.ge.f32.partialorder %v143, 0.0
  %vm153 = vcmp.ge.f32.partialorder %v144, 0.0
  %vm154 = vcmp.ge.f32.partialorder %v145, 0.0
  %vm155 = vcmp.ge.f32.partialorder %v146, 0.0
  %vm156 = vcmp.ge.f32.partialorder %v147, 0.0
  %vm157 = vcmp.ge.f32.partialorder %v148, 0.0
  %vm158 = vcmp.ge.f32.partialorder %v149, 0.0
  %vm159 = vcmp.ge.f32.partialorder %v150, 0.0
  %vm160 = vcmp.ge.f32.partialorder %v151, 0.0
  %v161 = vmul.f32 %v143, 0.2
  %v162 = vmul.f32 %v144, 0.2
  %v163 = vmul.f32 %v145, 0.2
  %v164 = vmul.f32 %v146, 0.2
  %v165 = vmul.f32 %v147, 0.2
  %v166 = vmul.f32 %v148, 0.2
  %v167 = vmul.f32 %v149, 0.2
  %v168 = vmul.f32 %v150, 0.2
  %v169 = vmul.f32 %v151, 0.2
  %v170 = vsel %vm152, %v143, %v161
  %v171 = vsel %vm153, %v144, %v162
  %v172 = vsel %vm154, %v145, %v163
  %v173 = vsel %vm155, %v146, %v164
  %v174 = vsel %vm156, %v147, %v165
  %v175 = vsel %vm157, %v148, %v166
  %v176 = vsel %vm158, %v149, %v167
  %v177 = vsel %vm159, %v150, %v168
  %v178 = vsel %vm160, %v151, %v169
  %v179 = vld [vmem:[%s1] sm:$0xff]
  %v180 = vld [vmem:[%s1 + $0x8] sm:$0x1]
  %v183 = vlaneseq
  %v184 = vshrl.u32 %v183, 7
  %v185 = vsub.s32 0, %v184
  %v186 = vrot.slane %v179, %v185
  %v187 = vlaneseq
  %v188 = vshrl.u32 %v187, 7
  %v189 = vsub.s32 1, %v188
  %v190 = vrot.slane %v179, %v189
  %v191 = vlaneseq
  %v192 = vshrl.u32 %v191, 7
  %v193 = vsub.s32 2, %v192
  %v194 = vrot.slane %v179, %v193
  %v195 = vlaneseq
  %v196 = vshrl.u32 %v195, 7
  %v197 = vsub.s32 3, %v196
  %v198 = vrot.slane %v179, %v197
  %v199 = vlaneseq
  %v200 = vshrl.u32 %v199, 7
  %v201 = vsub.s32 4, %v200
  %v202 = vrot.slane %v179, %v201
  %v203 = vlaneseq
  %v204 = vshrl.u32 %v203, 7
  %v205 = vsub.s32 5, %v204
  %v206 = vrot.slane %v179, %v205
  %v207 = vlaneseq
  %v208 = vshrl.u32 %v207, 7
  %v209 = vsub.s32 6, %v208
  %v210 = vrot.slane %v179, %v209
  %v211 = vlaneseq
  %v212 = vshrl.u32 %v211, 7
  %v213 = vsub.s32 7, %v212
  %v214 = vrot.slane %v179, %v213
  %v215 = vlaneseq
  %v216 = vshrl.u32 %v215, 7
  %v217 = vsub.s32 0, %v216
  %v218 = vrot.slane %v180, %v217
  %v228 = vmul.f32 %v170, %v186
  %v229 = vmul.f32 %v171, %v190
  %v230 = vmul.f32 %v172, %v194
  %v231 = vmul.f32 %v173, %v198
  %v232 = vmul.f32 %v174, %v202
  %v233 = vmul.f32 %v175, %v206
  %v234 = vmul.f32 %v176, %v210
  %v235 = vmul.f32 %v177, %v214
  %v236 = vmul.f32 %v178, %v218
  %v237 = vadd.f32 %v228, %v229
  %v238 = vadd.f32 %v237, %v230
  %v239 = vadd.f32 %v238, %v231
  %v240 = vadd.f32 %v239, %v232
  %v241 = vadd.f32 %v240, %v233
  %v242 = vadd.f32 %v241, %v234
  %v243 = vadd.f32 %v242, %v235
  %v244 = vadd.f32 %v243, %v236
  %245 = vadd.xlane.f32.xlu0 %v244
  %v246 = vpop.xlane.xlu0 %245
  %v247 = vld [vmem:[#allocation2] sm:$0x1]
  %v249 = vlaneseq
  %v250 = vshrl.u32 %v249, 7
  %v251 = vsub.s32 0, %v250
  %v252 = vrot.slane %v247, %v251
  %v254 = vadd.f32 %v246, %v252
  %v255 = vsub.f32 0.0, %v254
  %v256 = vmul.f32 %v255, 1.442695
  %v257 = vpow.pop %v256
  %v258 = vadd.f32 %v257, 1.0
  %v259 = vrcp.pop %v258
  %v260 = vmul.f32 1.0, %v259
  %vm261 = vcmask 7168
  %262 = vst.msk [vmem:[%s5] sm:$0xff] %vm261, %v260
  // Predicated region
  $region22: #{discriminator_forward.7} parent=0 // pred_check
    _
  $region23: #{discriminator_forward.7} parent=0 // pred_check_branch
    %264 = sbr.rel (0) target = $region25
  $region24: #{discriminator_forward.7} parent=0 // pred_region
    _
  $region25: #{discriminator_forward.7} parent=0 // pred_fallthru
    _
  // Predicated region
  $region26: #{discriminator_forward.7} parent=0 // pred_check
    _
  $region27: #{discriminator_forward.7} parent=0 // pred_check_branch
    %266 = sbr.rel (0) target = $region29
  $region28: #{discriminator_forward.7} parent=0 // pred_region
    _
  $region29: #{discriminator_forward.7} parent=0 // pred_fallthru
    _

// kernel: discriminator_forward.6
$region0: #{discriminator_forward.6}
  #allocation0 [shape = 'u32[]', space=smem, size = 0x4, offset = 0x4, fixed_abs, tag = 'smem constant byte address 0x4 - core index']
  #allocation1 [shape = 'u32[144,128]{1,0:T(1,128)}', space=vmem, size = 0x12000, scoped, tag = 'internal scratch']
  %s0 = inlined_call_operand.vmem [shape: bf16[24,576], index: 0, kind: input, shape index: {}]
  %s1 = inlined_call_operand.vmem [shape: bf16[576,128], index: 1, kind: input, shape index: {}]
  %s2 = inlined_call_operand.vmem [shape: f32[1,576], index: 2, kind: input, shape index: {}]
  %s3 = inlined_call_operand.vmem [shape: f32[1,576], index: 3, kind: input, shape index: {}]
  %s4 = inlined_call_operand.vmem [shape: bf16[24,128], index: 4, kind: output, shape index: {0}]
  %s5 = inlined_call_operand.vmem [shape: f32[1,128], index: 5, kind: output, shape index: {1}]
  %s6 = inlined_call_operand.vmem [shape: f32[1,128], index: 6, kind: output, shape index: {2}]
  %7 = xla_tuple %s4, %s5, %s6
  %s8 = sld [smem:[#allocation0]]
  $region42: #{discriminator_forward.6} parent=0
    _
  %s10 = ssub.s32 1, %s8
  %s11 = scalar_select 0, %s10, %s8
  // Predicated region
  $region2: #{discriminator_forward.6} parent=0 // pred_check
    _
  $region3: #{discriminator_forward.6} parent=0 // pred_check_branch
    %13 = sbr.rel (0) target = $region5
  $region4: #{discriminator_forward.6} parent=0 // pred_region
    _
  $region5: #{discriminator_forward.6} parent=0 // pred_fallthru
    _
  // Predicated region
  $region6: #{discriminator_forward.6} parent=0 // pred_check
    _
  $region7: #{discriminator_forward.6} parent=0 // pred_check_branch
    %15 = sbr.rel (0) target = $region9
  $region8: #{discriminator_forward.6} parent=0 // pred_region
    _
  $region9: #{discriminator_forward.6} parent=0 // pred_fallthru
    _
  // Predicated region
  $region10: #{discriminator_forward.6} parent=0 // pred_check
    _
  $region11: #{discriminator_forward.6} parent=0 // pred_check_branch
    %17 = sbr.rel (0) target = $region13
  $region12: #{discriminator_forward.6} parent=0 // pred_region
    _
  $region13: #{discriminator_forward.6} parent=0 // pred_fallthru
    _
  // Predicated region
  $region14: #{discriminator_forward.6} parent=0 // pred_check
    _
  $region15: #{discriminator_forward.6} parent=0 // pred_check_branch
    %19 = sbr.rel (0) target = $region17
  $region16: #{discriminator_forward.6} parent=0 // pred_region
    _
  $region17: #{discriminator_forward.6} parent=0 // pred_fallthru
    _
  %v21 = vld [vmem:[%s0] sm:$0xff]
  %v22 = vld [vmem:[%s0 + $0x8] sm:$0xff]
  %v23 = vld [vmem:[%s0 + $0x10] sm:$0xf]
  %v24 = vld [vmem:[%s0 + $0x14] sm:$0xff]
  %v25 = vld [vmem:[%s0 + $0x1c] sm:$0xff]
  %v26 = vld [vmem:[%s0 + $0x24] sm:$0xf]
  %v27 = vld [vmem:[%s0 + $0x28] sm:$0xff]
  %v28 = vld [vmem:[%s0 + $0x30] sm:$0xff]
  %v29 = vld [vmem:[%s0 + $0x38] sm:$0xf]
  %v30 = vunpack.c.l.bf16 %v21
  %v31 = vunpack.c.h.bf16 %v21
  %v32 = vunpack.c.l.bf16 %v22
  %v33 = vunpack.c.h.bf16 %v22
  %v34 = vunpack.c.l.bf16 %v23
  %v35 = vunpack.c.l.bf16 %v24
  %v36 = vunpack.c.h.bf16 %v24
  %v37 = vunpack.c.l.bf16 %v25
  %v38 = vunpack.c.h.bf16 %v25
  %v39 = vunpack.c.l.bf16 %v26
  %v40 = vunpack.c.l.bf16 %v27
  %v41 = vunpack.c.h.bf16 %v27
  %v42 = vunpack.c.l.bf16 %v28
  %v43 = vunpack.c.h.bf16 %v28
  %v44 = vunpack.c.l.bf16 %v29
  %v45 = vld [vmem:[%s2] sm:$0x1f]
  %v47 = vlaneseq
  %v48 = vshrl.u32 %v47, 7
  %v49 = vsub.s32 0, %v48
  %v50 = vrot.slane %v45, %v49
  %v51 = vlaneseq
  %v52 = vshrl.u32 %v51, 7
  %v53 = vsub.s32 1, %v52
  %v54 = vrot.slane %v45, %v53
  %v55 = vlaneseq
  %v56 = vshrl.u32 %v55, 7
  %v57 = vsub.s32 2, %v56
  %v58 = vrot.slane %v45, %v57
  %v59 = vlaneseq
  %v60 = vshrl.u32 %v59, 7
  %v61 = vsub.s32 3, %v60
  %v62 = vrot.slane %v45, %v61
  %v63 = vlaneseq
  %v64 = vshrl.u32 %v63, 7
  %v65 = vsub.s32 4, %v64
  %v66 = vrot.slane %v45, %v65
  %v72 = vmul.f32 %v30, %v50
  %v73 = vmul.f32 %v31, %v54
  %v74 = vmul.f32 %v32, %v58
  %v75 = vmul.f32 %v33, %v62
  %v76 = vmul.f32 %v34, %v66
  %v77 = vmul.f32 %v35, %v50
  %v78 = vmul.f32 %v36, %v54
  %v79 = vmul.f32 %v37, %v58
  %v80 = vmul.f32 %v38, %v62
  %v81 = vmul.f32 %v39, %v66
  %v82 = vmul.f32 %v40, %v50
  %v83 = vmul.f32 %v41, %v54
  %v84 = vmul.f32 %v42, %v58
  %v85 = vmul.f32 %v43, %v62
  %v86 = vmul.f32 %v44, %v66
  %v87 = vld [vmem:[%s3] sm:$0x1f]
  %v89 = vlaneseq
  %v90 = vshrl.u32 %v89, 7
  %v91 = vsub.s32 0, %v90
  %v92 = vrot.slane %v87, %v91
  %v93 = vlaneseq
  %v94 = vshrl.u32 %v93, 7
  %v95 = vsub.s32 1, %v94
  %v96 = vrot.slane %v87, %v95
  %v97 = vlaneseq
  %v98 = vshrl.u32 %v97, 7
  %v99 = vsub.s32 2, %v98
  %v100 = vrot.slane %v87, %v99
  %v101 = vlaneseq
  %v102 = vshrl.u32 %v101, 7
  %v103 = vsub.s32 3, %v102
  %v104 = vrot.slane %v87, %v103
  %v105 = vlaneseq
  %v106 = vshrl.u32 %v105, 7
  %v107 = vsub.s32 4, %v106
  %v108 = vrot.slane %v87, %v107
  %v114 = vadd.f32 %v72, %v92
  %v115 = vadd.f32 %v73, %v96
  %v116 = vadd.f32 %v74, %v100
  %v117 = vadd.f32 %v75, %v104
  %v118 = vadd.f32 %v76, %v108
  %v119 = vadd.f32 %v77, %v92
  %v120 = vadd.f32 %v78, %v96
  %v121 = vadd.f32 %v79, %v100
  %v122 = vadd.f32 %v80, %v104
  %v123 = vadd.f32 %v81, %v108
  %v124 = vadd.f32 %v82, %v92
  %v125 = vadd.f32 %v83, %v96
  %v126 = vadd.f32 %v84, %v100
  %v127 = vadd.f32 %v85, %v104
  %v128 = vadd.f32 %v86, %v108
  %vm129 = vcmp.ge.f32.partialorder %v114, 0.0
  %vm130 = vcmp.ge.f32.partialorder %v115, 0.0
  %vm131 = vcmp.ge.f32.partialorder %v116, 0.0
  %vm132 = vcmp.ge.f32.partialorder %v117, 0.0
  %vm133 = vcmp.ge.f32.partialorder %v118, 0.0
  %vm134 = vcmp.ge.f32.partialorder %v119, 0.0
  %vm135 = vcmp.ge.f32.partialorder %v120, 0.0
  %vm136 = vcmp.ge.f32.partialorder %v121, 0.0
  %vm137 = vcmp.ge.f32.partialorder %v122, 0.0
  %vm138 = vcmp.ge.f32.partialorder %v123, 0.0
  %vm139 = vcmp.ge.f32.partialorder %v124, 0.0
  %vm140 = vcmp.ge.f32.partialorder %v125, 0.0
  %vm141 = vcmp.ge.f32.partialorder %v126, 0.0
  %vm142 = vcmp.ge.f32.partialorder %v127, 0.0
  %vm143 = vcmp.ge.f32.partialorder %v128, 0.0
  %v144 = vmul.f32 %v114, 0.2
  %v145 = vmul.f32 %v115, 0.2
  %v146 = vmul.f32 %v116, 0.2
  %v147 = vmul.f32 %v117, 0.2
  %v148 = vmul.f32 %v118, 0.2
  %v149 = vmul.f32 %v119, 0.2
  %v150 = vmul.f32 %v120, 0.2
  %v151 = vmul.f32 %v121, 0.2
  %v152 = vmul.f32 %v122, 0.2
  %v153 = vmul.f32 %v123, 0.2
  %v154 = vmul.f32 %v124, 0.2
  %v155 = vmul.f32 %v125, 0.2
  %v156 = vmul.f32 %v126, 0.2
  %v157 = vmul.f32 %v127, 0.2
  %v158 = vmul.f32 %v128, 0.2
  %v159 = vsel %vm129, %v114, %v144
  %v160 = vsel %vm130, %v115, %v145
  %v161 = vsel %vm131, %v116, %v146
  %v162 = vsel %vm132, %v117, %v147
  %v163 = vsel %vm133, %v118, %v148
  %v164 = vsel %vm134, %v119, %v149
  %v165 = vsel %vm135, %v120, %v150
  %v166 = vsel %vm136, %v121, %v151
  %v167 = vsel %vm137, %v122, %v152
  %v168 = vsel %vm138, %v123, %v153
  %v169 = vsel %vm139, %v124, %v154
  %v170 = vsel %vm140, %v125, %v155
  %v171 = vsel %vm141, %v126, %v156
  %v172 = vsel %vm142, %v127, %v157
  %v173 = vsel %vm143, %v128, %v158
  %v174 = vpack.c.bf16 %v164, %v159
  %v175 = vpack.c.bf16 %v165, %v160
  %v176 = vpack.c.bf16 %v166, %v161
  %v177 = vpack.c.bf16 %v167, %v162
  %v178 = vpack.c.bf16 %v168, %v163
  %v179 = vpack.c.bf16 %v169, %v169
  %v180 = vpack.c.bf16 %v170, %v170
  %v181 = vpack.c.bf16 %v171, %v171
  %v182 = vpack.c.bf16 %v172, %v172
  %v183 = vpack.c.bf16 %v173, %v173
  %v184 = vld [vmem:[%s1] sm:$0xf]
  %v185 = vld [vmem:[%s1 + $0x4] sm:$0xf]
  %v186 = vld [vmem:[%s1 + $0x8] sm:$0xf]
  %v187 = vld [vmem:[%s1 + $0xc] sm:$0xf]
  %v188 = vld [vmem:[%s1 + $0x10] sm:$0xf]
  %v189 = vld [vmem:[%s1 + $0x14] sm:$0xf]
  %v190 = vld [vmem:[%s1 + $0x18] sm:$0xf]
  %v191 = vld [vmem:[%s1 + $0x1c] sm:$0xf]
  %v192 = vld [vmem:[%s1 + $0x20] sm:$0xf]
  %v193 = vld [vmem:[%s1 + $0x24] sm:$0xf]
  %v194 = vld [vmem:[%s1 + $0x28] sm:$0xf]
  %v195 = vld [vmem:[%s1 + $0x2c] sm:$0xf]
  %v196 = vld [vmem:[%s1 + $0x30] sm:$0xf]
  %v197 = vld [vmem:[%s1 + $0x34] sm:$0xf]
  %v198 = vld [vmem:[%s1 + $0x38] sm:$0xf]
  %v199 = vld [vmem:[%s1 + $0x3c] sm:$0xf]
  %v200 = vld [vmem:[%s1 + $0x40] sm:$0xf]
  %v201 = vld [vmem:[%s1 + $0x44] sm:$0xf]
  %v202 = vld [vmem:[%s1 + $0x48] sm:$0xf]
  %v203 = vld [vmem:[%s1 + $0x4c] sm:$0xf]
  %v204 = vld [vmem:[%s1 + $0x50] sm:$0xf]
  %v205 = vld [vmem:[%s1 + $0x54] sm:$0xf]
  %v206 = vld [vmem:[%s1 + $0x58] sm:$0xf]
  %v207 = vld [vmem:[%s1 + $0x5c] sm:$0xf]
  %v208 = vld [vmem:[%s1 + $0x60] sm:$0xf]
  %v209 = vld [vmem:[%s1 + $0x64] sm:$0xf]
  %v210 = vld [vmem:[%s1 + $0x68] sm:$0xf]
  %v211 = vld [vmem:[%s1 + $0x6c] sm:$0xf]
  %v212 = vld [vmem:[%s1 + $0x70] sm:$0xf]
  %v213 = vld [vmem:[%s1 + $0x74] sm:$0xf]
  %v214 = vld [vmem:[%s1 + $0x78] sm:$0xf]
  %v215 = vld [vmem:[%s1 + $0x7c] sm:$0xf]
  %v216 = vld [vmem:[%s1 + $0x80] sm:$0xf]
  %v217 = vld [vmem:[%s1 + $0x84] sm:$0xf]
  %v218 = vld [vmem:[%s1 + $0x88] sm:$0xf]
  %v219 = vld [vmem:[%s1 + $0x8c] sm:$0xf]
  %v220 = vld [vmem:[%s1 + $0x90] sm:$0xf]
  %v221 = vld [vmem:[%s1 + $0x94] sm:$0xf]
  %v222 = vld [vmem:[%s1 + $0x98] sm:$0xf]
  %v223 = vld [vmem:[%s1 + $0x9c] sm:$0xf]
  %v224 = vld [vmem:[%s1 + $0xa0] sm:$0xf]
  %v225 = vld [vmem:[%s1 + $0xa4] sm:$0xf]
  %v226 = vld [vmem:[%s1 + $0xa8] sm:$0xf]
  %v227 = vld [vmem:[%s1 + $0xac] sm:$0xf]
  %v228 = vld [vmem:[%s1 + $0xb0] sm:$0xf]
  %v229 = vld [vmem:[%s1 + $0xb4] sm:$0xf]
  %v230 = vld [vmem:[%s1 + $0xb8] sm:$0xf]
  %v231 = vld [vmem:[%s1 + $0xbc] sm:$0xf]
  %v232 = vld [vmem:[%s1 + $0xc0] sm:$0xf]
  %v233 = vld [vmem:[%s1 + $0xc4] sm:$0xf]
  %v234 = vld [vmem:[%s1 + $0xc8] sm:$0xf]
  %v235 = vld [vmem:[%s1 + $0xcc] sm:$0xf]
  %v236 = vld [vmem:[%s1 + $0xd0] sm:$0xf]
  %v237 = vld [vmem:[%s1 + $0xd4] sm:$0xf]
  %v238 = vld [vmem:[%s1 + $0xd8] sm:$0xf]
  %v239 = vld [vmem:[%s1 + $0xdc] sm:$0xf]
  %v240 = vld [vmem:[%s1 + $0xe0] sm:$0xf]
  %v241 = vld [vmem:[%s1 + $0xe4] sm:$0xf]
  %v242 = vld [vmem:[%s1 + $0xe8] sm:$0xf]
  %v243 = vld [vmem:[%s1 + $0xec] sm:$0xf]
  %v244 = vld [vmem:[%s1 + $0xf0] sm:$0xf]
  %v245 = vld [vmem:[%s1 + $0xf4] sm:$0xf]
  %v246 = vld [vmem:[%s1 + $0xf8] sm:$0xf]
  %v247 = vld [vmem:[%s1 + $0xfc] sm:$0xf]
  %v248 = vld [vmem:[%s1 + $0x100] sm:$0xf]
  %v249 = vld [vmem:[%s1 + $0x104] sm:$0xf]
  %v250 = vld [vmem:[%s1 + $0x108] sm:$0xf]
  %v251 = vld [vmem:[%s1 + $0x10c] sm:$0xf]
  %v252 = vld [vmem:[%s1 + $0x110] sm:$0xf]
  %v253 = vld [vmem:[%s1 + $0x114] sm:$0xf]
  %v254 = vld [vmem:[%s1 + $0x118] sm:$0xf]
  %v255 = vld [vmem:[%s1 + $0x11c] sm:$0xf]
  %v328 = vunpack.c.l.b16 %v184
  %v329 = vunpack.c.l.b16 %v185
  %v330 = vunpack.c.l.b16 %v186
  %v331 = vunpack.c.l.b16 %v187
  %v332 = vunpack.c.l.b16 %v188
  %v333 = vunpack.c.l.b16 %v189
  %v334 = vunpack.c.l.b16 %v190
  %v335 = vunpack.c.l.b16 %v191
  %v336 = vunpack.c.l.b16 %v192
  %v337 = vunpack.c.l.b16 %v193
  %v338 = vunpack.c.l.b16 %v194
  %v339 = vunpack.c.l.b16 %v195
  %v340 = vunpack.c.l.b16 %v196
  %v341 = vunpack.c.l.b16 %v197
  %v342 = vunpack.c.l.b16 %v198
  %v343 = vunpack.c.l.b16 %v199
  %v344 = vunpack.c.l.b16 %v200
  %v345 = vunpack.c.l.b16 %v201
  %v346 = vunpack.c.l.b16 %v202
  %v347 = vunpack.c.l.b16 %v203
  %v348 = vunpack.c.l.b16 %v204
  %v349 = vunpack.c.l.b16 %v205
  %v350 = vunpack.c.l.b16 %v206
  %v351 = vunpack.c.l.b16 %v207
  %v352 = vunpack.c.l.b16 %v208
  %v353 = vunpack.c.l.b16 %v209
  %v354 = vunpack.c.l.b16 %v210
  %v355 = vunpack.c.l.b16 %v211
  %v356 = vunpack.c.l.b16 %v212
  %v357 = vunpack.c.l.b16 %v213
  %v358 = vunpack.c.l.b16 %v214
  %v359 = vunpack.c.l.b16 %v215
  %v360 = vunpack.c.l.b16 %v216
  %v361 = vunpack.c.l.b16 %v217
  %v362 = vunpack.c.l.b16 %v218
  %v363 = vunpack.c.l.b16 %v219
  %v364 = vunpack.c.l.b16 %v220
  %v365 = vunpack.c.l.b16 %v221
  %v366 = vunpack.c.l.b16 %v222
  %v367 = vunpack.c.l.b16 %v223
  %v368 = vunpack.c.l.b16 %v224
  %v369 = vunpack.c.l.b16 %v225
  %v370 = vunpack.c.l.b16 %v226
  %v371 = vunpack.c.l.b16 %v227
  %v372 = vunpack.c.l.b16 %v228
  %v373 = vunpack.c.l.b16 %v229
  %v374 = vunpack.c.l.b16 %v230
  %v375 = vunpack.c.l.b16 %v231
  %v376 = vunpack.c.l.b16 %v232
  %v377 = vunpack.c.l.b16 %v233
  %v378 = vunpack.c.l.b16 %v234
  %v379 = vunpack.c.l.b16 %v235
  %v380 = vunpack.c.l.b16 %v236
  %v381 = vunpack.c.l.b16 %v237
  %v382 = vunpack.c.l.b16 %v238
  %v383 = vunpack.c.l.b16 %v239
  %v384 = vunpack.c.l.b16 %v240
  %v385 = vunpack.c.l.b16 %v241
  %v386 = vunpack.c.l.b16 %v242
  %v387 = vunpack.c.l.b16 %v243
  %v388 = vunpack.c.l.b16 %v244
  %v389 = vunpack.c.l.b16 %v245
  %v390 = vunpack.c.l.b16 %v246
  %v391 = vunpack.c.l.b16 %v247
  %v392 = vunpack.c.l.b16 %v248
  %v393 = vunpack.c.l.b16 %v249
  %v394 = vunpack.c.l.b16 %v250
  %v395 = vunpack.c.l.b16 %v251
  %v396 = vunpack.c.l.b16 %v252
  %v397 = vunpack.c.l.b16 %v253
  %v398 = vunpack.c.l.b16 %v254
  %v399 = vunpack.c.l.b16 %v255
  %v400 = vpack.c.b16 %v329, %v328
  %v401 = vpack.c.b16 %v331, %v330
  %v402 = vpack.c.b16 %v333, %v332
  %v403 = vpack.c.b16 %v335, %v334
  %v404 = vpack.c.b16 %v337, %v336
  %v405 = vpack.c.b16 %v339, %v338
  %v406 = vpack.c.b16 %v341, %v340
  %v407 = vpack.c.b16 %v343, %v342
  %v408 = vpack.c.b16 %v345, %v344
  %v409 = vpack.c.b16 %v347, %v346
  %v410 = vpack.c.b16 %v349, %v348
  %v411 = vpack.c.b16 %v351, %v350
  %v412 = vpack.c.b16 %v353, %v352
  %v413 = vpack.c.b16 %v355, %v354
  %v414 = vpack.c.b16 %v357, %v356
  %v415 = vpack.c.b16 %v359, %v358
  %v416 = vpack.c.b16 %v361, %v360
  %v417 = vpack.c.b16 %v363, %v362
  %v418 = vpack.c.b16 %v365, %v364
  %v419 = vpack.c.b16 %v367, %v366
  %v420 = vpack.c.b16 %v369, %v368
  %v421 = vpack.c.b16 %v371, %v370
  %v422 = vpack.c.b16 %v373, %v372
  %v423 = vpack.c.b16 %v375, %v374
  %v424 = vpack.c.b16 %v377, %v376
  %v425 = vpack.c.b16 %v379, %v378
  %v426 = vpack.c.b16 %v381, %v380
  %v427 = vpack.c.b16 %v383, %v382
  %v428 = vpack.c.b16 %v385, %v384
  %v429 = vpack.c.b16 %v387, %v386
  %v430 = vpack.c.b16 %v389, %v388
  %v431 = vpack.c.b16 %v391, %v390
  %v432 = vpack.c.b16 %v393, %v392
  %v433 = vpack.c.b16 %v395, %v394
  %v434 = vpack.c.b16 %v397, %v396
  %v435 = vpack.c.b16 %v399, %v398
  %vm472 = vcmask 523264
  %v474 = vsel %vm472, %v178, 0
  %v477 = vsel %vm472, %v183, 0
  %479 = vmatprep.subr.bf16.mxu0 0
  %480 = vmatpush1.bf16.msra.mxu0 %v407
  %481 = vmatprep.subr.bf16.mxu0 0
  %482 = vmatpush1.bf16.msra.mxu0 %v406
  %483 = vmatprep.subr.bf16.mxu0 0
  %484 = vmatpush1.bf16.msra.mxu0 %v405
  %485 = vmatprep.subr.bf16.mxu0 0
  %486 = vmatpush1.bf16.msra.mxu0 %v404
  %487 = vmatprep.subr.bf16.mxu0 0
  %488 = vmatpush1.bf16.msra.mxu0 %v403
  %489 = vmatprep.subr.bf16.mxu0 0
  %490 = vmatpush1.bf16.msra.mxu0 %v402
  %491 = vmatprep.subr.bf16.mxu0 0
  %492 = vmatpush1.bf16.msra.mxu0 %v401
  %493 = vmatprep.subr.bf16.mxu0 0
  %494 = vmatpush1.bf16.msra.mxu0 %v400
  %495 = vmatprep.subr.bf16.mxu0 0
  %496 = vmatpush2.bf16.msra.mxu0 %v415
  %497 = vmatprep.subr.bf16.mxu0 0
  %498 = vmatpush2.bf16.msra.mxu0 %v414
  %499 = vmatprep.subr.bf16.mxu0 0
  %500 = vmatpush2.bf16.msra.mxu0 %v413
  %501 = vmatprep.subr.bf16.mxu0 0
  %502 = vmatpush2.bf16.msra.mxu0 %v412
  %503 = vmatprep.subr.bf16.mxu0 0
  %504 = vmatpush2.bf16.msra.mxu0 %v411
  %505 = vmatprep.subr.bf16.mxu0 0
  %506 = vmatpush2.bf16.msra.mxu0 %v410
  %507 = vmatprep.subr.bf16.mxu0 0
  %508 = vmatpush2.bf16.msra.mxu0 %v409
  %509 = vmatprep.subr.bf16.mxu0 0
  %510 = vmatpush2.bf16.msra.mxu0 %v408
  %511 = vmatprep.mubr.bf16.mxu0 %v175
  %512 = vmatmul.mubr.bf16.gmra.mxu0 %v174
  %v513 = vpop.f32.mrf.mxu0
  %v514 = vadd.f32 0.0, %v513
  %v515 = vpop.f32.mrf.mxu0
  %v516 = vpop.f32.mrf.mxu0
  %v517 = vadd.f32 0.0, %v516
  %v518 = vpop.f32.mrf.mxu0
  %519 = vmatprep.mubr.bf16.mxu0 %v180
  %520 = vmatmul.mubr.bf16.gmra.mxu0 %v179
  %v521 = vpop.f32.mrf.mxu0
  %v522 = vadd.f32 0.0, %v521
  %v523 = vpop.f32.mrf.mxu0
  %v524 = vpop.f32.mrf.mxu0
  %v525 = vpop.f32.mrf.mxu0
  %526 = vdwg.mxu0
  %527 = vmatprep.subr.bf16.mxu0 0
  %528 = vmatpush1.bf16.msra.mxu0 %v423
  %529 = vmatprep.subr.bf16.mxu0 0
  %530 = vmatpush1.bf16.msra.mxu0 %v422
  %531 = vmatprep.subr.bf16.mxu0 0
  %532 = vmatpush1.bf16.msra.mxu0 %v421
  %533 = vmatprep.subr.bf16.mxu0 0
  %534 = vmatpush1.bf16.msra.mxu0 %v420
  %535 = vmatprep.subr.bf16.mxu0 0
  %536 = vmatpush1.bf16.msra.mxu0 %v419
  %537 = vmatprep.subr.bf16.mxu0 0
  %538 = vmatpush1.bf16.msra.mxu0 %v418
  %539 = vmatprep.subr.bf16.mxu0 0
  %540 = vmatpush1.bf16.msra.mxu0 %v417
  %541 = vmatprep.subr.bf16.mxu0 0
  %542 = vmatpush1.bf16.msra.mxu0 %v416
  %543 = vmatprep.subr.bf16.mxu0 0
  %544 = vmatpush2.bf16.msra.mxu0 %v431
  %545 = vmatprep.subr.bf16.mxu0 0
  %546 = vmatpush2.bf16.msra.mxu0 %v430
  %547 = vmatprep.subr.bf16.mxu0 0
  %548 = vmatpush2.bf16.msra.mxu0 %v429
  %549 = vmatprep.subr.bf16.mxu0 0
  %550 = vmatpush2.bf16.msra.mxu0 %v428
  %551 = vmatprep.subr.bf16.mxu0 0
  %552 = vmatpush2.bf16.msra.mxu0 %v427
  %553 = vmatprep.subr.bf16.mxu0 0
  %554 = vmatpush2.bf16.msra.mxu0 %v426
  %555 = vmatprep.subr.bf16.mxu0 0
  %556 = vmatpush2.bf16.msra.mxu0 %v425
  %557 = vmatprep.subr.bf16.mxu0 0
  %558 = vmatpush2.bf16.msra.mxu0 %v424
  %559 = vmatprep.mubr.bf16.mxu0 %v177
  %560 = vmatmul.mubr.bf16.gmra.mxu0 %v176
  %v561 = vpop.f32.mrf.mxu0
  %v562 = vadd.f32 %v514, %v561
  %v563 = vpop.f32.mrf.mxu0
  %v564 = vpop.f32.mrf.mxu0
  %v565 = vadd.f32 %v517, %v564
  %v566 = vpop.f32.mrf.mxu0
  %567 = vmatprep.mubr.bf16.mxu0 %v182
  %568 = vmatmul.mubr.bf16.gmra.mxu0 %v181
  %v569 = vpop.f32.mrf.mxu0
  %v570 = vadd.f32 %v522, %v569
  %v571 = vpop.f32.mrf.mxu0
  %v572 = vpop.f32.mrf.mxu0
  %v573 = vpop.f32.mrf.mxu0
  %574 = vdwg.mxu0
  %575 = vmatprep.subr.bf16.mxu0 0
  %576 = vmatpush1.bf16.msra.mxu0 0
  %577 = vmatprep.subr.bf16.mxu0 0
  %578 = vmatpush1.bf16.msra.mxu0 0
  %579 = vmatprep.subr.bf16.mxu0 0
  %580 = vmatpush1.bf16.msra.mxu0 0
  %581 = vmatprep.subr.bf16.mxu0 0
  %582 = vmatpush1.bf16.msra.mxu0 0
  %583 = vmatprep.subr.bf16.mxu0 0
  %584 = vmatpush1.bf16.msra.mxu0 %v435
  %585 = vmatprep.subr.bf16.mxu0 0
  %586 = vmatpush1.bf16.msra.mxu0 %v434
  %587 = vmatprep.subr.bf16.mxu0 0
  %588 = vmatpush1.bf16.msra.mxu0 %v433
  %589 = vmatprep.subr.bf16.mxu0 0
  %590 = vmatpush1.bf16.msra.mxu0 %v432
  %591 = vmatprep.subr.bf16.mxu0 0
  %592 = vmatpush2.bf16.msra.mxu0 0
  %593 = vmatprep.subr.bf16.mxu0 0
  %594 = vmatpush2.bf16.msra.mxu0 0
  %595 = vmatprep.subr.bf16.mxu0 0
  %596 = vmatpush2.bf16.msra.mxu0 0
  %597 = vmatprep.subr.bf16.mxu0 0
  %598 = vmatpush2.bf16.msra.mxu0 0
  %599 = vmatprep.subr.bf16.mxu0 0
  %600 = vmatpush2.bf16.msra.mxu0 0
  %601 = vmatprep.subr.bf16.mxu0 0
  %602 = vmatpush2.bf16.msra.mxu0 0
  %603 = vmatprep.subr.bf16.mxu0 0
  %604 = vmatpush2.bf16.msra.mxu0 0
  %605 = vmatprep.subr.bf16.mxu0 0
  %606 = vmatpush2.bf16.msra.mxu0 0
  %607 = vmatprep.mubr.bf16.mxu0 0
  %608 = vmatmul.mubr.bf16.gmra.mxu0 %v474
  %v609 = vpop.f32.mrf.mxu0
  %v610 = vadd.f32 %v562, %v609
  %v611 = vpop.f32.mrf.mxu0
  %v612 = vpop.f32.mrf.mxu0
  %v613 = vadd.f32 %v565, %v612
  %v614 = vpop.f32.mrf.mxu0
  %615 = vmatprep.mubr.bf16.mxu0 0
  %616 = vmatmul.mubr.bf16.gmra.mxu0 %v477
  %v617 = vpop.f32.mrf.mxu0
  %v618 = vadd.f32 %v570, %v617
  %v619 = vpop.f32.mrf.mxu0
  %v620 = vpop.f32.mrf.mxu0
  %v621 = vpop.f32.mrf.mxu0
  %622 = vdwg.mxu0
  %v623 = vpack.c.bf16 %v613, %v610
  %v624 = vpack.c.bf16 %v618, %v618
  %v627 = vunpack.c.l.b16 %v623
  %v628 = vunpack.c.h.b16 %v623
  %v629 = vunpack.c.l.b16 %v624
  %v630 = vpack.c.b16 %v627, %v627
  %v631 = vpack.c.b16 %v628, %v628
  %v632 = vpack.c.b16 %v629, %v629
  %636 = vst [vmem:[%s4] sm:$0xf] %v630
  %637 = vst [vmem:[%s4 + $0x4] sm:$0xf] %v631
  %638 = vst [vmem:[%s4 + $0x8] sm:$0xf] %v632
  %s639 = smul.u32 0, 24
  %v640 = vlaneseq
  %v641 = vshrl.u32 %v640, 7
  %v642 = vadd.s32 %v641, 8
  %v643 = vadd.s32 %v641, 16
  %v644 = vstv %s639
  %v645 = vadd.s32 %v644, %v641
  %v646 = vadd.s32 %v644, %v642
  %v647 = vadd.s32 %v644, %v643
  %vm648 = vcmp.lt.s32.totalorder %v645, 18
  %vm649 = vcmp.lt.s32.totalorder %v646, 18
  %vm650 = vcmp.lt.s32.totalorder %v647, 18
  %v651 = vsel %vm648, 1, 0
  %v652 = vsel %vm649, 1, 0
  %v653 = vsel %vm650, 1, 0
  %vm654 = vcmp.eq.s32.totalorder %v651, 1
  %vm655 = vcmp.eq.s32.totalorder %v652, 1
  %vm656 = vcmp.eq.s32.totalorder %v653, 1
  %v657 = vsel %vm654, %v610, 0.0
  %v658 = vsel %vm655, %v613, 0.0
  %v659 = vsel %vm656, %v618, 0.0
  %v660 = vadd.f32 %v657, %v658
  %v661 = vadd.f32 %v660, %v659
  %v662 = vrot.slane %v661, 4
  %v663 = vadd.f32 %v661, %v662
  %v664 = vrot.slane %v663, 2
  %v665 = vadd.f32 %v663, %v664
  %v666 = vrot.slane %v665, 1
  %v667 = vadd.f32 %v665, %v666
  %668 = vst [vmem:[%s5] sm:$0x1] %v667
  %v669 = vmul.f32 %v657, %v657
  %v670 = vmul.f32 %v658, %v658
  %v671 = vmul.f32 %v659, %v659
  %v672 = vadd.f32 %v669, %v670
  %v673 = vadd.f32 %v672, %v671
  %v674 = vrot.slane %v673, 4
  %v675 = vadd.f32 %v673, %v674
  %v676 = vrot.slane %v675, 2
  %v677 = vadd.f32 %v675, %v676
  %v678 = vrot.slane %v677, 1
  %v679 = vadd.f32 %v677, %v678
  %680 = vst [vmem:[%s6] sm:$0x1] %v679
  // Predicated region
  $region18: #{discriminator_forward.6} parent=0 // pred_check
    _
  $region19: #{discriminator_forward.6} parent=0 // pred_check_branch
    %682 = sbr.rel (0) target = $region21
  $region20: #{discriminator_forward.6} parent=0 // pred_region
    _
  $region21: #{discriminator_forward.6} parent=0 // pred_fallthru
    _
  // Predicated region
  $region22: #{discriminator_forward.6} parent=0 // pred_check
    _
  $region23: #{discriminator_forward.6} parent=0 // pred_check_branch
    %684 = sbr.rel (0) target = $region25
  $region24: #{discriminator_forward.6} parent=0 // pred_region
    _
  $region25: #{discriminator_forward.6} parent=0 // pred_fallthru
    _
  // Predicated region
  $region26: #{discriminator_forward.6} parent=0 // pred_check
    _
  $region27: #{discriminator_forward.6} parent=0 // pred_check_branch
    %686 = sbr.rel (0) target = $region29
  $region28: #{discriminator_forward.6} parent=0 // pred_region
    _
  $region29: #{discriminator_forward.6} parent=0 // pred_fallthru
    _
  // Predicated region
  $region30: #{discriminator_forward.6} parent=0 // pred_check
    _
  $region31: #{discriminator_forward.6} parent=0 // pred_check_branch
    %688 = sbr.rel (0) target = $region33
  $region32: #{discriminator_forward.6} parent=0 // pred_region
    _
  $region33: #{discriminator_forward.6} parent=0 // pred_fallthru
    _
  // Predicated region
  $region34: #{discriminator_forward.6} parent=0 // pred_check
    _
  $region35: #{discriminator_forward.6} parent=0 // pred_check_branch
    %690 = sbr.rel (0) target = $region37
  $region36: #{discriminator_forward.6} parent=0 // pred_region
    _
  $region37: #{discriminator_forward.6} parent=0 // pred_fallthru
    _
  // Predicated region
  $region38: #{discriminator_forward.6} parent=0 // pred_check
    _
  $region39: #{discriminator_forward.6} parent=0 // pred_check_branch
    %692 = sbr.rel (0) target = $region41
  $region40: #{discriminator_forward.6} parent=0 // pred_region
    _
  $region41: #{discriminator_forward.6} parent=0 // pred_fallthru
    _

</llo_original>
